<compile_context>
chip_gen: v5e
topology: v5e:2x2
jax: 0.10.0
libtpu: 0.0.40
codegen_flags: <defaults>
</compile_context>

<pallas_src>
import functools

import jax
import jax.numpy as jnp
import numpy as np
from jax.experimental import pallas as pl
from jax.experimental.pallas import tpu as pltpu

LRELU_SLOPE = 0.1
KSIZE = 3                 # ResBlock2 kernel_size
DILATIONS = (1, 3)        # ResBlock2 dilation
TIME_TILE = 256           # tm: output rows per grid step (multiple of HALO)
HALO = 16                 # halo rows fetched from neighbouring tiles (>= max dilation)


def _round_up(x, m):
    return ((x + m - 1) // m) * m


# ---------------------------------------------------------------------------
# Pallas kernel: fused  leaky_relu -> dilated Conv1d (3 taps) -> +bias -> +residual
# for one (batch, time-tile) grid step, channels-last layout.
# ---------------------------------------------------------------------------
def _resconv_kernel(xl_ref, xc_ref, xr_ref, w_ref, b_ref, o_ref, *,
                    dil, ksize, halo, t_start, t_end, slope):
    i = pl.program_id(1)
    tm = xc_ref.shape[1]

    xc = xc_ref[0]                                               # (tm, Cp) raw (residual path)
    win = jnp.concatenate([xl_ref[0], xc, xr_ref[0]], axis=0)    # (tm + 2*halo, Cp)
    act = jnp.where(win >= 0, win, slope * win)                  # leaky_relu on the conv input

    # Build the K dilation-shifted taps; lane-axis stack so a single MXU matmul
    # consumes all taps: column block k holds act[t + (k - K//2)*dil, :].
    ctr = ksize // 2
    taps = [act[halo + (k - ctr) * dil: halo + (k - ctr) * dil + tm, :]
            for k in range(ksize)]
    a = jnp.concatenate(taps, axis=1)                            # (tm, ksize*Cp) bf16

    y = jnp.dot(a, w_ref[...], preferred_element_type=jnp.float32)   # MXU, f32 acc
    y = y + b_ref[...] + xc.astype(jnp.float32)                  # fused bias + residual

    # Keep rows outside the real [t_start, t_end) region exactly zero so the
    # next layer's halo taps read zeros (== PyTorch's per-conv zero padding).
    row = jax.lax.broadcasted_iota(jnp.int32, y.shape, 0) + i * tm
    y = jnp.where((row >= t_start) & (row < t_end), y, 0.0)

    o_ref[0] = y.astype(o_ref.dtype)


def _dilated_resconv(x_pad, wmat, bvec, *, dil, ksize, t_start, t_len, tm=TIME_TILE):
    """x_pad: [B, Tpad, Cp] bf16 (zero outside real rows) -> same shape/layout."""
    B, Tpad, Cp = x_pad.shape
    assert Tpad % tm == 0 and tm % HALO == 0
    nT = Tpad // tm              # number of time tiles
    nH = Tpad // HALO            # number of halo-sized blocks
    hpt = tm // HALO             # halo blocks per time tile

    kern = functools.partial(
        _resconv_kernel, dil=dil, ksize=ksize, halo=HALO,
        t_start=t_start, t_end=t_start + t_len, slope=LRELU_SLOPE)

    return pl.pallas_call(
        kern,
        out_shape=jax.ShapeDtypeStruct((B, Tpad, Cp), x_pad.dtype),
        grid_spec=pltpu.PrefetchScalarGridSpec(
            num_scalar_prefetch=0,
            grid=(B, nT),
            in_specs=[
                # left halo: last HALO rows of the previous tile (clamped at the
                # edge; clamped data only feeds rows the epilogue masks to 0).
                pl.BlockSpec((1, HALO, Cp),
                             lambda b, i: (b, jnp.maximum(i * hpt - 1, 0), 0)),
                # centre tile
                pl.BlockSpec((1, tm, Cp), lambda b, i: (b, i, 0)),
                # right halo: first HALO rows of the next tile (clamped).
                pl.BlockSpec((1, HALO, Cp),
                             lambda b, i: (b, jnp.minimum((i + 1) * hpt, nH - 1), 0)),
                # packed weights [ksize*Cp, Cp] and bias [1, Cp] (block == full array)
                pl.BlockSpec((ksize * Cp, Cp), lambda b, i: (0, 0)),
                pl.BlockSpec((1, Cp), lambda b, i: (0, 0)),
            ],
            out_specs=pl.BlockSpec((1, tm, Cp), lambda b, i: (b, i, 0)),
        ),
        compiler_params=pltpu.CompilerParams(
            dimension_semantics=("parallel", "parallel")),
    )(x_pad, x_pad, x_pad, wmat, bvec)


# ---------------------------------------------------------------------------
# ResBlock2 forward:  for c in convs:  x = c(leaky_relu(x)) + x
# ---------------------------------------------------------------------------
def res_block2_forward(params, x, *, tm=TIME_TILE):
    """x: [B, C, T] float32 -> [B, C, T] float32."""
    B, C, T = x.shape
    Cp = _round_up(C, 128)
    t0 = HALO                                   # real rows live at [t0, t0 + T)
    Tpad = _round_up(T + 2 * HALO, tm)

    # Channels-last, zero-padded, bf16 activation slab, shared by both convs.
    xb = jnp.transpose(x, (0, 2, 1)).astype(jnp.bfloat16)
    xb = jnp.pad(xb, ((0, 0), (t0, Tpad - t0 - T), (0, Cp - C)))

    for (wmat, bvec), dil in zip(params["packed"], DILATIONS):
        xb = _dilated_resconv(xb, wmat, bvec, dil=dil, ksize=KSIZE,
                              t_start=t0, t_len=T, tm=tm)

    out = xb[:, t0:t0 + T, :C].astype(x.dtype)
    return jnp.transpose(out, (0, 2, 1))


# ---------------------------------------------------------------------------
# Parameter init (weight_norm == identity at init; init_weights: normal(0, 0.01))
# ---------------------------------------------------------------------------
def init_params(key, channels, ksize=KSIZE, dilations=DILATIONS):
    Cp = _round_up(channels, 128)
    raw, packed = [], []
    for _ in dilations:
        key, kw, kb = jax.random.split(key, 3)
        w = jax.random.normal(kw, (channels, channels, ksize), jnp.float32) * 0.01
        b = jax.random.normal(kb, (channels,), jnp.float32) * 0.01
        raw.append((w, b))
        # pack: Wmat[k*Cp + ci, co] = w[co, ci, k], zero-padded to Cp, bf16.
        w_p = jnp.pad(w, ((0, Cp - channels), (0, Cp - channels), (0, 0)))
        wmat = jnp.transpose(w_p, (2, 1, 0)).reshape(ksize * Cp, Cp).astype(jnp.bfloat16)
        bvec = jnp.pad(b, (0, Cp - channels)).reshape(1, Cp).astype(jnp.float32)
        packed.append((wmat, bvec))
    return {"raw": raw, "packed": packed}


# ---------------------------------------------------------------------------
# Pure-JAX reference (f32) for a sanity check
# ---------------------------------------------------------------------------
def res_block2_reference(params, x):
    out = x
    for (w, b), dil in zip(params["raw"], DILATIONS):
        xt = jnp.where(out >= 0, out, LRELU_SLOPE * out)
        y = jax.lax.conv_general_dilated(
            xt, w, window_strides=(1,), padding=((dil, dil),),
            rhs_dilation=(dil,), dimension_numbers=("NCH", "OIH", "NCH"))
        out = y + b[None, :, None] + out
    return out


if __name__ == "__main__":
    key = jax.random.PRNGKey(0)
    kp, kx = jax.random.split(key)

    B, C, T = 2, 64, 200                       # small shapes consistent with the module
    params = init_params(kp, C)
    x = jax.random.normal(kx, (B, C, T), jnp.float32)

    fwd = jax.jit(res_block2_forward)
    y = fwd(params, x)
    jax.block_until_ready(y)

    # loose tolerance: activations/weights are stored in bf16 inside the kernel
    y_ref = res_block2_reference(params, x)
    np.testing.assert_allclose(np.asarray(y), np.asarray(y_ref), atol=5e-2, rtol=5e-2)

    print("KERNEL_OK")
</pallas_src>

<mosaic_0001>
module attributes {stable_mosaic.version = 11 : i64} {
  func.func @_resconv_kernel(%arg0: i32, %arg1: i32, %arg2: memref<1x16x128xbf16, #tpu.memory_space<vmem>>, %arg3: memref<1x256x128xbf16, #tpu.memory_space<vmem>>, %arg4: memref<1x16x128xbf16, #tpu.memory_space<vmem>>, %arg5: memref<384x128xbf16, #tpu.memory_space<vmem>>, %arg6: memref<1x128xf32, #tpu.memory_space<vmem>>, %arg7: memref<1x256x128xbf16, #tpu.memory_space<vmem>>) attributes {dimension_semantics = [#tpu.dimension_semantics<parallel>, #tpu.dimension_semantics<parallel>], iteration_bounds = array<i64: 2, 1>, scalar_prefetch = 0 : i64, scratch_operands = 0 : i64, tpu.core_type = #tpu.core_type<tc>, window_params = [{transform_indices = @transform_0, window_bounds = array<i64: 1, 16, 128>}, {transform_indices = @transform_1, window_bounds = array<i64: 1, 256, 128>}, {transform_indices = @transform_2, window_bounds = array<i64: 1, 16, 128>}, {pipeline_mode = #tpu.pipeline_mode<synchronous>, transform_indices = @transform_3, window_bounds = array<i64: 384, 128>}, {pipeline_mode = #tpu.pipeline_mode<synchronous>, transform_indices = @transform_4, window_bounds = array<i64: 1, 128>}, {transform_indices = @transform_5, window_bounds = array<i64: 1, 256, 128>}]} {
    %c0 = arith.constant 0 : index
    %c0_0 = arith.constant 0 : index
    %c0_1 = arith.constant 0 : index
    %0 = vector.load %arg3[%c0, %c0_0, %c0_1] : memref<1x256x128xbf16, #tpu.memory_space<vmem>>, vector<1x256x128xbf16>
    %1 = vector.shape_cast %0 : vector<1x256x128xbf16> to vector<256x128xbf16>
    %c0_2 = arith.constant 0 : index
    %c0_3 = arith.constant 0 : index
    %c0_4 = arith.constant 0 : index
    %2 = vector.load %arg2[%c0_2, %c0_3, %c0_4] : memref<1x16x128xbf16, #tpu.memory_space<vmem>>, vector<1x16x128xbf16>
    %3 = vector.shape_cast %2 : vector<1x16x128xbf16> to vector<16x128xbf16>
    %c0_5 = arith.constant 0 : index
    %c0_6 = arith.constant 0 : index
    %c0_7 = arith.constant 0 : index
    %4 = vector.load %arg4[%c0_5, %c0_6, %c0_7] : memref<1x16x128xbf16, #tpu.memory_space<vmem>>, vector<1x16x128xbf16>
    %5 = vector.shape_cast %4 : vector<1x16x128xbf16> to vector<16x128xbf16>
    %6 = tpu.concatenate %3, %1, %5 in 0 : vector<16x128xbf16>, vector<256x128xbf16>, vector<16x128xbf16> -> vector<288x128xbf16>
    %cst = arith.constant 0.000000e+00 : bf16
    %7 = vector.broadcast %cst : bf16 to vector<288x128xbf16>
    %8 = arith.cmpf oge, %6, %7 : vector<288x128xbf16>
    %cst_8 = arith.constant 1.000980e-01 : bf16
    %9 = vector.broadcast %cst_8 : bf16 to vector<288x128xbf16>
    %10 = arith.mulf %9, %6 : vector<288x128xbf16>
    %11 = arith.select %8, %6, %10 : vector<288x128xi1>, vector<288x128xbf16>
    %12 = vector.extract_strided_slice %11 {offsets = [15, 0], sizes = [256, 128], strides = [1, 1]} : vector<288x128xbf16> to vector<256x128xbf16>
    %13 = vector.extract_strided_slice %11 {offsets = [16, 0], sizes = [256, 128], strides = [1, 1]} : vector<288x128xbf16> to vector<256x128xbf16>
    %14 = vector.extract_strided_slice %11 {offsets = [17, 0], sizes = [256, 128], strides = [1, 1]} : vector<288x128xbf16> to vector<256x128xbf16>
    %15 = tpu.concatenate %12, %13, %14 in 1 : vector<256x128xbf16>, vector<256x128xbf16>, vector<256x128xbf16> -> vector<256x384xbf16>
    %c0_9 = arith.constant 0 : index
    %c0_10 = arith.constant 0 : index
    %16 = vector.load %arg5[%c0_9, %c0_10] : memref<384x128xbf16, #tpu.memory_space<vmem>>, vector<384x128xbf16>
    %cst_11 = arith.constant dense<0.000000e+00> : vector<256x128xf32>
    %17 = tpu.matmul %15, %16, %cst_11 {dimension_numbers = #tpu.dot_dimension_numbers<[1], [0], [0], [1], [0, 0, 1, 1], [], []>} : vector<256x384xbf16>, vector<384x128xbf16>, vector<256x128xf32> -> vector<256x128xf32>
    %c0_12 = arith.constant 0 : index
    %c0_13 = arith.constant 0 : index
    %18 = vector.load %arg6[%c0_12, %c0_13] : memref<1x128xf32, #tpu.memory_space<vmem>>, vector<1x128xf32>
    %19 = vector.broadcast %18 : vector<1x128xf32> to vector<256x128xf32>
    %20 = arith.addf %17, %19 : vector<256x128xf32>
    %21 = arith.extf %1 : vector<256x128xbf16> to vector<256x128xf32>
    %22 = arith.addf %20, %21 : vector<256x128xf32>
    %23 = tpu.iota {dimensions = array<i32: 0>} : vector<256x128xi32>
    %c256_i32 = arith.constant 256 : i32
    %24 = arith.muli %arg1, %c256_i32 : i32
    %25 = vector.broadcast %24 : i32 to vector<256x128xi32>
    %26 = arith.addi %23, %25 : vector<256x128xi32>
    %c16_i32 = arith.constant 16 : i32
    %27 = vector.broadcast %c16_i32 : i32 to vector<256x128xi32>
    %28 = arith.cmpi sge, %26, %27 : vector<256x128xi32>
    %c216_i32 = arith.constant 216 : i32
    %29 = vector.broadcast %c216_i32 : i32 to vector<256x128xi32>
    %30 = arith.cmpi slt, %26, %29 : vector<256x128xi32>
    %31 = arith.andi %28, %30 : vector<256x128xi1>
    %cst_14 = arith.constant 0.000000e+00 : f32
    %32 = vector.broadcast %cst_14 : f32 to vector<256x128xf32>
    %33 = arith.select %31, %22, %32 : vector<256x128xi1>, vector<256x128xf32>
    %34 = arith.truncf %33 : vector<256x128xf32> to vector<256x128xbf16>
    %c0_15 = arith.constant 0 : index
    %c0_16 = arith.constant 0 : index
    %c0_17 = arith.constant 0 : index
    %35 = vector.load %arg7[%c0_15, %c0_16, %c0_17] : memref<1x256x128xbf16, #tpu.memory_space<vmem>>, vector<1x256x128xbf16>
    %36 = vector.shape_cast %35 : vector<1x256x128xbf16> to vector<256x128xbf16>
    %37 = vector.shape_cast %34 : vector<256x128xbf16> to vector<1x256x128xbf16>
    tpu.vector_store %arg7[%c0_15, %c0_16, %c0_17], %37 {strides = array<i32>} : memref<1x256x128xbf16, #tpu.memory_space<vmem>>, vector<1x256x128xbf16>,
    return
  }
  func.func @transform_0(%arg0: i32, %arg1: i32) -> (i32, i32, i32) {
    %c16_i32 = arith.constant 16 : i32
    %0 = arith.muli %arg1, %c16_i32 : i32
    %c1_i32 = arith.constant 1 : i32
    %1 = arith.subi %0, %c1_i32 : i32
    %c0_i32 = arith.constant 0 : i32
    %2 = arith.maxsi %1, %c0_i32 : i32
    %c0_i32_0 = arith.constant 0 : i32
    %c0_i32_1 = arith.constant 0 : i32
    return %arg0, %2, %c0_i32_0 : i32, i32, i32
  }
  func.func @transform_1(%arg0: i32, %arg1: i32) -> (i32, i32, i32) {
    %c0_i32 = arith.constant 0 : i32
    %c0_i32_0 = arith.constant 0 : i32
    return %arg0, %arg1, %c0_i32 : i32, i32, i32
  }
  func.func @transform_2(%arg0: i32, %arg1: i32) -> (i32, i32, i32) {
    %c1_i32 = arith.constant 1 : i32
    %0 = arith.addi %arg1, %c1_i32 : i32
    %c16_i32 = arith.constant 16 : i32
    %1 = arith.muli %0, %c16_i32 : i32
    %c15_i32 = arith.constant 15 : i32
    %2 = arith.minsi %1, %c15_i32 : i32
    %c0_i32 = arith.constant 0 : i32
    %c0_i32_0 = arith.constant 0 : i32
    return %arg0, %2, %c0_i32 : i32, i32, i32
  }
  func.func @transform_3(%arg0: i32, %arg1: i32) -> (i32, i32) {
    %c0_i32 = arith.constant 0 : i32
    %c0_i32_0 = arith.constant 0 : i32
    %c0_i32_1 = arith.constant 0 : i32
    return %c0_i32, %c0_i32_0 : i32, i32
  }
  func.func @transform_4(%arg0: i32, %arg1: i32) -> (i32, i32) {
    %c0_i32 = arith.constant 0 : i32
    %c0_i32_0 = arith.constant 0 : i32
    %c0_i32_1 = arith.constant 0 : i32
    return %c0_i32, %c0_i32_0 : i32, i32
  }
  func.func @transform_5(%arg0: i32, %arg1: i32) -> (i32, i32, i32) {
    %c0_i32 = arith.constant 0 : i32
    %c0_i32_0 = arith.constant 0 : i32
    return %arg0, %arg1, %c0_i32 : i32, i32, i32
  }
}

module attributes {stable_mosaic.version = 11 : i64} {
  func.func @_resconv_kernel(%arg0: i32, %arg1: i32, %arg2: memref<1x16x128xbf16, #tpu.memory_space<vmem>>, %arg3: memref<1x256x128xbf16, #tpu.memory_space<vmem>>, %arg4: memref<1x16x128xbf16, #tpu.memory_space<vmem>>, %arg5: memref<384x128xbf16, #tpu.memory_space<vmem>>, %arg6: memref<1x128xf32, #tpu.memory_space<vmem>>, %arg7: memref<1x256x128xbf16, #tpu.memory_space<vmem>>) attributes {dimension_semantics = [#tpu.dimension_semantics<parallel>, #tpu.dimension_semantics<parallel>], iteration_bounds = array<i64: 2, 1>, scalar_prefetch = 0 : i64, scratch_operands = 0 : i64, tpu.core_type = #tpu.core_type<tc>, window_params = [{transform_indices = @transform_0, window_bounds = array<i64: 1, 16, 128>}, {transform_indices = @transform_1, window_bounds = array<i64: 1, 256, 128>}, {transform_indices = @transform_2, window_bounds = array<i64: 1, 16, 128>}, {pipeline_mode = #tpu.pipeline_mode<synchronous>, transform_indices = @transform_3, window_bounds = array<i64: 384, 128>}, {pipeline_mode = #tpu.pipeline_mode<synchronous>, transform_indices = @transform_4, window_bounds = array<i64: 1, 128>}, {transform_indices = @transform_5, window_bounds = array<i64: 1, 256, 128>}]} {
    %c0 = arith.constant 0 : index
    %c0_0 = arith.constant 0 : index
    %c0_1 = arith.constant 0 : index
    %0 = vector.load %arg3[%c0, %c0_0, %c0_1] : memref<1x256x128xbf16, #tpu.memory_space<vmem>>, vector<1x256x128xbf16>
    %1 = vector.shape_cast %0 : vector<1x256x128xbf16> to vector<256x128xbf16>
    %c0_2 = arith.constant 0 : index
    %c0_3 = arith.constant 0 : index
    %c0_4 = arith.constant 0 : index
    %2 = vector.load %arg2[%c0_2, %c0_3, %c0_4] : memref<1x16x128xbf16, #tpu.memory_space<vmem>>, vector<1x16x128xbf16>
    %3 = vector.shape_cast %2 : vector<1x16x128xbf16> to vector<16x128xbf16>
    %c0_5 = arith.constant 0 : index
    %c0_6 = arith.constant 0 : index
    %c0_7 = arith.constant 0 : index
    %4 = vector.load %arg4[%c0_5, %c0_6, %c0_7] : memref<1x16x128xbf16, #tpu.memory_space<vmem>>, vector<1x16x128xbf16>
    %5 = vector.shape_cast %4 : vector<1x16x128xbf16> to vector<16x128xbf16>
    %6 = tpu.concatenate %3, %1, %5 in 0 : vector<16x128xbf16>, vector<256x128xbf16>, vector<16x128xbf16> -> vector<288x128xbf16>
    %cst = arith.constant 0.000000e+00 : bf16
    %7 = vector.broadcast %cst : bf16 to vector<288x128xbf16>
    %8 = arith.cmpf oge, %6, %7 : vector<288x128xbf16>
    %cst_8 = arith.constant 1.000980e-01 : bf16
    %9 = vector.broadcast %cst_8 : bf16 to vector<288x128xbf16>
    %10 = arith.mulf %9, %6 : vector<288x128xbf16>
    %11 = arith.select %8, %6, %10 : vector<288x128xi1>, vector<288x128xbf16>
    %12 = vector.extract_strided_slice %11 {offsets = [13, 0], sizes = [256, 128], strides = [1, 1]} : vector<288x128xbf16> to vector<256x128xbf16>
    %13 = vector.extract_strided_slice %11 {offsets = [16, 0], sizes = [256, 128], strides = [1, 1]} : vector<288x128xbf16> to vector<256x128xbf16>
    %14 = vector.extract_strided_slice %11 {offsets = [19, 0], sizes = [256, 128], strides = [1, 1]} : vector<288x128xbf16> to vector<256x128xbf16>
    %15 = tpu.concatenate %12, %13, %14 in 1 : vector<256x128xbf16>, vector<256x128xbf16>, vector<256x128xbf16> -> vector<256x384xbf16>
    %c0_9 = arith.constant 0 : index
    %c0_10 = arith.constant 0 : index
    %16 = vector.load %arg5[%c0_9, %c0_10] : memref<384x128xbf16, #tpu.memory_space<vmem>>, vector<384x128xbf16>
    %cst_11 = arith.constant dense<0.000000e+00> : vector<256x128xf32>
    %17 = tpu.matmul %15, %16, %cst_11 {dimension_numbers = #tpu.dot_dimension_numbers<[1], [0], [0], [1], [0, 0, 1, 1], [], []>} : vector<256x384xbf16>, vector<384x128xbf16>, vector<256x128xf32> -> vector<256x128xf32>
    %c0_12 = arith.constant 0 : index
    %c0_13 = arith.constant 0 : index
    %18 = vector.load %arg6[%c0_12, %c0_13] : memref<1x128xf32, #tpu.memory_space<vmem>>, vector<1x128xf32>
    %19 = vector.broadcast %18 : vector<1x128xf32> to vector<256x128xf32>
    %20 = arith.addf %17, %19 : vector<256x128xf32>
    %21 = arith.extf %1 : vector<256x128xbf16> to vector<256x128xf32>
    %22 = arith.addf %20, %21 : vector<256x128xf32>
    %23 = tpu.iota {dimensions = array<i32: 0>} : vector<256x128xi32>
    %c256_i32 = arith.constant 256 : i32
    %24 = arith.muli %arg1, %c256_i32 : i32
    %25 = vector.broadcast %24 : i32 to vector<256x128xi32>
    %26 = arith.addi %23, %25 : vector<256x128xi32>
    %c16_i32 = arith.constant 16 : i32
    %27 = vector.broadcast %c16_i32 : i32 to vector<256x128xi32>
    %28 = arith.cmpi sge, %26, %27 : vector<256x128xi32>
    %c216_i32 = arith.constant 216 : i32
    %29 = vector.broadcast %c216_i32 : i32 to vector<256x128xi32>
    %30 = arith.cmpi slt, %26, %29 : vector<256x128xi32>
    %31 = arith.andi %28, %30 : vector<256x128xi1>
    %cst_14 = arith.constant 0.000000e+00 : f32
    %32 = vector.broadcast %cst_14 : f32 to vector<256x128xf32>
    %33 = arith.select %31, %22, %32 : vector<256x128xi1>, vector<256x128xf32>
    %34 = arith.truncf %33 : vector<256x128xf32> to vector<256x128xbf16>
    %c0_15 = arith.constant 0 : index
    %c0_16 = arith.constant 0 : index
    %c0_17 = arith.constant 0 : index
    %35 = vector.load %arg7[%c0_15, %c0_16, %c0_17] : memref<1x256x128xbf16, #tpu.memory_space<vmem>>, vector<1x256x128xbf16>
    %36 = vector.shape_cast %35 : vector<1x256x128xbf16> to vector<256x128xbf16>
    %37 = vector.shape_cast %34 : vector<256x128xbf16> to vector<1x256x128xbf16>
    tpu.vector_store %arg7[%c0_15, %c0_16, %c0_17], %37 {strides = array<i32>} : memref<1x256x128xbf16, #tpu.memory_space<vmem>>, vector<1x256x128xbf16>,
    return
  }
  func.func @transform_0(%arg0: i32, %arg1: i32) -> (i32, i32, i32) {
    %c16_i32 = arith.constant 16 : i32
    %0 = arith.muli %arg1, %c16_i32 : i32
    %c1_i32 = arith.constant 1 : i32
    %1 = arith.subi %0, %c1_i32 : i32
    %c0_i32 = arith.constant 0 : i32
    %2 = arith.maxsi %1, %c0_i32 : i32
    %c0_i32_0 = arith.constant 0 : i32
    %c0_i32_1 = arith.constant 0 : i32
    return %arg0, %2, %c0_i32_0 : i32, i32, i32
  }
  func.func @transform_1(%arg0: i32, %arg1: i32) -> (i32, i32, i32) {
    %c0_i32 = arith.constant 0 : i32
    %c0_i32_0 = arith.constant 0 : i32
    return %arg0, %arg1, %c0_i32 : i32, i32, i32
  }
  func.func @transform_2(%arg0: i32, %arg1: i32) -> (i32, i32, i32) {
    %c1_i32 = arith.constant 1 : i32
    %0 = arith.addi %arg1, %c1_i32 : i32
    %c16_i32 = arith.constant 16 : i32
    %1 = arith.muli %0, %c16_i32 : i32
    %c15_i32 = arith.constant 15 : i32
    %2 = arith.minsi %1, %c15_i32 : i32
    %c0_i32 = arith.constant 0 : i32
    %c0_i32_0 = arith.constant 0 : i32
    return %arg0, %2, %c0_i32 : i32, i32, i32
  }
  func.func @transform_3(%arg0: i32, %arg1: i32) -> (i32, i32) {
    %c0_i32 = arith.constant 0 : i32
    %c0_i32_0 = arith.constant 0 : i32
    %c0_i32_1 = arith.constant 0 : i32
    return %c0_i32, %c0_i32_0 : i32, i32
  }
  func.func @transform_4(%arg0: i32, %arg1: i32) -> (i32, i32) {
    %c0_i32 = arith.constant 0 : i32
    %c0_i32_0 = arith.constant 0 : i32
    %c0_i32_1 = arith.constant 0 : i32
    return %c0_i32, %c0_i32_0 : i32, i32
  }
  func.func @transform_5(%arg0: i32, %arg1: i32) -> (i32, i32, i32) {
    %c0_i32 = arith.constant 0 : i32
    %c0_i32_0 = arith.constant 0 : i32
    return %arg0, %arg1, %c0_i32 : i32, i32, i32
  }
}

</mosaic_0001>

<llo_original>
// kernel: res_block2_forward.2
$region0: #{res_block2_forward.2}
  #allocation0 [shape = 'u32[]', space=smem, size = 0x4, offset = 0x4, fixed_abs, tag = 'smem constant byte address 0x4 - core index']
  #allocation1 [shape = 'u32[72,128]{1,0:T(1,128)}', space=vmem, size = 0x9000, scoped, tag = 'internal scratch']
  %s0 = inlined_call_operand.vmem [shape: bf16[2,256,128], index: 0, kind: input, shape index: {}, may-alias: {0,1,2}]
  %s1 = inlined_call_operand.vmem [shape: bf16[2,256,128], index: 1, kind: input, shape index: {}, may-alias: {0,1,2}]
  %s2 = inlined_call_operand.vmem [shape: bf16[2,256,128], index: 2, kind: input, shape index: {}, may-alias: {0,1,2}]
  %s3 = inlined_call_operand.vmem [shape: bf16[384,128], index: 3, kind: input, shape index: {}]
  %s4 = inlined_call_operand.vmem [shape: f32[1,128], index: 4, kind: input, shape index: {}]
  %s5 = inlined_call_operand.vmem [shape: bf16[2,256,128], index: 5, kind: output, shape index: {}]
  %s6 = sld [smem:[#allocation0]]
  $region53: #{res_block2_forward.2} parent=0
    _
  %s8 = ssub.s32 1, %s6
  %s9 = scalar_select 0, %s8, %s6
  loop: start=0, step=1, limit=4
  $region2: #{res_block2_forward.2} parent=0 // loop_pre_header
    _
  $region3: #{res_block2_forward.2} parent=0 // loop_header
    %s11 = sphi 0, %s15
    %p12 = scmp.ge.s32.totalorder %s11, 4
    %s18 = sphi 0, %s30
    %s19 = sphi 0, %s26
    %s20 = sphi 0, %s18
    %s21 = sphi 0, %s19
    %s22 = sphi 0, %s20
    %s23 = sphi 0, %s21
    %s43 = sphi 0, %s45
    %s46 = sphi 0, %s43
    %s47 = sphi 0, %s46
    %s63 = sphi 0, %s47
    %s71 = sphi 0, %s73
    %s74 = sphi 0, %s71
    %s75 = sphi 0, %s74
    %s91 = sphi 0, %s75
    %s107 = sphi 0, %s109
    %s110 = sphi 0, %s107
    %s111 = sphi 0, %s110
    %s127 = sphi 0, %s111
    %s131 = sphi 0, %s131
    %s133 = sphi 0, %s131
    %s134 = sphi 0, %s133
    %s148 = sphi 0, %s134
    %s152 = sphi 0, %s152
    %s154 = sphi 0, %s152
    %s155 = sphi 0, %s154
    %s169 = sphi 0, %s155
    %s177 = sphi 0, %s179
    %s180 = sphi 0, %s177
    %s181 = sphi 0, %s180
    %s197 = sphi 0, %s181
  $region4: #{res_block2_forward.2} parent=0 // loop_header_branch
    %14 = sbr.rel (%p12) target = $region8
  $region5: #{res_block2_forward.2} parent=0 // loop_body
    %s16 = ssub.s32 %s11, 1
    %s17 = ssub.s32 %s11, 2
    %s24 = sadd.s32 1, %s19
    %p25 = scmp.ge.s32.totalorder %s24, 1
    %s26 = scalar_select %p25, 0, %s24
    %s27 = sadd.s32 1, %s18
    %s28 = scalar_select %p25, %s27, %s18
    %p29 = scmp.ge.s32.totalorder %s28, 2
    %s30 = scalar_select %p29, 0, %s28
    %s31 = smul.u32 %s19, 16
    %s32 = ssub.s32 %s31, 1
    %p33 = scmp.gt.s32.totalorder %s32, 0
    %s34 = scalar_select %p33, %s32, 0
    %s35 = smul.u32 %s26, 16
    %s36 = ssub.s32 %s35, 1
    %p37 = scmp.gt.s32.totalorder %s36, 0
    %s38 = scalar_select %p37, %s36, 0
    %s39 = ssub.s32 %s18, %s30
    %s40 = ssub.s32 %s34, %s38
    %s41 = sor.u32 %s39, %s40
    %p42 = scmp.eq.s32.totalorder %s41, 0
    %s44 = sadd.s32 %s43, 1
    %s45 = scalar_select %p42, %s43, %s44
    %p48 = pneg %p42
    %p49 = scmp.eq.s32.totalorder %s11, 1
    %p50 = por %p48, %p49
    %p51 = scmp.ne.s32.totalorder %s43, %s46
    %p52 = scmp.eq.s32.totalorder %s11, 0
    %p53 = por %p51, %p52
    %p54 = scmp.ne.s32.totalorder %s43, %s46
    %p55 = scmp.eq.s32.totalorder %s16, 1
    %p56 = por %p54, %p55
    %p57 = scmp.ne.s32.totalorder %s46, %s47
    %p58 = scmp.eq.s32.totalorder %s16, 0
    %p59 = por %p57, %p58
    %p60 = scmp.ne.s32.totalorder %s46, %s47
    %p61 = scmp.eq.s32.totalorder %s17, 1
    %p62 = por %p60, %p61
    %p64 = scmp.ne.s32.totalorder %s47, %s63
    %p65 = scmp.eq.s32.totalorder %s17, 0
    %p66 = por %p64, %p65
    %s67 = ssub.s32 %s18, %s30
    %s68 = ssub.s32 %s19, %s26
    %s69 = sor.u32 %s67, %s68
    %p70 = scmp.eq.s32.totalorder %s69, 0
    %s72 = sadd.s32 %s71, 1
    %s73 = scalar_select %p70, %s71, %s72
    %p76 = pneg %p70
    %p77 = scmp.eq.s32.totalorder %s11, 1
    %p78 = por %p76, %p77
    %p79 = scmp.ne.s32.totalorder %s71, %s74
    %p80 = scmp.eq.s32.totalorder %s11, 0
    %p81 = por %p79, %p80
    %p82 = scmp.ne.s32.totalorder %s71, %s74
    %p83 = scmp.eq.s32.totalorder %s16, 1
    %p84 = por %p82, %p83
    %p85 = scmp.ne.s32.totalorder %s74, %s75
    %p86 = scmp.eq.s32.totalorder %s16, 0
    %p87 = por %p85, %p86
    %p88 = scmp.ne.s32.totalorder %s74, %s75
    %p89 = scmp.eq.s32.totalorder %s17, 1
    %p90 = por %p88, %p89
    %p92 = scmp.ne.s32.totalorder %s75, %s91
    %p93 = scmp.eq.s32.totalorder %s17, 0
    %p94 = por %p92, %p93
    %s95 = sadd.s32 %s19, 1
    %s96 = smul.u32 %s95, 16
    %p97 = scmp.lt.s32.totalorder %s96, 15
    %s98 = scalar_select %p97, %s96, 15
    %s99 = sadd.s32 %s26, 1
    %s100 = smul.u32 %s99, 16
    %p101 = scmp.lt.s32.totalorder %s100, 15
    %s102 = scalar_select %p101, %s100, 15
    %s103 = ssub.s32 %s18, %s30
    %s104 = ssub.s32 %s98, %s102
    %s105 = sor.u32 %s103, %s104
    %p106 = scmp.eq.s32.totalorder %s105, 0
    %s108 = sadd.s32 %s107, 1
    %s109 = scalar_select %p106, %s107, %s108
    %p112 = pneg %p106
    %p113 = scmp.eq.s32.totalorder %s11, 1
    %p114 = por %p112, %p113
    %p115 = scmp.ne.s32.totalorder %s107, %s110
    %p116 = scmp.eq.s32.totalorder %s11, 0
    %p117 = por %p115, %p116
    %p118 = scmp.ne.s32.totalorder %s107, %s110
    %p119 = scmp.eq.s32.totalorder %s16, 1
    %p120 = por %p118, %p119
    %p121 = scmp.ne.s32.totalorder %s110, %s111
    %p122 = scmp.eq.s32.totalorder %s16, 0
    %p123 = por %p121, %p122
    %p124 = scmp.ne.s32.totalorder %s110, %s111
    %p125 = scmp.eq.s32.totalorder %s17, 1
    %p126 = por %p124, %p125
    %p128 = scmp.ne.s32.totalorder %s111, %s127
    %p129 = scmp.eq.s32.totalorder %s17, 0
    %p130 = por %p128, %p129
    %s132 = sadd.s32 %s131, 1
    %p135 = scmp.eq.s32.totalorder %s11, 1
    %p136 = scmp.ne.s32.totalorder %s131, %s133
    %p137 = scmp.eq.s32.totalorder %s11, 0
    %p138 = por %p136, %p137
    %p139 = scmp.ne.s32.totalorder %s131, %s133
    %p140 = scmp.eq.s32.totalorder %s16, 1
    %p141 = por %p139, %p140
    %p142 = scmp.ne.s32.totalorder %s133, %s134
    %p143 = scmp.eq.s32.totalorder %s16, 0
    %p144 = por %p142, %p143
    %p145 = scmp.ne.s32.totalorder %s133, %s134
    %p146 = scmp.eq.s32.totalorder %s17, 1
    %p147 = por %p145, %p146
    %p149 = scmp.ne.s32.totalorder %s134, %s148
    %p150 = scmp.eq.s32.totalorder %s17, 0
    %p151 = por %p149, %p150
    %s153 = sadd.s32 %s152, 1
    %p156 = scmp.eq.s32.totalorder %s11, 1
    %p157 = scmp.ne.s32.totalorder %s152, %s154
    %p158 = scmp.eq.s32.totalorder %s11, 0
    %p159 = por %p157, %p158
    %p160 = scmp.ne.s32.totalorder %s152, %s154
    %p161 = scmp.eq.s32.totalorder %s16, 1
    %p162 = por %p160, %p161
    %p163 = scmp.ne.s32.totalorder %s154, %s155
    %p164 = scmp.eq.s32.totalorder %s16, 0
    %p165 = por %p163, %p164
    %p166 = scmp.ne.s32.totalorder %s154, %s155
    %p167 = scmp.eq.s32.totalorder %s17, 1
    %p168 = por %p166, %p167
    %p170 = scmp.ne.s32.totalorder %s155, %s169
    %p171 = scmp.eq.s32.totalorder %s17, 0
    %p172 = por %p170, %p171
    %s173 = ssub.s32 %s18, %s30
    %s174 = ssub.s32 %s19, %s26
    %s175 = sor.u32 %s173, %s174
    %p176 = scmp.eq.s32.totalorder %s175, 0
    %s178 = sadd.s32 %s177, 1
    %s179 = scalar_select %p176, %s177, %s178
    %p182 = pneg %p176
    %p183 = scmp.eq.s32.totalorder %s11, 1
    %p184 = por %p182, %p183
    %p185 = scmp.ne.s32.totalorder %s177, %s180
    %p186 = scmp.eq.s32.totalorder %s11, 0
    %p187 = por %p185, %p186
    %p188 = scmp.ne.s32.totalorder %s177, %s180
    %p189 = scmp.eq.s32.totalorder %s16, 1
    %p190 = por %p188, %p189
    %p191 = scmp.ne.s32.totalorder %s180, %s181
    %p192 = scmp.eq.s32.totalorder %s16, 0
    %p193 = por %p191, %p192
    %p194 = scmp.ne.s32.totalorder %s180, %s181
    %p195 = scmp.eq.s32.totalorder %s17, 1
    %p196 = por %p194, %p195
    %p198 = scmp.ne.s32.totalorder %s181, %s197
    %p199 = scmp.eq.s32.totalorder %s17, 0
    %p200 = por %p198, %p199
    %p201 = scmp.le.s32.totalorder 1, %s11
    %p202 = scmp.lt.s32.totalorder %s11, 3
    %p203 = pnand %p201, %p202
    %p204 = pneg %p203
    // Predicated region
    $region9: #{res_block2_forward.2} parent=5 // pred_check
      _
    $region10: #{res_block2_forward.2} parent=5 // pred_check_branch
      %206 = sbr.rel (%p203) target = $region12
    $region11: #{res_block2_forward.2} parent=5 // pred_region
      %s207 = ssub.s32 %s11, 1
      // Predicated region
      $region13: #{res_block2_forward.2} parent=11 // pred_check
        %p208 = pneg %p144
      $region14: #{res_block2_forward.2} parent=11 // pred_check_branch
        %210 = sbr.rel (%p208) target = $region16
      $region15: #{res_block2_forward.2} parent=11 // pred_region
        _
      $region16: #{res_block2_forward.2} parent=11 // pred_fallthru
        _
      // Predicated region
      $region17: #{res_block2_forward.2} parent=11 // pred_check
        %p211 = pneg %p165
      $region18: #{res_block2_forward.2} parent=11 // pred_check_branch
        %213 = sbr.rel (%p211) target = $region20
      $region19: #{res_block2_forward.2} parent=11 // pred_region
        _
      $region20: #{res_block2_forward.2} parent=11 // pred_fallthru
        _
    $region12: #{res_block2_forward.2} parent=5 // pred_fallthru
      _
    %p214 = scmp.lt.s32.totalorder %s11, 2
    // Predicated region
    $region21: #{res_block2_forward.2} parent=5 // pred_check
      %p215 = pneg %p214
    $region22: #{res_block2_forward.2} parent=5 // pred_check_branch
      %217 = sbr.rel (%p215) target = $region24
    $region23: #{res_block2_forward.2} parent=5 // pred_region
      // Predicated region
      $region25: #{res_block2_forward.2} parent=23 // pred_check
        %p218 = pneg %p53
      $region26: #{res_block2_forward.2} parent=23 // pred_check_branch
        %220 = sbr.rel (%p218) target = $region28
      $region27: #{res_block2_forward.2} parent=23 // pred_region
        %s221 = smul.u32 %s19, 16
        %s222 = ssub.s32 %s221, 1
        %p223 = scmp.gt.s32.totalorder %s222, 0
        %s224 = scalar_select %p223, %s222, 0
        %s225 = smul.u32 2, %s224
        %p226 = scmp.lt.s32.totalorder %s18, 1
        %s227 = scalar_select %p226, %s18, 1
        %p228 = scmp.lt.s32.totalorder %s225, 31
        %s229 = scalar_select %p228, %s225, 31
        %s230 = smul.addr %s227, 32
        %s231 = sadd.s32 %s229, %s230
        %s232 = smul.addr %s231, 4
        %s233 = scalar_lea.vmem %s0, %s232
        %s234 = smul.u32 %s19, 16
        %s235 = ssub.s32 %s234, 1
        %p236 = scmp.gt.s32.totalorder %s235, 0
        %s237 = scalar_select %p236, %s235, 0
        %s238 = smul.u32 2, %s237
      $region28: #{res_block2_forward.2} parent=23 // pred_fallthru
        _
      // Predicated region
      $region29: #{res_block2_forward.2} parent=23 // pred_check
        %p239 = pneg %p81
      $region30: #{res_block2_forward.2} parent=23 // pred_check_branch
        %241 = sbr.rel (%p239) target = $region32
      $region31: #{res_block2_forward.2} parent=23 // pred_region
        %s242 = smul.u32 32, %s19
        %p243 = scmp.lt.s32.totalorder %s18, 1
        %s244 = scalar_select %p243, %s18, 1
        %p245 = scmp.lt.s32.totalorder %s242, 31
        %s246 = scalar_select %p245, %s242, 31
        %s247 = smul.addr %s244, 32
        %s248 = sadd.s32 %s246, %s247
        %s249 = smul.addr %s248, 4
        %s250 = scalar_lea.vmem %s1, %s249
        %s251 = smul.u32 32, %s19
      $region32: #{res_block2_forward.2} parent=23 // pred_fallthru
        _
      // Predicated region
      $region33: #{res_block2_forward.2} parent=23 // pred_check
        %p252 = pneg %p117
      $region34: #{res_block2_forward.2} parent=23 // pred_check_branch
        %254 = sbr.rel (%p252) target = $region36
      $region35: #{res_block2_forward.2} parent=23 // pred_region
        %s255 = sadd.s32 %s19, 1
        %s256 = smul.u32 %s255, 16
        %p257 = scmp.lt.s32.totalorder %s256, 15
        %s258 = scalar_select %p257, %s256, 15
        %s259 = smul.u32 2, %s258
        %p260 = scmp.lt.s32.totalorder %s18, 1
        %s261 = scalar_select %p260, %s18, 1
        %p262 = scmp.lt.s32.totalorder %s259, 31
        %s263 = scalar_select %p262, %s259, 31
        %s264 = smul.addr %s261, 32
        %s265 = sadd.s32 %s263, %s264
        %s266 = smul.addr %s265, 4
        %s267 = scalar_lea.vmem %s2, %s266
        %s268 = sadd.s32 %s19, 1
        %s269 = smul.u32 %s268, 16
        %p270 = scmp.lt.s32.totalorder %s269, 15
        %s271 = scalar_select %p270, %s269, 15
        %s272 = smul.u32 2, %s271
      $region36: #{res_block2_forward.2} parent=23 // pred_fallthru
        _
    $region24: #{res_block2_forward.2} parent=5 // pred_fallthru
      _
    %p273 = scmp.le.s32.totalorder 1, %s11
    %p274 = scmp.lt.s32.totalorder %s11, 3
    %p275 = pnand %p273, %p274
    %p276 = pneg %p275
    // Predicated region
    $region37: #{res_block2_forward.2} parent=5 // pred_check
      _
    $region38: #{res_block2_forward.2} parent=5 // pred_check_branch
      %278 = sbr.rel (%p275) target = $region40
    $region39: #{res_block2_forward.2} parent=5 // pred_region
      %s279 = ssub.s32 %s11, 1
      %s280 = smul.u32 %s21, 16
      %s281 = ssub.s32 %s280, 1
      %p282 = scmp.gt.s32.totalorder %s281, 0
      %s283 = scalar_select %p282, %s281, 0
      %s284 = smul.u32 2, %s283
      %p285 = scmp.lt.s32.totalorder %s20, 1
      %s286 = scalar_select %p285, %s20, 1
      %p287 = scmp.lt.s32.totalorder %s284, 31
      %s288 = scalar_select %p287, %s284, 31
      %s289 = smul.addr %s286, 32
      %s290 = sadd.s32 %s288, %s289
      %s291 = smul.addr %s290, 4
      %s292 = scalar_lea.vmem %s0, %s291
      %p293 = pneg %p59
      %p294 = pneg %p56
      %s295 = smul.u32 32, %s21
      %p296 = scmp.lt.s32.totalorder %s20, 1
      %s297 = scalar_select %p296, %s20, 1
      %p298 = scmp.lt.s32.totalorder %s295, 31
      %s299 = scalar_select %p298, %s295, 31
      %s300 = smul.addr %s297, 32
      %s301 = sadd.s32 %s299, %s300
      %s302 = smul.addr %s301, 4
      %s303 = scalar_lea.vmem %s1, %s302
      %p304 = pneg %p87
      %p305 = pneg %p84
      %s306 = sadd.s32 %s21, 1
      %s307 = smul.u32 %s306, 16
      %p308 = scmp.lt.s32.totalorder %s307, 15
      %s309 = scalar_select %p308, %s307, 15
      %s310 = smul.u32 2, %s309
      %p311 = scmp.lt.s32.totalorder %s20, 1
      %s312 = scalar_select %p311, %s20, 1
      %p313 = scmp.lt.s32.totalorder %s310, 31
      %s314 = scalar_select %p313, %s310, 31
      %s315 = smul.addr %s312, 32
      %s316 = sadd.s32 %s314, %s315
      %s317 = smul.addr %s316, 4
      %s318 = scalar_lea.vmem %s2, %s317
      %p319 = pneg %p123
      %p320 = pneg %p120
      %p321 = pneg %p144
      %p322 = pneg %p141
      %p323 = pneg %p165
      %p324 = pneg %p162
      %p325 = pneg %p193
      %p326 = pneg %p190
      %s327 = smul.u32 32, %s21
      %p328 = scmp.lt.s32.totalorder %s20, 1
      %s329 = scalar_select %p328, %s20, 1
      %p330 = scmp.lt.s32.totalorder %s327, 31
      %s331 = scalar_select %p330, %s327, 31
      %s332 = smul.addr %s329, 32
      %s333 = sadd.s32 %s331, %s332
      %s334 = smul.addr %s333, 4
      %s335 = scalar_lea.vmem %s5, %s334
      %s336 = smul.u32 %s21, 16
      %s337 = ssub.s32 %s336, 1
      %p338 = scmp.gt.s32.totalorder %s337, 0
      %s339 = scalar_select %p338, %s337, 0
      %s340 = smul.u32 2, %s339
      %p341 = scmp.lt.s32.totalorder %s20, 1
      %s342 = scalar_select %p341, %s20, 1
      %p343 = scmp.lt.s32.totalorder %s340, 31
      %s344 = scalar_select %p343, %s340, 31
      %s345 = smul.addr %s342, 32
      %s346 = sadd.s32 %s344, %s345
      %s347 = smul.addr %s346, 4
      %s348 = scalar_lea.vmem %s0, %s347
      %s349 = smul.u32 %s21, 16
      %s350 = ssub.s32 %s349, 1
      %p351 = scmp.gt.s32.totalorder %s350, 0
      %s352 = scalar_select %p351, %s350, 0
      %s353 = smul.u32 2, %s352
      %s354 = smul.u32 32, %s21
      %p355 = scmp.lt.s32.totalorder %s20, 1
      %s356 = scalar_select %p355, %s20, 1
      %p357 = scmp.lt.s32.totalorder %s354, 31
      %s358 = scalar_select %p357, %s354, 31
      %s359 = smul.addr %s356, 32
      %s360 = sadd.s32 %s358, %s359
      %s361 = smul.addr %s360, 4
      %s362 = scalar_lea.vmem %s1, %s361
      %s363 = smul.u32 32, %s21
      %s364 = sadd.s32 %s21, 1
      %s365 = smul.u32 %s364, 16
      %p366 = scmp.lt.s32.totalorder %s365, 15
      %s367 = scalar_select %p366, %s365, 15
      %s368 = smul.u32 2, %s367
      %p369 = scmp.lt.s32.totalorder %s20, 1
      %s370 = scalar_select %p369, %s20, 1
      %p371 = scmp.lt.s32.totalorder %s368, 31
      %s372 = scalar_select %p371, %s368, 31
      %s373 = smul.addr %s370, 32
      %s374 = sadd.s32 %s372, %s373
      %s375 = smul.addr %s374, 4
      %s376 = scalar_lea.vmem %s2, %s375
      %s377 = sadd.s32 %s21, 1
      %s378 = smul.u32 %s377, 16
      %p379 = scmp.lt.s32.totalorder %s378, 15
      %s380 = scalar_select %p379, %s378, 15
      %s381 = smul.u32 2, %s380
      %s382 = smul.u32 32, %s21
      %p383 = scmp.lt.s32.totalorder %s20, 1
      %s384 = scalar_select %p383, %s20, 1
      %p385 = scmp.lt.s32.totalorder %s382, 31
      %s386 = scalar_select %p385, %s382, 31
      %s387 = smul.addr %s384, 32
      %s388 = sadd.s32 %s386, %s387
      %s389 = smul.addr %s388, 4
      %s390 = scalar_lea.vmem %s5, %s389
      %s391 = smul.u32 32, %s21
      %v392 = vld [vmem:[%s362] sm:$0xf]
      %v393 = vld [vmem:[%s362 + $0x4] sm:$0xf]
      %v394 = vld [vmem:[%s362 + $0x8] sm:$0xf]
      %v395 = vld [vmem:[%s362 + $0xc] sm:$0xf]
      %v396 = vld [vmem:[%s362 + $0x10] sm:$0xf]
      %v397 = vld [vmem:[%s362 + $0x14] sm:$0xf]
      %v398 = vld [vmem:[%s362 + $0x18] sm:$0xf]
      %v399 = vld [vmem:[%s362 + $0x1c] sm:$0xf]
      %v400 = vld [vmem:[%s362 + $0x20] sm:$0xf]
      %v401 = vld [vmem:[%s362 + $0x24] sm:$0xf]
      %v402 = vld [vmem:[%s362 + $0x28] sm:$0xf]
      %v403 = vld [vmem:[%s362 + $0x2c] sm:$0xf]
      %v404 = vld [vmem:[%s362 + $0x30] sm:$0xf]
      %v405 = vld [vmem:[%s362 + $0x34] sm:$0xf]
      %v406 = vld [vmem:[%s362 + $0x38] sm:$0xf]
      %v407 = vld [vmem:[%s362 + $0x3c] sm:$0xf]
      %v408 = vld [vmem:[%s362 + $0x40] sm:$0xf]
      %v409 = vld [vmem:[%s362 + $0x44] sm:$0xf]
      %v410 = vld [vmem:[%s362 + $0x48] sm:$0xf]
      %v411 = vld [vmem:[%s362 + $0x4c] sm:$0xf]
      %v412 = vld [vmem:[%s362 + $0x50] sm:$0xf]
      %v413 = vld [vmem:[%s362 + $0x54] sm:$0xf]
      %v414 = vld [vmem:[%s362 + $0x58] sm:$0xf]
      %v415 = vld [vmem:[%s362 + $0x5c] sm:$0xf]
      %v416 = vld [vmem:[%s362 + $0x60] sm:$0xf]
      %v417 = vld [vmem:[%s362 + $0x64] sm:$0xf]
      %v418 = vld [vmem:[%s362 + $0x68] sm:$0xf]
      %v419 = vld [vmem:[%s362 + $0x6c] sm:$0xf]
      %v420 = vld [vmem:[%s362 + $0x70] sm:$0xf]
      %v421 = vld [vmem:[%s362 + $0x74] sm:$0xf]
      %v422 = vld [vmem:[%s362 + $0x78] sm:$0xf]
      %v423 = vld [vmem:[%s362 + $0x7c] sm:$0xf]
      %v424 = vld [vmem:[%s348] sm:$0xf]
      %v425 = vld [vmem:[%s348 + $0x4] sm:$0xf]
      %v426 = vld [vmem:[%s376] sm:$0xf]
      %v427 = vld [vmem:[%s376 + $0x4] sm:$0xf]
      %v430 = vunpack.c.l.b16 %v424
      %v431 = vunpack.c.l.b16 %v425
      %v432 = vpack.c.b16 %v431, %v430
      %v466 = vunpack.c.l.b16 %v392
      %v467 = vunpack.c.l.b16 %v393
      %v468 = vunpack.c.l.b16 %v394
      %v469 = vunpack.c.l.b16 %v395
      %v470 = vunpack.c.l.b16 %v396
      %v471 = vunpack.c.l.b16 %v397
      %v472 = vunpack.c.l.b16 %v398
      %v473 = vunpack.c.l.b16 %v399
      %v474 = vunpack.c.l.b16 %v400
      %v475 = vunpack.c.l.b16 %v401
      %v476 = vunpack.c.l.b16 %v402
      %v477 = vunpack.c.l.b16 %v403
      %v478 = vunpack.c.l.b16 %v404
      %v479 = vunpack.c.l.b16 %v405
      %v480 = vunpack.c.l.b16 %v406
      %v481 = vunpack.c.l.b16 %v407
      %v482 = vunpack.c.l.b16 %v408
      %v483 = vunpack.c.l.b16 %v409
      %v484 = vunpack.c.l.b16 %v410
      %v485 = vunpack.c.l.b16 %v411
      %v486 = vunpack.c.l.b16 %v412
      %v487 = vunpack.c.l.b16 %v413
      %v488 = vunpack.c.l.b16 %v414
      %v489 = vunpack.c.l.b16 %v415
      %v490 = vunpack.c.l.b16 %v416
      %v491 = vunpack.c.l.b16 %v417
      %v492 = vunpack.c.l.b16 %v418
      %v493 = vunpack.c.l.b16 %v419
      %v494 = vunpack.c.l.b16 %v420
      %v495 = vunpack.c.l.b16 %v421
      %v496 = vunpack.c.l.b16 %v422
      %v497 = vunpack.c.l.b16 %v423
      %v498 = vpack.c.b16 %v467, %v466
      %v499 = vpack.c.b16 %v469, %v468
      %v500 = vpack.c.b16 %v471, %v470
      %v501 = vpack.c.b16 %v473, %v472
      %v502 = vpack.c.b16 %v475, %v474
      %v503 = vpack.c.b16 %v477, %v476
      %v504 = vpack.c.b16 %v479, %v478
      %v505 = vpack.c.b16 %v481, %v480
      %v506 = vpack.c.b16 %v483, %v482
      %v507 = vpack.c.b16 %v485, %v484
      %v508 = vpack.c.b16 %v487, %v486
      %v509 = vpack.c.b16 %v489, %v488
      %v510 = vpack.c.b16 %v491, %v490
      %v511 = vpack.c.b16 %v493, %v492
      %v512 = vpack.c.b16 %v495, %v494
      %v513 = vpack.c.b16 %v497, %v496
      %v532 = vunpack.c.l.b16 %v426
      %v533 = vunpack.c.l.b16 %v427
      %v534 = vpack.c.b16 %v533, %v532
      %v536 = vunpack.c.l.bf16 %v432
      %v537 = vunpack.c.h.bf16 %v432
      %v538 = vunpack.c.l.bf16 %v498
      %v539 = vunpack.c.h.bf16 %v498
      %v540 = vunpack.c.l.bf16 %v499
      %v541 = vunpack.c.h.bf16 %v499
      %v542 = vunpack.c.l.bf16 %v500
      %v543 = vunpack.c.h.bf16 %v500
      %v544 = vunpack.c.l.bf16 %v501
      %v545 = vunpack.c.h.bf16 %v501
      %v546 = vunpack.c.l.bf16 %v502
      %v547 = vunpack.c.h.bf16 %v502
      %v548 = vunpack.c.l.bf16 %v503
      %v549 = vunpack.c.h.bf16 %v503
      %v550 = vunpack.c.l.bf16 %v504
      %v551 = vunpack.c.h.bf16 %v504
      %v552 = vunpack.c.l.bf16 %v505
      %v553 = vunpack.c.h.bf16 %v505
      %v554 = vunpack.c.l.bf16 %v506
      %v555 = vunpack.c.h.bf16 %v506
      %v556 = vunpack.c.l.bf16 %v507
      %v557 = vunpack.c.h.bf16 %v507
      %v558 = vunpack.c.l.bf16 %v508
      %v559 = vunpack.c.h.bf16 %v508
      %v560 = vunpack.c.l.bf16 %v509
      %v561 = vunpack.c.h.bf16 %v509
      %v562 = vunpack.c.l.bf16 %v510
      %v563 = vunpack.c.h.bf16 %v510
      %v564 = vunpack.c.l.bf16 %v511
      %v565 = vunpack.c.h.bf16 %v511
      %v566 = vunpack.c.l.bf16 %v512
      %v567 = vunpack.c.h.bf16 %v512
      %v568 = vunpack.c.l.bf16 %v513
      %v569 = vunpack.c.h.bf16 %v513
      %v570 = vunpack.c.l.bf16 %v534
      %v571 = vunpack.c.h.bf16 %v534
      %vm572 = vcmp.ge.f32.partialorder %v536, 0.0
      %vm573 = vcmp.ge.f32.partialorder %v537, 0.0
      %vm574 = vcmp.ge.f32.partialorder %v538, 0.0
      %vm575 = vcmp.ge.f32.partialorder %v539, 0.0
      %vm576 = vcmp.ge.f32.partialorder %v540, 0.0
      %vm577 = vcmp.ge.f32.partialorder %v541, 0.0
      %vm578 = vcmp.ge.f32.partialorder %v542, 0.0
      %vm579 = vcmp.ge.f32.partialorder %v543, 0.0
      %vm580 = vcmp.ge.f32.partialorder %v544, 0.0
      %vm581 = vcmp.ge.f32.partialorder %v545, 0.0
      %vm582 = vcmp.ge.f32.partialorder %v546, 0.0
      %vm583 = vcmp.ge.f32.partialorder %v547, 0.0
      %vm584 = vcmp.ge.f32.partialorder %v548, 0.0
      %vm585 = vcmp.ge.f32.partialorder %v549, 0.0
      %vm586 = vcmp.ge.f32.partialorder %v550, 0.0
      %vm587 = vcmp.ge.f32.partialorder %v551, 0.0
      %vm588 = vcmp.ge.f32.partialorder %v552, 0.0
      %vm589 = vcmp.ge.f32.partialorder %v553, 0.0
      %vm590 = vcmp.ge.f32.partialorder %v554, 0.0
      %vm591 = vcmp.ge.f32.partialorder %v555, 0.0
      %vm592 = vcmp.ge.f32.partialorder %v556, 0.0
      %vm593 = vcmp.ge.f32.partialorder %v557, 0.0
      %vm594 = vcmp.ge.f32.partialorder %v558, 0.0
      %vm595 = vcmp.ge.f32.partialorder %v559, 0.0
      %vm596 = vcmp.ge.f32.partialorder %v560, 0.0
      %vm597 = vcmp.ge.f32.partialorder %v561, 0.0
      %vm598 = vcmp.ge.f32.partialorder %v562, 0.0
      %vm599 = vcmp.ge.f32.partialorder %v563, 0.0
      %vm600 = vcmp.ge.f32.partialorder %v564, 0.0
      %vm601 = vcmp.ge.f32.partialorder %v565, 0.0
      %vm602 = vcmp.ge.f32.partialorder %v566, 0.0
      %vm603 = vcmp.ge.f32.partialorder %v567, 0.0
      %vm604 = vcmp.ge.f32.partialorder %v568, 0.0
      %vm605 = vcmp.ge.f32.partialorder %v569, 0.0
      %vm606 = vcmp.ge.f32.partialorder %v570, 0.0
      %vm607 = vcmp.ge.f32.partialorder %v571, 0.0
      %v608 = vmul.f32 %v536, 0.100097656
      %v609 = vmul.f32 %v537, 0.100097656
      %v610 = vmul.f32 %v538, 0.100097656
      %v611 = vmul.f32 %v539, 0.100097656
      %v612 = vmul.f32 %v540, 0.100097656
      %v613 = vmul.f32 %v541, 0.100097656
      %v614 = vmul.f32 %v542, 0.100097656
      %v615 = vmul.f32 %v543, 0.100097656
      %v616 = vmul.f32 %v544, 0.100097656
      %v617 = vmul.f32 %v545, 0.100097656
      %v618 = vmul.f32 %v546, 0.100097656
      %v619 = vmul.f32 %v547, 0.100097656
      %v620 = vmul.f32 %v548, 0.100097656
      %v621 = vmul.f32 %v549, 0.100097656
      %v622 = vmul.f32 %v550, 0.100097656
      %v623 = vmul.f32 %v551, 0.100097656
      %v624 = vmul.f32 %v552, 0.100097656
      %v625 = vmul.f32 %v553, 0.100097656
      %v626 = vmul.f32 %v554, 0.100097656
      %v627 = vmul.f32 %v555, 0.100097656
      %v628 = vmul.f32 %v556, 0.100097656
      %v629 = vmul.f32 %v557, 0.100097656
      %v630 = vmul.f32 %v558, 0.100097656
      %v631 = vmul.f32 %v559, 0.100097656
      %v632 = vmul.f32 %v560, 0.100097656
      %v633 = vmul.f32 %v561, 0.100097656
      %v634 = vmul.f32 %v562, 0.100097656
      %v635 = vmul.f32 %v563, 0.100097656
      %v636 = vmul.f32 %v564, 0.100097656
      %v637 = vmul.f32 %v565, 0.100097656
      %v638 = vmul.f32 %v566, 0.100097656
      %v639 = vmul.f32 %v567, 0.100097656
      %v640 = vmul.f32 %v568, 0.100097656
      %v641 = vmul.f32 %v569, 0.100097656
      %v642 = vmul.f32 %v570, 0.100097656
      %v643 = vmul.f32 %v571, 0.100097656
      %v644 = vpack.c.bf16 %v608, %v608
      %v645 = vpack.c.bf16 %v609, %v609
      %v646 = vpack.c.bf16 %v610, %v610
      %v647 = vpack.c.bf16 %v611, %v611
      %v648 = vpack.c.bf16 %v612, %v612
      %v649 = vpack.c.bf16 %v613, %v613
      %v650 = vpack.c.bf16 %v614, %v614
      %v651 = vpack.c.bf16 %v615, %v615
      %v652 = vpack.c.bf16 %v616, %v616
      %v653 = vpack.c.bf16 %v617, %v617
      %v654 = vpack.c.bf16 %v618, %v618
      %v655 = vpack.c.bf16 %v619, %v619
      %v656 = vpack.c.bf16 %v620, %v620
      %v657 = vpack.c.bf16 %v621, %v621
      %v658 = vpack.c.bf16 %v622, %v622
      %v659 = vpack.c.bf16 %v623, %v623
      %v660 = vpack.c.bf16 %v624, %v624
      %v661 = vpack.c.bf16 %v625, %v625
      %v662 = vpack.c.bf16 %v626, %v626
      %v663 = vpack.c.bf16 %v627, %v627
      %v664 = vpack.c.bf16 %v628, %v628
      %v665 = vpack.c.bf16 %v629, %v629
      %v666 = vpack.c.bf16 %v630, %v630
      %v667 = vpack.c.bf16 %v631, %v631
      %v668 = vpack.c.bf16 %v632, %v632
      %v669 = vpack.c.bf16 %v633, %v633
      %v670 = vpack.c.bf16 %v634, %v634
      %v671 = vpack.c.bf16 %v635, %v635
      %v672 = vpack.c.bf16 %v636, %v636
      %v673 = vpack.c.bf16 %v637, %v637
      %v674 = vpack.c.bf16 %v638, %v638
      %v675 = vpack.c.bf16 %v639, %v639
      %v676 = vpack.c.bf16 %v640, %v640
      %v677 = vpack.c.bf16 %v641, %v641
      %v678 = vpack.c.bf16 %v642, %v642
      %v679 = vpack.c.bf16 %v643, %v643
      %vm680 = vmpackc.low %vm573, %vm572
      %vm681 = vmpackc.low %vm575, %vm574
      %vm682 = vmpackc.low %vm577, %vm576
      %vm683 = vmpackc.low %vm579, %vm578
      %vm684 = vmpackc.low %vm581, %vm580
      %vm685 = vmpackc.low %vm583, %vm582
      %vm686 = vmpackc.low %vm585, %vm584
      %vm687 = vmpackc.low %vm587, %vm586
      %vm688 = vmpackc.low %vm589, %vm588
      %vm689 = vmpackc.low %vm591, %vm590
      %vm690 = vmpackc.low %vm593, %vm592
      %vm691 = vmpackc.low %vm595, %vm594
      %vm692 = vmpackc.low %vm597, %vm596
      %vm693 = vmpackc.low %vm599, %vm598
      %vm694 = vmpackc.low %vm601, %vm600
      %vm695 = vmpackc.low %vm603, %vm602
      %vm696 = vmpackc.low %vm605, %vm604
      %vm697 = vmpackc.low %vm607, %vm606
      %v734 = vunpack.c.l.b16 %v644
      %v735 = vunpack.c.l.b16 %v645
      %v736 = vunpack.c.l.b16 %v646
      %v737 = vunpack.c.l.b16 %v647
      %v738 = vunpack.c.l.b16 %v648
      %v739 = vunpack.c.l.b16 %v649
      %v740 = vunpack.c.l.b16 %v650
      %v741 = vunpack.c.l.b16 %v651
      %v742 = vunpack.c.l.b16 %v652
      %v743 = vunpack.c.l.b16 %v653
      %v744 = vunpack.c.l.b16 %v654
      %v745 = vunpack.c.l.b16 %v655
      %v746 = vunpack.c.l.b16 %v656
      %v747 = vunpack.c.l.b16 %v657
      %v748 = vunpack.c.l.b16 %v658
      %v749 = vunpack.c.l.b16 %v659
      %v750 = vunpack.c.l.b16 %v660
      %v751 = vunpack.c.l.b16 %v661
      %v752 = vunpack.c.l.b16 %v662
      %v753 = vunpack.c.l.b16 %v663
      %v754 = vunpack.c.l.b16 %v664
      %v755 = vunpack.c.l.b16 %v665
      %v756 = vunpack.c.l.b16 %v666
      %v757 = vunpack.c.l.b16 %v667
      %v758 = vunpack.c.l.b16 %v668
      %v759 = vunpack.c.l.b16 %v669
      %v760 = vunpack.c.l.b16 %v670
      %v761 = vunpack.c.l.b16 %v671
      %v762 = vunpack.c.l.b16 %v672
      %v763 = vunpack.c.l.b16 %v673
      %v764 = vunpack.c.l.b16 %v674
      %v765 = vunpack.c.l.b16 %v675
      %v766 = vunpack.c.l.b16 %v676
      %v767 = vunpack.c.l.b16 %v677
      %v768 = vunpack.c.l.b16 %v678
      %v769 = vunpack.c.l.b16 %v679
      %v770 = vpack.c.b16 %v735, %v734
      %v771 = vpack.c.b16 %v737, %v736
      %v772 = vpack.c.b16 %v739, %v738
      %v773 = vpack.c.b16 %v741, %v740
      %v774 = vpack.c.b16 %v743, %v742
      %v775 = vpack.c.b16 %v745, %v744
      %v776 = vpack.c.b16 %v747, %v746
      %v777 = vpack.c.b16 %v749, %v748
      %v778 = vpack.c.b16 %v751, %v750
      %v779 = vpack.c.b16 %v753, %v752
      %v780 = vpack.c.b16 %v755, %v754
      %v781 = vpack.c.b16 %v757, %v756
      %v782 = vpack.c.b16 %v759, %v758
      %v783 = vpack.c.b16 %v761, %v760
      %v784 = vpack.c.b16 %v763, %v762
      %v785 = vpack.c.b16 %v765, %v764
      %v786 = vpack.c.b16 %v767, %v766
      %v787 = vpack.c.b16 %v769, %v768
      %v806 = vsel %vm680, %v432, %v770
      %v807 = vsel %vm681, %v498, %v771
      %v808 = vsel %vm682, %v499, %v772
      %v809 = vsel %vm683, %v500, %v773
      %v810 = vsel %vm684, %v501, %v774
      %v811 = vsel %vm685, %v502, %v775
      %v812 = vsel %vm686, %v503, %v776
      %v813 = vsel %vm687, %v504, %v777
      %v814 = vsel %vm688, %v505, %v778
      %v815 = vsel %vm689, %v506, %v779
      %v816 = vsel %vm690, %v507, %v780
      %v817 = vsel %vm691, %v508, %v781
      %v818 = vsel %vm692, %v509, %v782
      %v819 = vsel %vm693, %v510, %v783
      %v820 = vsel %vm694, %v511, %v784
      %v821 = vsel %vm695, %v512, %v785
      %v822 = vsel %vm696, %v513, %v786
      %v823 = vsel %vm697, %v534, %v787
      %vm824 = vsmask.f32 7424
      %v826 = vshll.u32 %v807, 16
      %v828 = vrot.slane %v826, 1
      %v829 = vshrl.u32 %v807, 16
      %v831 = vor.u32 %v829, %v828
      %v833 = vshll.u32 %v808, 16
      %v835 = vrot.slane %v833, 1
      %v836 = vsel %vm824, %v831, %v835
      %v837 = vshrl.u32 %v808, 16
      %v839 = vor.u32 %v837, %v835
      %v841 = vshll.u32 %v809, 16
      %v843 = vrot.slane %v841, 1
      %v844 = vsel %vm824, %v839, %v843
      %v845 = vshrl.u32 %v809, 16
      %v847 = vor.u32 %v845, %v843
      %v849 = vshll.u32 %v810, 16
      %v851 = vrot.slane %v849, 1
      %v852 = vsel %vm824, %v847, %v851
      %v853 = vshrl.u32 %v810, 16
      %v855 = vor.u32 %v853, %v851
      %v857 = vshll.u32 %v811, 16
      %v859 = vrot.slane %v857, 1
      %v860 = vsel %vm824, %v855, %v859
      %v861 = vshrl.u32 %v811, 16
      %v863 = vor.u32 %v861, %v859
      %v865 = vshll.u32 %v812, 16
      %v867 = vrot.slane %v865, 1
      %v868 = vsel %vm824, %v863, %v867
      %v869 = vshrl.u32 %v812, 16
      %v871 = vor.u32 %v869, %v867
      %v873 = vshll.u32 %v813, 16
      %v875 = vrot.slane %v873, 1
      %v876 = vsel %vm824, %v871, %v875
      %v877 = vshrl.u32 %v813, 16
      %v879 = vor.u32 %v877, %v875
      %v881 = vshll.u32 %v814, 16
      %v883 = vrot.slane %v881, 1
      %v884 = vsel %vm824, %v879, %v883
      %v885 = vshrl.u32 %v814, 16
      %v887 = vor.u32 %v885, %v883
      %v889 = vshll.u32 %v815, 16
      %v891 = vrot.slane %v889, 1
      %v892 = vsel %vm824, %v887, %v891
      %v893 = vshrl.u32 %v815, 16
      %v895 = vor.u32 %v893, %v891
      %v897 = vshll.u32 %v816, 16
      %v899 = vrot.slane %v897, 1
      %v900 = vsel %vm824, %v895, %v899
      %v901 = vshrl.u32 %v816, 16
      %v903 = vor.u32 %v901, %v899
      %v905 = vshll.u32 %v817, 16
      %v907 = vrot.slane %v905, 1
      %v908 = vsel %vm824, %v903, %v907
      %v909 = vshrl.u32 %v817, 16
      %v911 = vor.u32 %v909, %v907
      %v913 = vshll.u32 %v818, 16
      %v915 = vrot.slane %v913, 1
      %v916 = vsel %vm824, %v911, %v915
      %v917 = vshrl.u32 %v818, 16
      %v919 = vor.u32 %v917, %v915
      %v921 = vshll.u32 %v819, 16
      %v923 = vrot.slane %v921, 1
      %v924 = vsel %vm824, %v919, %v923
      %v925 = vshrl.u32 %v819, 16
      %v927 = vor.u32 %v925, %v923
      %v929 = vshll.u32 %v820, 16
      %v931 = vrot.slane %v929, 1
      %v932 = vsel %vm824, %v927, %v931
      %v933 = vshrl.u32 %v820, 16
      %v935 = vor.u32 %v933, %v931
      %v937 = vshll.u32 %v821, 16
      %v939 = vrot.slane %v937, 1
      %v940 = vsel %vm824, %v935, %v939
      %v941 = vshrl.u32 %v821, 16
      %v943 = vor.u32 %v941, %v939
      %v945 = vshll.u32 %v822, 16
      %v947 = vrot.slane %v945, 1
      %v948 = vsel %vm824, %v943, %v947
      %v949 = vshrl.u32 %v822, 16
      %v951 = vor.u32 %v949, %v947
      %vm969 = vcmask 1046528
      %v970 = vrot.slane %v807, 1
      %v971 = vrot.slane %v808, 1
      %v972 = vsel %vm969, %v970, %v971
      %v973 = vrot.slane %v809, 1
      %v974 = vsel %vm969, %v971, %v973
      %v975 = vrot.slane %v810, 1
      %v976 = vsel %vm969, %v973, %v975
      %v977 = vrot.slane %v811, 1
      %v978 = vsel %vm969, %v975, %v977
      %v979 = vrot.slane %v812, 1
      %v980 = vsel %vm969, %v977, %v979
      %v981 = vrot.slane %v813, 1
      %v982 = vsel %vm969, %v979, %v981
      %v983 = vrot.slane %v814, 1
      %v984 = vsel %vm969, %v981, %v983
      %v985 = vrot.slane %v815, 1
      %v986 = vsel %vm969, %v983, %v985
      %v987 = vrot.slane %v816, 1
      %v988 = vsel %vm969, %v985, %v987
      %v989 = vrot.slane %v817, 1
      %v990 = vsel %vm969, %v987, %v989
      %v991 = vrot.slane %v818, 1
      %v992 = vsel %vm969, %v989, %v991
      %v993 = vrot.slane %v819, 1
      %v994 = vsel %vm969, %v991, %v993
      %v995 = vrot.slane %v820, 1
      %v996 = vsel %vm969, %v993, %v995
      %v997 = vrot.slane %v821, 1
      %v998 = vsel %vm969, %v995, %v997
      %v999 = vrot.slane %v822, 1
      %v1000 = vsel %vm969, %v997, %v999
      %v1001 = vrot.slane %v823, 1
      %v1002 = vsel %vm969, %v999, %v1001
      %v1003 = vld [vmem:[%s3] sm:$0xf]
      %v1004 = vld [vmem:[%s3 + $0x4] sm:$0xf]
      %v1005 = vld [vmem:[%s3 + $0x8] sm:$0xf]
      %v1006 = vld [vmem:[%s3 + $0xc] sm:$0xf]
      %v1007 = vld [vmem:[%s3 + $0x10] sm:$0xf]
      %v1008 = vld [vmem:[%s3 + $0x14] sm:$0xf]
      %v1009 = vld [vmem:[%s3 + $0x18] sm:$0xf]
      %v1010 = vld [vmem:[%s3 + $0x1c] sm:$0xf]
      %v1011 = vld [vmem:[%s3 + $0x20] sm:$0xf]
      %v1012 = vld [vmem:[%s3 + $0x24] sm:$0xf]
      %v1013 = vld [vmem:[%s3 + $0x28] sm:$0xf]
      %v1014 = vld [vmem:[%s3 + $0x2c] sm:$0xf]
      %v1015 = vld [vmem:[%s3 + $0x30] sm:$0xf]
      %v1016 = vld [vmem:[%s3 + $0x34] sm:$0xf]
      %v1017 = vld [vmem:[%s3 + $0x38] sm:$0xf]
      %v1018 = vld [vmem:[%s3 + $0x3c] sm:$0xf]
      %v1019 = vld [vmem:[%s3 + $0x40] sm:$0xf]
      %v1020 = vld [vmem:[%s3 + $0x44] sm:$0xf]
      %v1021 = vld [vmem:[%s3 + $0x48] sm:$0xf]
      %v1022 = vld [vmem:[%s3 + $0x4c] sm:$0xf]
      %v1023 = vld [vmem:[%s3 + $0x50] sm:$0xf]
      %v1024 = vld [vmem:[%s3 + $0x54] sm:$0xf]
      %v1025 = vld [vmem:[%s3 + $0x58] sm:$0xf]
      %v1026 = vld [vmem:[%s3 + $0x5c] sm:$0xf]
      %v1027 = vld [vmem:[%s3 + $0x60] sm:$0xf]
      %v1028 = vld [vmem:[%s3 + $0x64] sm:$0xf]
      %v1029 = vld [vmem:[%s3 + $0x68] sm:$0xf]
      %v1030 = vld [vmem:[%s3 + $0x6c] sm:$0xf]
      %v1031 = vld [vmem:[%s3 + $0x70] sm:$0xf]
      %v1032 = vld [vmem:[%s3 + $0x74] sm:$0xf]
      %v1033 = vld [vmem:[%s3 + $0x78] sm:$0xf]
      %v1034 = vld [vmem:[%s3 + $0x7c] sm:$0xf]
      %v1035 = vld [vmem:[%s3 + $0x80] sm:$0xf]
      %v1036 = vld [vmem:[%s3 + $0x84] sm:$0xf]
      %v1037 = vld [vmem:[%s3 + $0x88] sm:$0xf]
      %v1038 = vld [vmem:[%s3 + $0x8c] sm:$0xf]
      %v1039 = vld [vmem:[%s3 + $0x90] sm:$0xf]
      %v1040 = vld [vmem:[%s3 + $0x94] sm:$0xf]
      %v1041 = vld [vmem:[%s3 + $0x98] sm:$0xf]
      %v1042 = vld [vmem:[%s3 + $0x9c] sm:$0xf]
      %v1043 = vld [vmem:[%s3 + $0xa0] sm:$0xf]
      %v1044 = vld [vmem:[%s3 + $0xa4] sm:$0xf]
      %v1045 = vld [vmem:[%s3 + $0xa8] sm:$0xf]
      %v1046 = vld [vmem:[%s3 + $0xac] sm:$0xf]
      %v1047 = vld [vmem:[%s3 + $0xb0] sm:$0xf]
      %v1048 = vld [vmem:[%s3 + $0xb4] sm:$0xf]
      %v1049 = vld [vmem:[%s3 + $0xb8] sm:$0xf]
      %v1050 = vld [vmem:[%s3 + $0xbc] sm:$0xf]
      %v1051 = vld [vmem:[%s4] sm:$0x1]
      %v1053 = vperm.slane %v1051, 0
      %vm1055 = vsmask.f32 256
      %v1057 = vshrl.u32 %v806, 16
      %v1059 = vrot.slane %v1057, 7
      %v1060 = vrot.slane %v829, 7
      %v1061 = vor.u32 %v1060, %v826
      %v1062 = vsel %vm1055, %v1059, %v1061
      %v1064 = vshrl.u32 %v828, 16
      %v1066 = vrot.slane %v1064, 7
      %v1068 = vshrl.u32 %v836, 16
      %v1070 = vrot.slane %v1068, 7
      %v1071 = vshll.u32 %v836, 16
      %v1073 = vor.u32 %v1070, %v1071
      %v1074 = vsel %vm1055, %v1066, %v1073
      %v1076 = vshrl.u32 %v970, 16
      %v1078 = vrot.slane %v1076, 7
      %v1080 = vshrl.u32 %v972, 16
      %v1082 = vrot.slane %v1080, 7
      %v1083 = vshll.u32 %v972, 16
      %v1085 = vor.u32 %v1082, %v1083
      %v1086 = vsel %vm1055, %v1078, %v1085
      %v1087 = vrot.slane %v837, 7
      %v1088 = vor.u32 %v1087, %v833
      %v1089 = vsel %vm1055, %v1060, %v1088
      %v1091 = vshrl.u32 %v844, 16
      %v1093 = vrot.slane %v1091, 7
      %v1094 = vshll.u32 %v844, 16
      %v1096 = vor.u32 %v1093, %v1094
      %v1097 = vsel %vm1055, %v1070, %v1096
      %v1099 = vshrl.u32 %v974, 16
      %v1101 = vrot.slane %v1099, 7
      %v1102 = vshll.u32 %v974, 16
      %v1104 = vor.u32 %v1101, %v1102
      %v1105 = vsel %vm1055, %v1082, %v1104
      %v1106 = vrot.slane %v845, 7
      %v1107 = vor.u32 %v1106, %v841
      %v1108 = vsel %vm1055, %v1087, %v1107
      %v1110 = vshrl.u32 %v852, 16
      %v1112 = vrot.slane %v1110, 7
      %v1113 = vshll.u32 %v852, 16
      %v1115 = vor.u32 %v1112, %v1113
      %v1116 = vsel %vm1055, %v1093, %v1115
      %v1118 = vshrl.u32 %v976, 16
      %v1120 = vrot.slane %v1118, 7
      %v1121 = vshll.u32 %v976, 16
      %v1123 = vor.u32 %v1120, %v1121
      %v1124 = vsel %vm1055, %v1101, %v1123
      %v1125 = vrot.slane %v853, 7
      %v1126 = vor.u32 %v1125, %v849
      %v1127 = vsel %vm1055, %v1106, %v1126
      %v1129 = vshrl.u32 %v860, 16
      %v1131 = vrot.slane %v1129, 7
      %v1132 = vshll.u32 %v860, 16
      %v1134 = vor.u32 %v1131, %v1132
      %v1135 = vsel %vm1055, %v1112, %v1134
      %v1137 = vshrl.u32 %v978, 16
      %v1139 = vrot.slane %v1137, 7
      %v1140 = vshll.u32 %v978, 16
      %v1142 = vor.u32 %v1139, %v1140
      %v1143 = vsel %vm1055, %v1120, %v1142
      %v1144 = vrot.slane %v861, 7
      %v1145 = vor.u32 %v1144, %v857
      %v1146 = vsel %vm1055, %v1125, %v1145
      %v1148 = vshrl.u32 %v868, 16
      %v1150 = vrot.slane %v1148, 7
      %v1151 = vshll.u32 %v868, 16
      %v1153 = vor.u32 %v1150, %v1151
      %v1154 = vsel %vm1055, %v1131, %v1153
      %v1156 = vshrl.u32 %v980, 16
      %v1158 = vrot.slane %v1156, 7
      %v1159 = vshll.u32 %v980, 16
      %v1161 = vor.u32 %v1158, %v1159
      %v1162 = vsel %vm1055, %v1139, %v1161
      %v1163 = vrot.slane %v869, 7
      %v1164 = vor.u32 %v1163, %v865
      %v1165 = vsel %vm1055, %v1144, %v1164
      %v1167 = vshrl.u32 %v876, 16
      %v1169 = vrot.slane %v1167, 7
      %v1170 = vshll.u32 %v876, 16
      %v1172 = vor.u32 %v1169, %v1170
      %v1173 = vsel %vm1055, %v1150, %v1172
      %v1175 = vshrl.u32 %v982, 16
      %v1177 = vrot.slane %v1175, 7
      %v1178 = vshll.u32 %v982, 16
      %v1180 = vor.u32 %v1177, %v1178
      %v1181 = vsel %vm1055, %v1158, %v1180
      %v1182 = vrot.slane %v877, 7
      %v1183 = vor.u32 %v1182, %v873
      %v1184 = vsel %vm1055, %v1163, %v1183
      %v1186 = vshrl.u32 %v884, 16
      %v1188 = vrot.slane %v1186, 7
      %v1189 = vshll.u32 %v884, 16
      %v1191 = vor.u32 %v1188, %v1189
      %v1192 = vsel %vm1055, %v1169, %v1191
      %v1194 = vshrl.u32 %v984, 16
      %v1196 = vrot.slane %v1194, 7
      %v1197 = vshll.u32 %v984, 16
      %v1199 = vor.u32 %v1196, %v1197
      %v1200 = vsel %vm1055, %v1177, %v1199
      %v1201 = vrot.slane %v885, 7
      %v1202 = vor.u32 %v1201, %v881
      %v1203 = vsel %vm1055, %v1182, %v1202
      %v1205 = vshrl.u32 %v892, 16
      %v1207 = vrot.slane %v1205, 7
      %v1208 = vshll.u32 %v892, 16
      %v1210 = vor.u32 %v1207, %v1208
      %v1211 = vsel %vm1055, %v1188, %v1210
      %v1213 = vshrl.u32 %v986, 16
      %v1215 = vrot.slane %v1213, 7
      %v1216 = vshll.u32 %v986, 16
      %v1218 = vor.u32 %v1215, %v1216
      %v1219 = vsel %vm1055, %v1196, %v1218
      %v1220 = vrot.slane %v893, 7
      %v1221 = vor.u32 %v1220, %v889
      %v1222 = vsel %vm1055, %v1201, %v1221
      %v1224 = vshrl.u32 %v900, 16
      %v1226 = vrot.slane %v1224, 7
      %v1227 = vshll.u32 %v900, 16
      %v1229 = vor.u32 %v1226, %v1227
      %v1230 = vsel %vm1055, %v1207, %v1229
      %v1232 = vshrl.u32 %v988, 16
      %v1234 = vrot.slane %v1232, 7
      %v1235 = vshll.u32 %v988, 16
      %v1237 = vor.u32 %v1234, %v1235
      %v1238 = vsel %vm1055, %v1215, %v1237
      %v1239 = vrot.slane %v901, 7
      %v1240 = vor.u32 %v1239, %v897
      %v1241 = vsel %vm1055, %v1220, %v1240
      %v1243 = vshrl.u32 %v908, 16
      %v1245 = vrot.slane %v1243, 7
      %v1246 = vshll.u32 %v908, 16
      %v1248 = vor.u32 %v1245, %v1246
      %v1249 = vsel %vm1055, %v1226, %v1248
      %v1251 = vshrl.u32 %v990, 16
      %v1253 = vrot.slane %v1251, 7
      %v1254 = vshll.u32 %v990, 16
      %v1256 = vor.u32 %v1253, %v1254
      %v1257 = vsel %vm1055, %v1234, %v1256
      %v1258 = vrot.slane %v909, 7
      %v1259 = vor.u32 %v1258, %v905
      %v1260 = vsel %vm1055, %v1239, %v1259
      %v1262 = vshrl.u32 %v916, 16
      %v1264 = vrot.slane %v1262, 7
      %v1265 = vshll.u32 %v916, 16
      %v1267 = vor.u32 %v1264, %v1265
      %v1268 = vsel %vm1055, %v1245, %v1267
      %v1270 = vshrl.u32 %v992, 16
      %v1272 = vrot.slane %v1270, 7
      %v1273 = vshll.u32 %v992, 16
      %v1275 = vor.u32 %v1272, %v1273
      %v1276 = vsel %vm1055, %v1253, %v1275
      %v1277 = vrot.slane %v917, 7
      %v1278 = vor.u32 %v1277, %v913
      %v1279 = vsel %vm1055, %v1258, %v1278
      %v1281 = vshrl.u32 %v924, 16
      %v1283 = vrot.slane %v1281, 7
      %v1284 = vshll.u32 %v924, 16
      %v1286 = vor.u32 %v1283, %v1284
      %v1287 = vsel %vm1055, %v1264, %v1286
      %v1289 = vshrl.u32 %v994, 16
      %v1291 = vrot.slane %v1289, 7
      %v1292 = vshll.u32 %v994, 16
      %v1294 = vor.u32 %v1291, %v1292
      %v1295 = vsel %vm1055, %v1272, %v1294
      %v1296 = vrot.slane %v925, 7
      %v1297 = vor.u32 %v1296, %v921
      %v1298 = vsel %vm1055, %v1277, %v1297
      %v1300 = vshrl.u32 %v932, 16
      %v1302 = vrot.slane %v1300, 7
      %v1303 = vshll.u32 %v932, 16
      %v1305 = vor.u32 %v1302, %v1303
      %v1306 = vsel %vm1055, %v1283, %v1305
      %v1308 = vshrl.u32 %v996, 16
      %v1310 = vrot.slane %v1308, 7
      %v1311 = vshll.u32 %v996, 16
      %v1313 = vor.u32 %v1310, %v1311
      %v1314 = vsel %vm1055, %v1291, %v1313
      %v1315 = vrot.slane %v933, 7
      %v1316 = vor.u32 %v1315, %v929
      %v1317 = vsel %vm1055, %v1296, %v1316
      %v1319 = vshrl.u32 %v940, 16
      %v1321 = vrot.slane %v1319, 7
      %v1322 = vshll.u32 %v940, 16
      %v1324 = vor.u32 %v1321, %v1322
      %v1325 = vsel %vm1055, %v1302, %v1324
      %v1327 = vshrl.u32 %v998, 16
      %v1329 = vrot.slane %v1327, 7
      %v1330 = vshll.u32 %v998, 16
      %v1332 = vor.u32 %v1329, %v1330
      %v1333 = vsel %vm1055, %v1310, %v1332
      %v1334 = vrot.slane %v941, 7
      %v1335 = vor.u32 %v1334, %v937
      %v1336 = vsel %vm1055, %v1315, %v1335
      %v1338 = vshrl.u32 %v948, 16
      %v1340 = vrot.slane %v1338, 7
      %v1341 = vshll.u32 %v948, 16
      %v1343 = vor.u32 %v1340, %v1341
      %v1344 = vsel %vm1055, %v1321, %v1343
      %v1346 = vshrl.u32 %v1000, 16
      %v1348 = vrot.slane %v1346, 7
      %v1349 = vshll.u32 %v1000, 16
      %v1351 = vor.u32 %v1348, %v1349
      %v1352 = vsel %vm1055, %v1329, %v1351
      %v1353 = vrot.slane %v949, 7
      %v1354 = vor.u32 %v1353, %v945
      %v1355 = vsel %vm1055, %v1334, %v1354
      %v1357 = vshrl.u32 %v951, 16
      %v1359 = vrot.slane %v1357, 7
      %v1360 = vshll.u32 %v951, 16
      %v1362 = vor.u32 %v1359, %v1360
      %v1363 = vsel %vm1055, %v1340, %v1362
      %v1365 = vshrl.u32 %v1002, 16
      %v1367 = vrot.slane %v1365, 7
      %v1368 = vshll.u32 %v1002, 16
      %v1370 = vor.u32 %v1367, %v1368
      %v1371 = vsel %vm1055, %v1348, %v1370
      %v1468 = vunpack.c.l.b16 %v1003
      %v1469 = vunpack.c.l.b16 %v1004
      %v1470 = vunpack.c.l.b16 %v1005
      %v1471 = vunpack.c.l.b16 %v1006
      %v1472 = vunpack.c.l.b16 %v1007
      %v1473 = vunpack.c.l.b16 %v1008
      %v1474 = vunpack.c.l.b16 %v1009
      %v1475 = vunpack.c.l.b16 %v1010
      %v1476 = vunpack.c.l.b16 %v1011
      %v1477 = vunpack.c.l.b16 %v1012
      %v1478 = vunpack.c.l.b16 %v1013
      %v1479 = vunpack.c.l.b16 %v1014
      %v1480 = vunpack.c.l.b16 %v1015
      %v1481 = vunpack.c.l.b16 %v1016
      %v1482 = vunpack.c.l.b16 %v1017
      %v1483 = vunpack.c.l.b16 %v1018
      %v1484 = vunpack.c.l.b16 %v1019
      %v1485 = vunpack.c.l.b16 %v1020
      %v1486 = vunpack.c.l.b16 %v1021
      %v1487 = vunpack.c.l.b16 %v1022
      %v1488 = vunpack.c.l.b16 %v1023
      %v1489 = vunpack.c.l.b16 %v1024
      %v1490 = vunpack.c.l.b16 %v1025
      %v1491 = vunpack.c.l.b16 %v1026
      %v1492 = vunpack.c.l.b16 %v1027
      %v1493 = vunpack.c.l.b16 %v1028
      %v1494 = vunpack.c.l.b16 %v1029
      %v1495 = vunpack.c.l.b16 %v1030
      %v1496 = vunpack.c.l.b16 %v1031
      %v1497 = vunpack.c.l.b16 %v1032
      %v1498 = vunpack.c.l.b16 %v1033
      %v1499 = vunpack.c.l.b16 %v1034
      %v1500 = vunpack.c.l.b16 %v1035
      %v1501 = vunpack.c.l.b16 %v1036
      %v1502 = vunpack.c.l.b16 %v1037
      %v1503 = vunpack.c.l.b16 %v1038
      %v1504 = vunpack.c.l.b16 %v1039
      %v1505 = vunpack.c.l.b16 %v1040
      %v1506 = vunpack.c.l.b16 %v1041
      %v1507 = vunpack.c.l.b16 %v1042
      %v1508 = vunpack.c.l.b16 %v1043
      %v1509 = vunpack.c.l.b16 %v1044
      %v1510 = vunpack.c.l.b16 %v1045
      %v1511 = vunpack.c.l.b16 %v1046
      %v1512 = vunpack.c.l.b16 %v1047
      %v1513 = vunpack.c.l.b16 %v1048
      %v1514 = vunpack.c.l.b16 %v1049
      %v1515 = vunpack.c.l.b16 %v1050
      %v1516 = vpack.c.b16 %v1469, %v1468
      %v1517 = vpack.c.b16 %v1471, %v1470
      %v1518 = vpack.c.b16 %v1473, %v1472
      %v1519 = vpack.c.b16 %v1475, %v1474
      %v1520 = vpack.c.b16 %v1477, %v1476
      %v1521 = vpack.c.b16 %v1479, %v1478
      %v1522 = vpack.c.b16 %v1481, %v1480
      %v1523 = vpack.c.b16 %v1483, %v1482
      %v1524 = vpack.c.b16 %v1485, %v1484
      %v1525 = vpack.c.b16 %v1487, %v1486
      %v1526 = vpack.c.b16 %v1489, %v1488
      %v1527 = vpack.c.b16 %v1491, %v1490
      %v1528 = vpack.c.b16 %v1493, %v1492
      %v1529 = vpack.c.b16 %v1495, %v1494
      %v1530 = vpack.c.b16 %v1497, %v1496
      %v1531 = vpack.c.b16 %v1499, %v1498
      %v1532 = vpack.c.b16 %v1501, %v1500
      %v1533 = vpack.c.b16 %v1503, %v1502
      %v1534 = vpack.c.b16 %v1505, %v1504
      %v1535 = vpack.c.b16 %v1507, %v1506
      %v1536 = vpack.c.b16 %v1509, %v1508
      %v1537 = vpack.c.b16 %v1511, %v1510
      %v1538 = vpack.c.b16 %v1513, %v1512
      %v1539 = vpack.c.b16 %v1515, %v1514
      %1564 = vmatpush.bf16.msra.mxu0 %v1523
      %1565 = vmatpush.bf16.msra.mxu0 %v1522
      %1566 = vmatpush.bf16.msra.mxu0 %v1521
      %1567 = vmatpush.bf16.msra.mxu0 %v1520
      %1568 = vmatpush.bf16.msra.mxu0 %v1519
      %1569 = vmatpush.bf16.msra.mxu0 %v1518
      %1570 = vmatpush.bf16.msra.mxu0 %v1517
      %1571 = vmatpush.bf16.msra.mxu0 %v1516
      %1572 = vmatmul.bf16.gmra.mxu0 %v1062
      %v1573 = vpop.f32.mrf.mxu0
      %v1574 = vadd.f32 %v1053, %v1573
      %v1575 = vpop.f32.mrf.mxu0
      %v1576 = vadd.f32 %v1053, %v1575
      %1577 = vmatmul.bf16.gmra.mxu0 %v1089
      %v1578 = vpop.f32.mrf.mxu0
      %v1579 = vadd.f32 %v1053, %v1578
      %v1580 = vpop.f32.mrf.mxu0
      %v1581 = vadd.f32 %v1053, %v1580
      %1582 = vmatmul.bf16.gmra.mxu0 %v1108
      %v1583 = vpop.f32.mrf.mxu0
      %v1584 = vadd.f32 %v1053, %v1583
      %v1585 = vpop.f32.mrf.mxu0
      %v1586 = vadd.f32 %v1053, %v1585
      %1587 = vmatmul.bf16.gmra.mxu0 %v1127
      %v1588 = vpop.f32.mrf.mxu0
      %v1589 = vadd.f32 %v1053, %v1588
      %v1590 = vpop.f32.mrf.mxu0
      %v1591 = vadd.f32 %v1053, %v1590
      %1592 = vmatmul.bf16.gmra.mxu0 %v1146
      %v1593 = vpop.f32.mrf.mxu0
      %v1594 = vadd.f32 %v1053, %v1593
      %v1595 = vpop.f32.mrf.mxu0
      %v1596 = vadd.f32 %v1053, %v1595
      %1597 = vmatmul.bf16.gmra.mxu0 %v1165
      %v1598 = vpop.f32.mrf.mxu0
      %v1599 = vadd.f32 %v1053, %v1598
      %v1600 = vpop.f32.mrf.mxu0
      %v1601 = vadd.f32 %v1053, %v1600
      %1602 = vmatmul.bf16.gmra.mxu0 %v1184
      %v1603 = vpop.f32.mrf.mxu0
      %v1604 = vadd.f32 %v1053, %v1603
      %v1605 = vpop.f32.mrf.mxu0
      %v1606 = vadd.f32 %v1053, %v1605
      %1607 = vmatmul.bf16.gmra.mxu0 %v1203
      %v1608 = vpop.f32.mrf.mxu0
      %v1609 = vadd.f32 %v1053, %v1608
      %v1610 = vpop.f32.mrf.mxu0
      %v1611 = vadd.f32 %v1053, %v1610
      %1612 = vmatmul.bf16.gmra.mxu0 %v1222
      %v1613 = vpop.f32.mrf.mxu0
      %v1614 = vadd.f32 %v1053, %v1613
      %v1615 = vpop.f32.mrf.mxu0
      %v1616 = vadd.f32 %v1053, %v1615
      %1617 = vmatmul.bf16.gmra.mxu0 %v1241
      %v1618 = vpop.f32.mrf.mxu0
      %v1619 = vadd.f32 %v1053, %v1618
      %v1620 = vpop.f32.mrf.mxu0
      %v1621 = vadd.f32 %v1053, %v1620
      %1622 = vmatmul.bf16.gmra.mxu0 %v1260
      %v1623 = vpop.f32.mrf.mxu0
      %v1624 = vadd.f32 %v1053, %v1623
      %v1625 = vpop.f32.mrf.mxu0
      %v1626 = vadd.f32 %v1053, %v1625
      %1627 = vmatmul.bf16.gmra.mxu0 %v1279
      %v1628 = vpop.f32.mrf.mxu0
      %v1629 = vadd.f32 %v1053, %v1628
      %v1630 = vpop.f32.mrf.mxu0
      %v1631 = vadd.f32 %v1053, %v1630
      %1632 = vmatmul.bf16.gmra.mxu0 %v1298
      %v1633 = vpop.f32.mrf.mxu0
      %v1634 = vadd.f32 %v1053, %v1633
      %v1635 = vpop.f32.mrf.mxu0
      %v1636 = vadd.f32 %v1053, %v1635
      %1637 = vmatmul.bf16.gmra.mxu0 %v1317
      %v1638 = vpop.f32.mrf.mxu0
      %v1639 = vadd.f32 %v1053, %v1638
      %v1640 = vpop.f32.mrf.mxu0
      %v1641 = vadd.f32 %v1053, %v1640
      %1642 = vmatmul.bf16.gmra.mxu0 %v1336
      %v1643 = vpop.f32.mrf.mxu0
      %v1644 = vadd.f32 %v1053, %v1643
      %v1645 = vpop.f32.mrf.mxu0
      %v1646 = vadd.f32 %v1053, %v1645
      %1647 = vmatmul.bf16.gmra.mxu0 %v1355
      %v1648 = vpop.f32.mrf.mxu0
      %v1649 = vadd.f32 %v1053, %v1648
      %v1650 = vpop.f32.mrf.mxu0
      %v1651 = vadd.f32 %v1053, %v1650
      %1652 = vdwg.mxu0
      %1653 = vmatpush.bf16.msra.mxu0 %v1531
      %1654 = vmatpush.bf16.msra.mxu0 %v1530
      %1655 = vmatpush.bf16.msra.mxu0 %v1529
      %1656 = vmatpush.bf16.msra.mxu0 %v1528
      %1657 = vmatpush.bf16.msra.mxu0 %v1527
      %1658 = vmatpush.bf16.msra.mxu0 %v1526
      %1659 = vmatpush.bf16.msra.mxu0 %v1525
      %1660 = vmatpush.bf16.msra.mxu0 %v1524
      %1661 = vmatmul.bf16.gmra.mxu0 %v1074
      %v1662 = vpop.f32.mrf.mxu0
      %v1663 = vadd.f32 %v1574, %v1662
      %v1664 = vpop.f32.mrf.mxu0
      %v1665 = vadd.f32 %v1576, %v1664
      %1666 = vmatmul.bf16.gmra.mxu0 %v1097
      %v1667 = vpop.f32.mrf.mxu0
      %v1668 = vadd.f32 %v1579, %v1667
      %v1669 = vpop.f32.mrf.mxu0
      %v1670 = vadd.f32 %v1581, %v1669
      %1671 = vmatmul.bf16.gmra.mxu0 %v1116
      %v1672 = vpop.f32.mrf.mxu0
      %v1673 = vadd.f32 %v1584, %v1672
      %v1674 = vpop.f32.mrf.mxu0
      %v1675 = vadd.f32 %v1586, %v1674
      %1676 = vmatmul.bf16.gmra.mxu0 %v1135
      %v1677 = vpop.f32.mrf.mxu0
      %v1678 = vadd.f32 %v1589, %v1677
      %v1679 = vpop.f32.mrf.mxu0
      %v1680 = vadd.f32 %v1591, %v1679
      %1681 = vmatmul.bf16.gmra.mxu0 %v1154
      %v1682 = vpop.f32.mrf.mxu0
      %v1683 = vadd.f32 %v1594, %v1682
      %v1684 = vpop.f32.mrf.mxu0
      %v1685 = vadd.f32 %v1596, %v1684
      %1686 = vmatmul.bf16.gmra.mxu0 %v1173
      %v1687 = vpop.f32.mrf.mxu0
      %v1688 = vadd.f32 %v1599, %v1687
      %v1689 = vpop.f32.mrf.mxu0
      %v1690 = vadd.f32 %v1601, %v1689
      %1691 = vmatmul.bf16.gmra.mxu0 %v1192
      %v1692 = vpop.f32.mrf.mxu0
      %v1693 = vadd.f32 %v1604, %v1692
      %v1694 = vpop.f32.mrf.mxu0
      %v1695 = vadd.f32 %v1606, %v1694
      %1696 = vmatmul.bf16.gmra.mxu0 %v1211
      %v1697 = vpop.f32.mrf.mxu0
      %v1698 = vadd.f32 %v1609, %v1697
      %v1699 = vpop.f32.mrf.mxu0
      %v1700 = vadd.f32 %v1611, %v1699
      %1701 = vmatmul.bf16.gmra.mxu0 %v1230
      %v1702 = vpop.f32.mrf.mxu0
      %v1703 = vadd.f32 %v1614, %v1702
      %v1704 = vpop.f32.mrf.mxu0
      %v1705 = vadd.f32 %v1616, %v1704
      %1706 = vmatmul.bf16.gmra.mxu0 %v1249
      %v1707 = vpop.f32.mrf.mxu0
      %v1708 = vadd.f32 %v1619, %v1707
      %v1709 = vpop.f32.mrf.mxu0
      %v1710 = vadd.f32 %v1621, %v1709
      %1711 = vmatmul.bf16.gmra.mxu0 %v1268
      %v1712 = vpop.f32.mrf.mxu0
      %v1713 = vadd.f32 %v1624, %v1712
      %v1714 = vpop.f32.mrf.mxu0
      %v1715 = vadd.f32 %v1626, %v1714
      %1716 = vmatmul.bf16.gmra.mxu0 %v1287
      %v1717 = vpop.f32.mrf.mxu0
      %v1718 = vadd.f32 %v1629, %v1717
      %v1719 = vpop.f32.mrf.mxu0
      %v1720 = vadd.f32 %v1631, %v1719
      %1721 = vmatmul.bf16.gmra.mxu0 %v1306
      %v1722 = vpop.f32.mrf.mxu0
      %v1723 = vadd.f32 %v1634, %v1722
      %v1724 = vpop.f32.mrf.mxu0
      %v1725 = vadd.f32 %v1636, %v1724
      %1726 = vmatmul.bf16.gmra.mxu0 %v1325
      %v1727 = vpop.f32.mrf.mxu0
      %v1728 = vadd.f32 %v1639, %v1727
      %v1729 = vpop.f32.mrf.mxu0
      %v1730 = vadd.f32 %v1641, %v1729
      %1731 = vmatmul.bf16.gmra.mxu0 %v1344
      %v1732 = vpop.f32.mrf.mxu0
      %v1733 = vadd.f32 %v1644, %v1732
      %v1734 = vpop.f32.mrf.mxu0
      %v1735 = vadd.f32 %v1646, %v1734
      %1736 = vmatmul.bf16.gmra.mxu0 %v1363
      %v1737 = vpop.f32.mrf.mxu0
      %v1738 = vadd.f32 %v1649, %v1737
      %v1739 = vpop.f32.mrf.mxu0
      %v1740 = vadd.f32 %v1651, %v1739
      %1741 = vdwg.mxu0
      %1742 = vmatpush.bf16.msra.mxu0 %v1539
      %1743 = vmatpush.bf16.msra.mxu0 %v1538
      %1744 = vmatpush.bf16.msra.mxu0 %v1537
      %1745 = vmatpush.bf16.msra.mxu0 %v1536
      %1746 = vmatpush.bf16.msra.mxu0 %v1535
      %1747 = vmatpush.bf16.msra.mxu0 %v1534
      %1748 = vmatpush.bf16.msra.mxu0 %v1533
      %1749 = vmatpush.bf16.msra.mxu0 %v1532
      %1750 = vmatmul.bf16.gmra.mxu0 %v1086
      %v1751 = vpop.f32.mrf.mxu0
      %v1752 = vadd.f32 %v1663, %v1751
      %v1753 = vpop.f32.mrf.mxu0
      %v1754 = vadd.f32 %v1665, %v1753
      %1755 = vmatmul.bf16.gmra.mxu0 %v1105
      %v1756 = vpop.f32.mrf.mxu0
      %v1757 = vadd.f32 %v1668, %v1756
      %v1758 = vpop.f32.mrf.mxu0
      %v1759 = vadd.f32 %v1670, %v1758
      %1760 = vmatmul.bf16.gmra.mxu0 %v1124
      %v1761 = vpop.f32.mrf.mxu0
      %v1762 = vadd.f32 %v1673, %v1761
      %v1763 = vpop.f32.mrf.mxu0
      %v1764 = vadd.f32 %v1675, %v1763
      %1765 = vmatmul.bf16.gmra.mxu0 %v1143
      %v1766 = vpop.f32.mrf.mxu0
      %v1767 = vadd.f32 %v1678, %v1766
      %v1768 = vpop.f32.mrf.mxu0
      %v1769 = vadd.f32 %v1680, %v1768
      %1770 = vmatmul.bf16.gmra.mxu0 %v1162
      %v1771 = vpop.f32.mrf.mxu0
      %v1772 = vadd.f32 %v1683, %v1771
      %v1773 = vpop.f32.mrf.mxu0
      %v1774 = vadd.f32 %v1685, %v1773
      %1775 = vmatmul.bf16.gmra.mxu0 %v1181
      %v1776 = vpop.f32.mrf.mxu0
      %v1777 = vadd.f32 %v1688, %v1776
      %v1778 = vpop.f32.mrf.mxu0
      %v1779 = vadd.f32 %v1690, %v1778
      %1780 = vmatmul.bf16.gmra.mxu0 %v1200
      %v1781 = vpop.f32.mrf.mxu0
      %v1782 = vadd.f32 %v1693, %v1781
      %v1783 = vpop.f32.mrf.mxu0
      %v1784 = vadd.f32 %v1695, %v1783
      %1785 = vmatmul.bf16.gmra.mxu0 %v1219
      %v1786 = vpop.f32.mrf.mxu0
      %v1787 = vadd.f32 %v1698, %v1786
      %v1788 = vpop.f32.mrf.mxu0
      %v1789 = vadd.f32 %v1700, %v1788
      %1790 = vmatmul.bf16.gmra.mxu0 %v1238
      %v1791 = vpop.f32.mrf.mxu0
      %v1792 = vadd.f32 %v1703, %v1791
      %v1793 = vpop.f32.mrf.mxu0
      %v1794 = vadd.f32 %v1705, %v1793
      %1795 = vmatmul.bf16.gmra.mxu0 %v1257
      %v1796 = vpop.f32.mrf.mxu0
      %v1797 = vadd.f32 %v1708, %v1796
      %v1798 = vpop.f32.mrf.mxu0
      %v1799 = vadd.f32 %v1710, %v1798
      %1800 = vmatmul.bf16.gmra.mxu0 %v1276
      %v1801 = vpop.f32.mrf.mxu0
      %v1802 = vadd.f32 %v1713, %v1801
      %v1803 = vpop.f32.mrf.mxu0
      %v1804 = vadd.f32 %v1715, %v1803
      %1805 = vmatmul.bf16.gmra.mxu0 %v1295
      %v1806 = vpop.f32.mrf.mxu0
      %v1807 = vadd.f32 %v1718, %v1806
      %v1808 = vpop.f32.mrf.mxu0
      %v1809 = vadd.f32 %v1720, %v1808
      %1810 = vmatmul.bf16.gmra.mxu0 %v1314
      %v1811 = vpop.f32.mrf.mxu0
      %v1812 = vadd.f32 %v1723, %v1811
      %v1813 = vpop.f32.mrf.mxu0
      %v1814 = vadd.f32 %v1725, %v1813
      %1815 = vmatmul.bf16.gmra.mxu0 %v1333
      %v1816 = vpop.f32.mrf.mxu0
      %v1817 = vadd.f32 %v1728, %v1816
      %v1818 = vpop.f32.mrf.mxu0
      %v1819 = vadd.f32 %v1730, %v1818
      %1820 = vmatmul.bf16.gmra.mxu0 %v1352
      %v1821 = vpop.f32.mrf.mxu0
      %v1822 = vadd.f32 %v1733, %v1821
      %v1823 = vpop.f32.mrf.mxu0
      %v1824 = vadd.f32 %v1735, %v1823
      %1825 = vmatmul.bf16.gmra.mxu0 %v1371
      %v1826 = vpop.f32.mrf.mxu0
      %v1827 = vadd.f32 %v1738, %v1826
      %v1828 = vpop.f32.mrf.mxu0
      %v1829 = vadd.f32 %v1740, %v1828
      %1830 = vdwg.mxu0
      %v1831 = vunpack.c.l.bf16 %v392
      %v1832 = vunpack.c.l.bf16 %v393
      %v1833 = vunpack.c.l.bf16 %v394
      %v1834 = vunpack.c.l.bf16 %v395
      %v1835 = vunpack.c.l.bf16 %v396
      %v1836 = vunpack.c.l.bf16 %v397
      %v1837 = vunpack.c.l.bf16 %v398
      %v1838 = vunpack.c.l.bf16 %v399
      %v1839 = vunpack.c.l.bf16 %v400
      %v1840 = vunpack.c.l.bf16 %v401
      %v1841 = vunpack.c.l.bf16 %v402
      %v1842 = vunpack.c.l.bf16 %v403
      %v1843 = vunpack.c.l.bf16 %v404
      %v1844 = vunpack.c.l.bf16 %v405
      %v1845 = vunpack.c.l.bf16 %v406
      %v1846 = vunpack.c.l.bf16 %v407
      %v1847 = vunpack.c.l.bf16 %v408
      %v1848 = vunpack.c.l.bf16 %v409
      %v1849 = vunpack.c.l.bf16 %v410
      %v1850 = vunpack.c.l.bf16 %v411
      %v1851 = vunpack.c.l.bf16 %v412
      %v1852 = vunpack.c.l.bf16 %v413
      %v1853 = vunpack.c.l.bf16 %v414
      %v1854 = vunpack.c.l.bf16 %v415
      %v1855 = vunpack.c.l.bf16 %v416
      %v1856 = vunpack.c.l.bf16 %v417
      %v1857 = vunpack.c.l.bf16 %v418
      %v1858 = vunpack.c.l.bf16 %v419
      %v1859 = vunpack.c.l.bf16 %v420
      %v1860 = vunpack.c.l.bf16 %v421
      %v1861 = vunpack.c.l.bf16 %v422
      %v1862 = vunpack.c.l.bf16 %v423
      %v1863 = vadd.f32 %v1752, %v1831
      %v1864 = vadd.f32 %v1754, %v1832
      %v1865 = vadd.f32 %v1757, %v1833
      %v1866 = vadd.f32 %v1759, %v1834
      %v1867 = vadd.f32 %v1762, %v1835
      %v1868 = vadd.f32 %v1764, %v1836
      %v1869 = vadd.f32 %v1767, %v1837
      %v1870 = vadd.f32 %v1769, %v1838
      %v1871 = vadd.f32 %v1772, %v1839
      %v1872 = vadd.f32 %v1774, %v1840
      %v1873 = vadd.f32 %v1777, %v1841
      %v1874 = vadd.f32 %v1779, %v1842
      %v1875 = vadd.f32 %v1782, %v1843
      %v1876 = vadd.f32 %v1784, %v1844
      %v1877 = vadd.f32 %v1787, %v1845
      %v1878 = vadd.f32 %v1789, %v1846
      %v1879 = vadd.f32 %v1792, %v1847
      %v1880 = vadd.f32 %v1794, %v1848
      %v1881 = vadd.f32 %v1797, %v1849
      %v1882 = vadd.f32 %v1799, %v1850
      %v1883 = vadd.f32 %v1802, %v1851
      %v1884 = vadd.f32 %v1804, %v1852
      %v1885 = vadd.f32 %v1807, %v1853
      %v1886 = vadd.f32 %v1809, %v1854
      %v1887 = vadd.f32 %v1812, %v1855
      %v1888 = vadd.f32 %v1814, %v1856
      %v1889 = vadd.f32 %v1817, %v1857
      %v1890 = vadd.f32 %v1819, %v1858
      %v1891 = vadd.f32 %v1822, %v1859
      %v1892 = vadd.f32 %v1824, %v1860
      %v1893 = vadd.f32 %v1827, %v1861
      %v1894 = vadd.f32 %v1829, %v1862
      %v1895 = vlaneseq
      %v1896 = vshrl.u32 %v1895, 7
      %v1897 = vadd.s32 %v1896, 8
      %v1898 = vadd.s32 %v1896, 16
      %v1899 = vadd.s32 %v1896, 24
      %v1900 = vadd.s32 %v1896, 32
      %v1901 = vadd.s32 %v1896, 40
      %v1902 = vadd.s32 %v1896, 48
      %v1903 = vadd.s32 %v1896, 56
      %v1904 = vadd.s32 %v1896, 64
      %v1905 = vadd.s32 %v1896, 72
      %v1906 = vadd.s32 %v1896, 80
      %v1907 = vadd.s32 %v1896, 88
      %v1908 = vadd.s32 %v1896, 96
      %v1909 = vadd.s32 %v1896, 104
      %v1910 = vadd.s32 %v1896, 112
      %v1911 = vadd.s32 %v1896, 120
      %v1912 = vadd.s32 %v1896, 128
      %v1913 = vadd.s32 %v1896, 136
      %v1914 = vadd.s32 %v1896, 144
      %v1915 = vadd.s32 %v1896, 152
      %v1916 = vadd.s32 %v1896, 160
      %v1917 = vadd.s32 %v1896, 168
      %v1918 = vadd.s32 %v1896, 176
      %v1919 = vadd.s32 %v1896, 184
      %v1920 = vadd.s32 %v1896, 192
      %v1921 = vadd.s32 %v1896, 200
      %v1922 = vadd.s32 %v1896, 208
      %v1923 = vadd.s32 %v1896, 216
      %v1924 = vadd.s32 %v1896, 224
      %v1925 = vadd.s32 %v1896, 232
      %v1926 = vadd.s32 %v1896, 240
      %v1927 = vadd.s32 %v1896, 248
      %s1928 = smul.u32 %s21, 256
      %v1929 = vstv %s1928
      %v1930 = vadd.s32 %v1896, %v1929
      %v1931 = vadd.s32 %v1897, %v1929
      %v1932 = vadd.s32 %v1898, %v1929
      %v1933 = vadd.s32 %v1899, %v1929
      %v1934 = vadd.s32 %v1900, %v1929
      %v1935 = vadd.s32 %v1901, %v1929
      %v1936 = vadd.s32 %v1902, %v1929
      %v1937 = vadd.s32 %v1903, %v1929
      %v1938 = vadd.s32 %v1904, %v1929
      %v1939 = vadd.s32 %v1905, %v1929
      %v1940 = vadd.s32 %v1906, %v1929
      %v1941 = vadd.s32 %v1907, %v1929
      %v1942 = vadd.s32 %v1908, %v1929
      %v1943 = vadd.s32 %v1909, %v1929
      %v1944 = vadd.s32 %v1910, %v1929
      %v1945 = vadd.s32 %v1911, %v1929
      %v1946 = vadd.s32 %v1912, %v1929
      %v1947 = vadd.s32 %v1913, %v1929
      %v1948 = vadd.s32 %v1914, %v1929
      %v1949 = vadd.s32 %v1915, %v1929
      %v1950 = vadd.s32 %v1916, %v1929
      %v1951 = vadd.s32 %v1917, %v1929
      %v1952 = vadd.s32 %v1918, %v1929
      %v1953 = vadd.s32 %v1919, %v1929
      %v1954 = vadd.s32 %v1920, %v1929
      %v1955 = vadd.s32 %v1921, %v1929
      %v1956 = vadd.s32 %v1922, %v1929
      %v1957 = vadd.s32 %v1923, %v1929
      %v1958 = vadd.s32 %v1924, %v1929
      %v1959 = vadd.s32 %v1925, %v1929
      %v1960 = vadd.s32 %v1926, %v1929
      %v1961 = vadd.s32 %v1927, %v1929
      %vm1962 = vcmp.ge.s32.totalorder %v1930, 16
      %vm1963 = vcmp.ge.s32.totalorder %v1931, 16
      %vm1964 = vcmp.ge.s32.totalorder %v1932, 16
      %vm1965 = vcmp.ge.s32.totalorder %v1933, 16
      %vm1966 = vcmp.ge.s32.totalorder %v1934, 16
      %vm1967 = vcmp.ge.s32.totalorder %v1935, 16
      %vm1968 = vcmp.ge.s32.totalorder %v1936, 16
      %vm1969 = vcmp.ge.s32.totalorder %v1937, 16
      %vm1970 = vcmp.ge.s32.totalorder %v1938, 16
      %vm1971 = vcmp.ge.s32.totalorder %v1939, 16
      %vm1972 = vcmp.ge.s32.totalorder %v1940, 16
      %vm1973 = vcmp.ge.s32.totalorder %v1941, 16
      %vm1974 = vcmp.ge.s32.totalorder %v1942, 16
      %vm1975 = vcmp.ge.s32.totalorder %v1943, 16
      %vm1976 = vcmp.ge.s32.totalorder %v1944, 16
      %vm1977 = vcmp.ge.s32.totalorder %v1945, 16
      %vm1978 = vcmp.ge.s32.totalorder %v1946, 16
      %vm1979 = vcmp.ge.s32.totalorder %v1947, 16
      %vm1980 = vcmp.ge.s32.totalorder %v1948, 16
      %vm1981 = vcmp.ge.s32.totalorder %v1949, 16
      %vm1982 = vcmp.ge.s32.totalorder %v1950, 16
      %vm1983 = vcmp.ge.s32.totalorder %v1951, 16
      %vm1984 = vcmp.ge.s32.totalorder %v1952, 16
      %vm1985 = vcmp.ge.s32.totalorder %v1953, 16
      %vm1986 = vcmp.ge.s32.totalorder %v1954, 16
      %vm1987 = vcmp.ge.s32.totalorder %v1955, 16
      %vm1988 = vcmp.ge.s32.totalorder %v1956, 16
      %vm1989 = vcmp.ge.s32.totalorder %v1957, 16
      %vm1990 = vcmp.ge.s32.totalorder %v1958, 16
      %vm1991 = vcmp.ge.s32.totalorder %v1959, 16
      %vm1992 = vcmp.ge.s32.totalorder %v1960, 16
      %vm1993 = vcmp.ge.s32.totalorder %v1961, 16
      %vm1994 = vcmp.lt.s32.totalorder %v1930, 216
      %vm1995 = vcmp.lt.s32.totalorder %v1931, 216
      %vm1996 = vcmp.lt.s32.totalorder %v1932, 216
      %vm1997 = vcmp.lt.s32.totalorder %v1933, 216
      %vm1998 = vcmp.lt.s32.totalorder %v1934, 216
      %vm1999 = vcmp.lt.s32.totalorder %v1935, 216
      %vm2000 = vcmp.lt.s32.totalorder %v1936, 216
      %vm2001 = vcmp.lt.s32.totalorder %v1937, 216
      %vm2002 = vcmp.lt.s32.totalorder %v1938, 216
      %vm2003 = vcmp.lt.s32.totalorder %v1939, 216
      %vm2004 = vcmp.lt.s32.totalorder %v1940, 216
      %vm2005 = vcmp.lt.s32.totalorder %v1941, 216
      %vm2006 = vcmp.lt.s32.totalorder %v1942, 216
      %vm2007 = vcmp.lt.s32.totalorder %v1943, 216
      %vm2008 = vcmp.lt.s32.totalorder %v1944, 216
      %vm2009 = vcmp.lt.s32.totalorder %v1945, 216
      %vm2010 = vcmp.lt.s32.totalorder %v1946, 216
      %vm2011 = vcmp.lt.s32.totalorder %v1947, 216
      %vm2012 = vcmp.lt.s32.totalorder %v1948, 216
      %vm2013 = vcmp.lt.s32.totalorder %v1949, 216
      %vm2014 = vcmp.lt.s32.totalorder %v1950, 216
      %vm2015 = vcmp.lt.s32.totalorder %v1951, 216
      %vm2016 = vcmp.lt.s32.totalorder %v1952, 216
      %vm2017 = vcmp.lt.s32.totalorder %v1953, 216
      %vm2018 = vcmp.lt.s32.totalorder %v1954, 216
      %vm2019 = vcmp.lt.s32.totalorder %v1955, 216
      %vm2020 = vcmp.lt.s32.totalorder %v1956, 216
      %vm2021 = vcmp.lt.s32.totalorder %v1957, 216
      %vm2022 = vcmp.lt.s32.totalorder %v1958, 216
      %vm2023 = vcmp.lt.s32.totalorder %v1959, 216
      %vm2024 = vcmp.lt.s32.totalorder %v1960, 216
      %vm2025 = vcmp.lt.s32.totalorder %v1961, 216
      %vm2026 = vmand %vm1962, %vm1994
      %vm2027 = vmand %vm1963, %vm1995
      %vm2028 = vmand %vm1964, %vm1996
      %vm2029 = vmand %vm1965, %vm1997
      %vm2030 = vmand %vm1966, %vm1998
      %vm2031 = vmand %vm1967, %vm1999
      %vm2032 = vmand %vm1968, %vm2000
      %vm2033 = vmand %vm1969, %vm2001
      %vm2034 = vmand %vm1970, %vm2002
      %vm2035 = vmand %vm1971, %vm2003
      %vm2036 = vmand %vm1972, %vm2004
      %vm2037 = vmand %vm1973, %vm2005
      %vm2038 = vmand %vm1974, %vm2006
      %vm2039 = vmand %vm1975, %vm2007
      %vm2040 = vmand %vm1976, %vm2008
      %vm2041 = vmand %vm1977, %vm2009
      %vm2042 = vmand %vm1978, %vm2010
      %vm2043 = vmand %vm1979, %vm2011
      %vm2044 = vmand %vm1980, %vm2012
      %vm2045 = vmand %vm1981, %vm2013
      %vm2046 = vmand %vm1982, %vm2014
      %vm2047 = vmand %vm1983, %vm2015
      %vm2048 = vmand %vm1984, %vm2016
      %vm2049 = vmand %vm1985, %vm2017
      %vm2050 = vmand %vm1986, %vm2018
      %vm2051 = vmand %vm1987, %vm2019
      %vm2052 = vmand %vm1988, %vm2020
      %vm2053 = vmand %vm1989, %vm2021
      %vm2054 = vmand %vm1990, %vm2022
      %vm2055 = vmand %vm1991, %vm2023
      %vm2056 = vmand %vm1992, %vm2024
      %vm2057 = vmand %vm1993, %vm2025
      %v2058 = vsel %vm2026, %v1863, 0.0
      %v2059 = vsel %vm2027, %v1864, 0.0
      %v2060 = vsel %vm2028, %v1865, 0.0
      %v2061 = vsel %vm2029, %v1866, 0.0
      %v2062 = vsel %vm2030, %v1867, 0.0
      %v2063 = vsel %vm2031, %v1868, 0.0
      %v2064 = vsel %vm2032, %v1869, 0.0
      %v2065 = vsel %vm2033, %v1870, 0.0
      %v2066 = vsel %vm2034, %v1871, 0.0
      %v2067 = vsel %vm2035, %v1872, 0.0
      %v2068 = vsel %vm2036, %v1873, 0.0
      %v2069 = vsel %vm2037, %v1874, 0.0
      %v2070 = vsel %vm2038, %v1875, 0.0
      %v2071 = vsel %vm2039, %v1876, 0.0
      %v2072 = vsel %vm2040, %v1877, 0.0
      %v2073 = vsel %vm2041, %v1878, 0.0
      %v2074 = vsel %vm2042, %v1879, 0.0
      %v2075 = vsel %vm2043, %v1880, 0.0
      %v2076 = vsel %vm2044, %v1881, 0.0
      %v2077 = vsel %vm2045, %v1882, 0.0
      %v2078 = vsel %vm2046, %v1883, 0.0
      %v2079 = vsel %vm2047, %v1884, 0.0
      %v2080 = vsel %vm2048, %v1885, 0.0
      %v2081 = vsel %vm2049, %v1886, 0.0
      %v2082 = vsel %vm2050, %v1887, 0.0
      %v2083 = vsel %vm2051, %v1888, 0.0
      %v2084 = vsel %vm2052, %v1889, 0.0
      %v2085 = vsel %vm2053, %v1890, 0.0
      %v2086 = vsel %vm2054, %v1891, 0.0
      %v2087 = vsel %vm2055, %v1892, 0.0
      %v2088 = vsel %vm2056, %v1893, 0.0
      %v2089 = vsel %vm2057, %v1894, 0.0
      %v2090 = vpack.c.bf16 %v2058, %v2058
      %v2091 = vpack.c.bf16 %v2059, %v2059
      %v2092 = vpack.c.bf16 %v2060, %v2060
      %v2093 = vpack.c.bf16 %v2061, %v2061
      %v2094 = vpack.c.bf16 %v2062, %v2062
      %v2095 = vpack.c.bf16 %v2063, %v2063
      %v2096 = vpack.c.bf16 %v2064, %v2064
      %v2097 = vpack.c.bf16 %v2065, %v2065
      %v2098 = vpack.c.bf16 %v2066, %v2066
      %v2099 = vpack.c.bf16 %v2067, %v2067
      %v2100 = vpack.c.bf16 %v2068, %v2068
      %v2101 = vpack.c.bf16 %v2069, %v2069
      %v2102 = vpack.c.bf16 %v2070, %v2070
      %v2103 = vpack.c.bf16 %v2071, %v2071
      %v2104 = vpack.c.bf16 %v2072, %v2072
      %v2105 = vpack.c.bf16 %v2073, %v2073
      %v2106 = vpack.c.bf16 %v2074, %v2074
      %v2107 = vpack.c.bf16 %v2075, %v2075
      %v2108 = vpack.c.bf16 %v2076, %v2076
      %v2109 = vpack.c.bf16 %v2077, %v2077
      %v2110 = vpack.c.bf16 %v2078, %v2078
      %v2111 = vpack.c.bf16 %v2079, %v2079
      %v2112 = vpack.c.bf16 %v2080, %v2080
      %v2113 = vpack.c.bf16 %v2081, %v2081
      %v2114 = vpack.c.bf16 %v2082, %v2082
      %v2115 = vpack.c.bf16 %v2083, %v2083
      %v2116 = vpack.c.bf16 %v2084, %v2084
      %v2117 = vpack.c.bf16 %v2085, %v2085
      %v2118 = vpack.c.bf16 %v2086, %v2086
      %v2119 = vpack.c.bf16 %v2087, %v2087
      %v2120 = vpack.c.bf16 %v2088, %v2088
      %v2121 = vpack.c.bf16 %v2089, %v2089
      %2122 = vst [vmem:[%s390] sm:$0xf] %v2090
      %2123 = vst [vmem:[%s390 + $0x4] sm:$0xf] %v2091
      %2124 = vst [vmem:[%s390 + $0x8] sm:$0xf] %v2092
      %2125 = vst [vmem:[%s390 + $0xc] sm:$0xf] %v2093
      %2126 = vst [vmem:[%s390 + $0x10] sm:$0xf] %v2094
      %2127 = vst [vmem:[%s390 + $0x14] sm:$0xf] %v2095
      %2128 = vst [vmem:[%s390 + $0x18] sm:$0xf] %v2096
      %2129 = vst [vmem:[%s390 + $0x1c] sm:$0xf] %v2097
      %2130 = vst [vmem:[%s390 + $0x20] sm:$0xf] %v2098
      %2131 = vst [vmem:[%s390 + $0x24] sm:$0xf] %v2099
      %2132 = vst [vmem:[%s390 + $0x28] sm:$0xf] %v2100
      %2133 = vst [vmem:[%s390 + $0x2c] sm:$0xf] %v2101
      %2134 = vst [vmem:[%s390 + $0x30] sm:$0xf] %v2102
      %2135 = vst [vmem:[%s390 + $0x34] sm:$0xf] %v2103
      %2136 = vst [vmem:[%s390 + $0x38] sm:$0xf] %v2104
      %2137 = vst [vmem:[%s390 + $0x3c] sm:$0xf] %v2105
      %2138 = vst [vmem:[%s390 + $0x40] sm:$0xf] %v2106
      %2139 = vst [vmem:[%s390 + $0x44] sm:$0xf] %v2107
      %2140 = vst [vmem:[%s390 + $0x48] sm:$0xf] %v2108
      %2141 = vst [vmem:[%s390 + $0x4c] sm:$0xf] %v2109
      %2142 = vst [vmem:[%s390 + $0x50] sm:$0xf] %v2110
      %2143 = vst [vmem:[%s390 + $0x54] sm:$0xf] %v2111
      %2144 = vst [vmem:[%s390 + $0x58] sm:$0xf] %v2112
      %2145 = vst [vmem:[%s390 + $0x5c] sm:$0xf] %v2113
      %2146 = vst [vmem:[%s390 + $0x60] sm:$0xf] %v2114
      %2147 = vst [vmem:[%s390 + $0x64] sm:$0xf] %v2115
      %2148 = vst [vmem:[%s390 + $0x68] sm:$0xf] %v2116
      %2149 = vst [vmem:[%s390 + $0x6c] sm:$0xf] %v2117
      %2150 = vst [vmem:[%s390 + $0x70] sm:$0xf] %v2118
      %2151 = vst [vmem:[%s390 + $0x74] sm:$0xf] %v2119
      %2152 = vst [vmem:[%s390 + $0x78] sm:$0xf] %v2120
      %2153 = vst [vmem:[%s390 + $0x7c] sm:$0xf] %v2121
      %s2154 = smul.u32 32, %s21
      %p2155 = scmp.lt.s32.totalorder %s20, 1
      %s2156 = scalar_select %p2155, %s20, 1
      %p2157 = scmp.lt.s32.totalorder %s2154, 31
      %s2158 = scalar_select %p2157, %s2154, 31
      %s2159 = smul.addr %s2156, 32
      %s2160 = sadd.s32 %s2158, %s2159
      %s2161 = smul.addr %s2160, 4
      %s2162 = scalar_lea.vmem %s5, %s2161
      // Predicated region
      $region41: #{res_block2_forward.2} parent=39 // pred_check
        %p2163 = pneg %p190
      $region42: #{res_block2_forward.2} parent=39 // pred_check_branch
        %2165 = sbr.rel (%p2163) target = $region44
      $region43: #{res_block2_forward.2} parent=39 // pred_region
        %s2166 = smul.u32 32, %s21
      $region44: #{res_block2_forward.2} parent=39 // pred_fallthru
        _
    $region40: #{res_block2_forward.2} parent=5 // pred_fallthru
      _
    %p2167 = scmp.le.s32.totalorder 2, %s11
    // Predicated region
    $region45: #{res_block2_forward.2} parent=5 // pred_check
      %p2168 = pneg %p2167
    $region46: #{res_block2_forward.2} parent=5 // pred_check_branch
      %2170 = sbr.rel (%p2168) target = $region48
    $region47: #{res_block2_forward.2} parent=5 // pred_region
      %s2171 = ssub.s32 %s11, 2
      // Predicated region
      $region49: #{res_block2_forward.2} parent=47 // pred_check
        %p2172 = pneg %p196
      $region50: #{res_block2_forward.2} parent=47 // pred_check_branch
        %2174 = sbr.rel (%p2172) target = $region52
      $region51: #{res_block2_forward.2} parent=47 // pred_region
        %s2175 = smul.u32 32, %s23
        %p2176 = scmp.lt.s32.totalorder %s22, 1
        %s2177 = scalar_select %p2176, %s22, 1
        %p2178 = scmp.lt.s32.totalorder %s2175, 31
        %s2179 = scalar_select %p2178, %s2175, 31
        %s2180 = smul.addr %s2177, 32
        %s2181 = sadd.s32 %s2179, %s2180
        %s2182 = smul.addr %s2181, 4
        %s2183 = scalar_lea.vmem %s5, %s2182
      $region52: #{res_block2_forward.2} parent=47 // pred_fallthru
        _
    $region48: #{res_block2_forward.2} parent=5 // pred_fallthru
      _
  $region6: #{res_block2_forward.2} parent=0 // loop_footer
    %s15 = sadd.s32 1, %s11
  $region7: #{res_block2_forward.2} parent=0 // loop_footer_branch
    %10 = sbr.rel target = $region3
  $region8: #{res_block2_forward.2} parent=0 // loop_exit
    _

// kernel: res_block2_forward.3
$region0: #{res_block2_forward.3}
  #allocation0 [shape = 'u32[]', space=smem, size = 0x4, offset = 0x4, fixed_abs, tag = 'smem constant byte address 0x4 - core index']
  #allocation1 [shape = 'u32[72,128]{1,0:T(1,128)}', space=vmem, size = 0x9000, scoped, tag = 'internal scratch']
  %s0 = inlined_call_operand.vmem [shape: bf16[2,256,128], index: 0, kind: input, shape index: {}, may-alias: {0,1,2}]
  %s1 = inlined_call_operand.vmem [shape: bf16[2,256,128], index: 1, kind: input, shape index: {}, may-alias: {0,1,2}]
  %s2 = inlined_call_operand.vmem [shape: bf16[2,256,128], index: 2, kind: input, shape index: {}, may-alias: {0,1,2}]
  %s3 = inlined_call_operand.vmem [shape: bf16[384,128], index: 3, kind: input, shape index: {}]
  %s4 = inlined_call_operand.vmem [shape: f32[1,128], index: 4, kind: input, shape index: {}]
  %s5 = inlined_call_operand.vmem [shape: bf16[2,256,128], index: 5, kind: output, shape index: {}]
  %s6 = sld [smem:[#allocation0]]
  $region53: #{res_block2_forward.3} parent=0
    _
  %s8 = ssub.s32 1, %s6
  %s9 = scalar_select 0, %s8, %s6
  loop: start=0, step=1, limit=4
  $region2: #{res_block2_forward.3} parent=0 // loop_pre_header
    _
  $region3: #{res_block2_forward.3} parent=0 // loop_header
    %s11 = sphi 0, %s15
    %p12 = scmp.ge.s32.totalorder %s11, 4
    %s18 = sphi 0, %s30
    %s19 = sphi 0, %s26
    %s20 = sphi 0, %s18
    %s21 = sphi 0, %s19
    %s22 = sphi 0, %s20
    %s23 = sphi 0, %s21
    %s43 = sphi 0, %s45
    %s46 = sphi 0, %s43
    %s47 = sphi 0, %s46
    %s63 = sphi 0, %s47
    %s71 = sphi 0, %s73
    %s74 = sphi 0, %s71
    %s75 = sphi 0, %s74
    %s91 = sphi 0, %s75
    %s107 = sphi 0, %s109
    %s110 = sphi 0, %s107
    %s111 = sphi 0, %s110
    %s127 = sphi 0, %s111
    %s131 = sphi 0, %s131
    %s133 = sphi 0, %s131
    %s134 = sphi 0, %s133
    %s148 = sphi 0, %s134
    %s152 = sphi 0, %s152
    %s154 = sphi 0, %s152
    %s155 = sphi 0, %s154
    %s169 = sphi 0, %s155
    %s177 = sphi 0, %s179
    %s180 = sphi 0, %s177
    %s181 = sphi 0, %s180
    %s197 = sphi 0, %s181
  $region4: #{res_block2_forward.3} parent=0 // loop_header_branch
    %14 = sbr.rel (%p12) target = $region8
  $region5: #{res_block2_forward.3} parent=0 // loop_body
    %s16 = ssub.s32 %s11, 1
    %s17 = ssub.s32 %s11, 2
    %s24 = sadd.s32 1, %s19
    %p25 = scmp.ge.s32.totalorder %s24, 1
    %s26 = scalar_select %p25, 0, %s24
    %s27 = sadd.s32 1, %s18
    %s28 = scalar_select %p25, %s27, %s18
    %p29 = scmp.ge.s32.totalorder %s28, 2
    %s30 = scalar_select %p29, 0, %s28
    %s31 = smul.u32 %s19, 16
    %s32 = ssub.s32 %s31, 1
    %p33 = scmp.gt.s32.totalorder %s32, 0
    %s34 = scalar_select %p33, %s32, 0
    %s35 = smul.u32 %s26, 16
    %s36 = ssub.s32 %s35, 1
    %p37 = scmp.gt.s32.totalorder %s36, 0
    %s38 = scalar_select %p37, %s36, 0
    %s39 = ssub.s32 %s18, %s30
    %s40 = ssub.s32 %s34, %s38
    %s41 = sor.u32 %s39, %s40
    %p42 = scmp.eq.s32.totalorder %s41, 0
    %s44 = sadd.s32 %s43, 1
    %s45 = scalar_select %p42, %s43, %s44
    %p48 = pneg %p42
    %p49 = scmp.eq.s32.totalorder %s11, 1
    %p50 = por %p48, %p49
    %p51 = scmp.ne.s32.totalorder %s43, %s46
    %p52 = scmp.eq.s32.totalorder %s11, 0
    %p53 = por %p51, %p52
    %p54 = scmp.ne.s32.totalorder %s43, %s46
    %p55 = scmp.eq.s32.totalorder %s16, 1
    %p56 = por %p54, %p55
    %p57 = scmp.ne.s32.totalorder %s46, %s47
    %p58 = scmp.eq.s32.totalorder %s16, 0
    %p59 = por %p57, %p58
    %p60 = scmp.ne.s32.totalorder %s46, %s47
    %p61 = scmp.eq.s32.totalorder %s17, 1
    %p62 = por %p60, %p61
    %p64 = scmp.ne.s32.totalorder %s47, %s63
    %p65 = scmp.eq.s32.totalorder %s17, 0
    %p66 = por %p64, %p65
    %s67 = ssub.s32 %s18, %s30
    %s68 = ssub.s32 %s19, %s26
    %s69 = sor.u32 %s67, %s68
    %p70 = scmp.eq.s32.totalorder %s69, 0
    %s72 = sadd.s32 %s71, 1
    %s73 = scalar_select %p70, %s71, %s72
    %p76 = pneg %p70
    %p77 = scmp.eq.s32.totalorder %s11, 1
    %p78 = por %p76, %p77
    %p79 = scmp.ne.s32.totalorder %s71, %s74
    %p80 = scmp.eq.s32.totalorder %s11, 0
    %p81 = por %p79, %p80
    %p82 = scmp.ne.s32.totalorder %s71, %s74
    %p83 = scmp.eq.s32.totalorder %s16, 1
    %p84 = por %p82, %p83
    %p85 = scmp.ne.s32.totalorder %s74, %s75
    %p86 = scmp.eq.s32.totalorder %s16, 0
    %p87 = por %p85, %p86
    %p88 = scmp.ne.s32.totalorder %s74, %s75
    %p89 = scmp.eq.s32.totalorder %s17, 1
    %p90 = por %p88, %p89
    %p92 = scmp.ne.s32.totalorder %s75, %s91
    %p93 = scmp.eq.s32.totalorder %s17, 0
    %p94 = por %p92, %p93
    %s95 = sadd.s32 %s19, 1
    %s96 = smul.u32 %s95, 16
    %p97 = scmp.lt.s32.totalorder %s96, 15
    %s98 = scalar_select %p97, %s96, 15
    %s99 = sadd.s32 %s26, 1
    %s100 = smul.u32 %s99, 16
    %p101 = scmp.lt.s32.totalorder %s100, 15
    %s102 = scalar_select %p101, %s100, 15
    %s103 = ssub.s32 %s18, %s30
    %s104 = ssub.s32 %s98, %s102
    %s105 = sor.u32 %s103, %s104
    %p106 = scmp.eq.s32.totalorder %s105, 0
    %s108 = sadd.s32 %s107, 1
    %s109 = scalar_select %p106, %s107, %s108
    %p112 = pneg %p106
    %p113 = scmp.eq.s32.totalorder %s11, 1
    %p114 = por %p112, %p113
    %p115 = scmp.ne.s32.totalorder %s107, %s110
    %p116 = scmp.eq.s32.totalorder %s11, 0
    %p117 = por %p115, %p116
    %p118 = scmp.ne.s32.totalorder %s107, %s110
    %p119 = scmp.eq.s32.totalorder %s16, 1
    %p120 = por %p118, %p119
    %p121 = scmp.ne.s32.totalorder %s110, %s111
    %p122 = scmp.eq.s32.totalorder %s16, 0
    %p123 = por %p121, %p122
    %p124 = scmp.ne.s32.totalorder %s110, %s111
    %p125 = scmp.eq.s32.totalorder %s17, 1
    %p126 = por %p124, %p125
    %p128 = scmp.ne.s32.totalorder %s111, %s127
    %p129 = scmp.eq.s32.totalorder %s17, 0
    %p130 = por %p128, %p129
    %s132 = sadd.s32 %s131, 1
    %p135 = scmp.eq.s32.totalorder %s11, 1
    %p136 = scmp.ne.s32.totalorder %s131, %s133
    %p137 = scmp.eq.s32.totalorder %s11, 0
    %p138 = por %p136, %p137
    %p139 = scmp.ne.s32.totalorder %s131, %s133
    %p140 = scmp.eq.s32.totalorder %s16, 1
    %p141 = por %p139, %p140
    %p142 = scmp.ne.s32.totalorder %s133, %s134
    %p143 = scmp.eq.s32.totalorder %s16, 0
    %p144 = por %p142, %p143
    %p145 = scmp.ne.s32.totalorder %s133, %s134
    %p146 = scmp.eq.s32.totalorder %s17, 1
    %p147 = por %p145, %p146
    %p149 = scmp.ne.s32.totalorder %s134, %s148
    %p150 = scmp.eq.s32.totalorder %s17, 0
    %p151 = por %p149, %p150
    %s153 = sadd.s32 %s152, 1
    %p156 = scmp.eq.s32.totalorder %s11, 1
    %p157 = scmp.ne.s32.totalorder %s152, %s154
    %p158 = scmp.eq.s32.totalorder %s11, 0
    %p159 = por %p157, %p158
    %p160 = scmp.ne.s32.totalorder %s152, %s154
    %p161 = scmp.eq.s32.totalorder %s16, 1
    %p162 = por %p160, %p161
    %p163 = scmp.ne.s32.totalorder %s154, %s155
    %p164 = scmp.eq.s32.totalorder %s16, 0
    %p165 = por %p163, %p164
    %p166 = scmp.ne.s32.totalorder %s154, %s155
    %p167 = scmp.eq.s32.totalorder %s17, 1
    %p168 = por %p166, %p167
    %p170 = scmp.ne.s32.totalorder %s155, %s169
    %p171 = scmp.eq.s32.totalorder %s17, 0
    %p172 = por %p170, %p171
    %s173 = ssub.s32 %s18, %s30
    %s174 = ssub.s32 %s19, %s26
    %s175 = sor.u32 %s173, %s174
    %p176 = scmp.eq.s32.totalorder %s175, 0
    %s178 = sadd.s32 %s177, 1
    %s179 = scalar_select %p176, %s177, %s178
    %p182 = pneg %p176
    %p183 = scmp.eq.s32.totalorder %s11, 1
    %p184 = por %p182, %p183
    %p185 = scmp.ne.s32.totalorder %s177, %s180
    %p186 = scmp.eq.s32.totalorder %s11, 0
    %p187 = por %p185, %p186
    %p188 = scmp.ne.s32.totalorder %s177, %s180
    %p189 = scmp.eq.s32.totalorder %s16, 1
    %p190 = por %p188, %p189
    %p191 = scmp.ne.s32.totalorder %s180, %s181
    %p192 = scmp.eq.s32.totalorder %s16, 0
    %p193 = por %p191, %p192
    %p194 = scmp.ne.s32.totalorder %s180, %s181
    %p195 = scmp.eq.s32.totalorder %s17, 1
    %p196 = por %p194, %p195
    %p198 = scmp.ne.s32.totalorder %s181, %s197
    %p199 = scmp.eq.s32.totalorder %s17, 0
    %p200 = por %p198, %p199
    %p201 = scmp.le.s32.totalorder 1, %s11
    %p202 = scmp.lt.s32.totalorder %s11, 3
    %p203 = pnand %p201, %p202
    %p204 = pneg %p203
    // Predicated region
    $region9: #{res_block2_forward.3} parent=5 // pred_check
      _
    $region10: #{res_block2_forward.3} parent=5 // pred_check_branch
      %206 = sbr.rel (%p203) target = $region12
    $region11: #{res_block2_forward.3} parent=5 // pred_region
      %s207 = ssub.s32 %s11, 1
      // Predicated region
      $region13: #{res_block2_forward.3} parent=11 // pred_check
        %p208 = pneg %p144
      $region14: #{res_block2_forward.3} parent=11 // pred_check_branch
        %210 = sbr.rel (%p208) target = $region16
      $region15: #{res_block2_forward.3} parent=11 // pred_region
        _
      $region16: #{res_block2_forward.3} parent=11 // pred_fallthru
        _
      // Predicated region
      $region17: #{res_block2_forward.3} parent=11 // pred_check
        %p211 = pneg %p165
      $region18: #{res_block2_forward.3} parent=11 // pred_check_branch
        %213 = sbr.rel (%p211) target = $region20
      $region19: #{res_block2_forward.3} parent=11 // pred_region
        _
      $region20: #{res_block2_forward.3} parent=11 // pred_fallthru
        _
    $region12: #{res_block2_forward.3} parent=5 // pred_fallthru
      _
    %p214 = scmp.lt.s32.totalorder %s11, 2
    // Predicated region
    $region21: #{res_block2_forward.3} parent=5 // pred_check
      %p215 = pneg %p214
    $region22: #{res_block2_forward.3} parent=5 // pred_check_branch
      %217 = sbr.rel (%p215) target = $region24
    $region23: #{res_block2_forward.3} parent=5 // pred_region
      // Predicated region
      $region25: #{res_block2_forward.3} parent=23 // pred_check
        %p218 = pneg %p53
      $region26: #{res_block2_forward.3} parent=23 // pred_check_branch
        %220 = sbr.rel (%p218) target = $region28
      $region27: #{res_block2_forward.3} parent=23 // pred_region
        %s221 = smul.u32 %s19, 16
        %s222 = ssub.s32 %s221, 1
        %p223 = scmp.gt.s32.totalorder %s222, 0
        %s224 = scalar_select %p223, %s222, 0
        %s225 = smul.u32 2, %s224
        %p226 = scmp.lt.s32.totalorder %s18, 1
        %s227 = scalar_select %p226, %s18, 1
        %p228 = scmp.lt.s32.totalorder %s225, 31
        %s229 = scalar_select %p228, %s225, 31
        %s230 = smul.addr %s227, 32
        %s231 = sadd.s32 %s229, %s230
        %s232 = smul.addr %s231, 4
        %s233 = scalar_lea.vmem %s0, %s232
        %s234 = smul.u32 %s19, 16
        %s235 = ssub.s32 %s234, 1
        %p236 = scmp.gt.s32.totalorder %s235, 0
        %s237 = scalar_select %p236, %s235, 0
        %s238 = smul.u32 2, %s237
      $region28: #{res_block2_forward.3} parent=23 // pred_fallthru
        _
      // Predicated region
      $region29: #{res_block2_forward.3} parent=23 // pred_check
        %p239 = pneg %p81
      $region30: #{res_block2_forward.3} parent=23 // pred_check_branch
        %241 = sbr.rel (%p239) target = $region32
      $region31: #{res_block2_forward.3} parent=23 // pred_region
        %s242 = smul.u32 32, %s19
        %p243 = scmp.lt.s32.totalorder %s18, 1
        %s244 = scalar_select %p243, %s18, 1
        %p245 = scmp.lt.s32.totalorder %s242, 31
        %s246 = scalar_select %p245, %s242, 31
        %s247 = smul.addr %s244, 32
        %s248 = sadd.s32 %s246, %s247
        %s249 = smul.addr %s248, 4
        %s250 = scalar_lea.vmem %s1, %s249
        %s251 = smul.u32 32, %s19
      $region32: #{res_block2_forward.3} parent=23 // pred_fallthru
        _
      // Predicated region
      $region33: #{res_block2_forward.3} parent=23 // pred_check
        %p252 = pneg %p117
      $region34: #{res_block2_forward.3} parent=23 // pred_check_branch
        %254 = sbr.rel (%p252) target = $region36
      $region35: #{res_block2_forward.3} parent=23 // pred_region
        %s255 = sadd.s32 %s19, 1
        %s256 = smul.u32 %s255, 16
        %p257 = scmp.lt.s32.totalorder %s256, 15
        %s258 = scalar_select %p257, %s256, 15
        %s259 = smul.u32 2, %s258
        %p260 = scmp.lt.s32.totalorder %s18, 1
        %s261 = scalar_select %p260, %s18, 1
        %p262 = scmp.lt.s32.totalorder %s259, 31
        %s263 = scalar_select %p262, %s259, 31
        %s264 = smul.addr %s261, 32
        %s265 = sadd.s32 %s263, %s264
        %s266 = smul.addr %s265, 4
        %s267 = scalar_lea.vmem %s2, %s266
        %s268 = sadd.s32 %s19, 1
        %s269 = smul.u32 %s268, 16
        %p270 = scmp.lt.s32.totalorder %s269, 15
        %s271 = scalar_select %p270, %s269, 15
        %s272 = smul.u32 2, %s271
      $region36: #{res_block2_forward.3} parent=23 // pred_fallthru
        _
    $region24: #{res_block2_forward.3} parent=5 // pred_fallthru
      _
    %p273 = scmp.le.s32.totalorder 1, %s11
    %p274 = scmp.lt.s32.totalorder %s11, 3
    %p275 = pnand %p273, %p274
    %p276 = pneg %p275
    // Predicated region
    $region37: #{res_block2_forward.3} parent=5 // pred_check
      _
    $region38: #{res_block2_forward.3} parent=5 // pred_check_branch
      %278 = sbr.rel (%p275) target = $region40
    $region39: #{res_block2_forward.3} parent=5 // pred_region
      %s279 = ssub.s32 %s11, 1
      %s280 = smul.u32 %s21, 16
      %s281 = ssub.s32 %s280, 1
      %p282 = scmp.gt.s32.totalorder %s281, 0
      %s283 = scalar_select %p282, %s281, 0
      %s284 = smul.u32 2, %s283
      %p285 = scmp.lt.s32.totalorder %s20, 1
      %s286 = scalar_select %p285, %s20, 1
      %p287 = scmp.lt.s32.totalorder %s284, 31
      %s288 = scalar_select %p287, %s284, 31
      %s289 = smul.addr %s286, 32
      %s290 = sadd.s32 %s288, %s289
      %s291 = smul.addr %s290, 4
      %s292 = scalar_lea.vmem %s0, %s291
      %p293 = pneg %p59
      %p294 = pneg %p56
      %s295 = smul.u32 32, %s21
      %p296 = scmp.lt.s32.totalorder %s20, 1
      %s297 = scalar_select %p296, %s20, 1
      %p298 = scmp.lt.s32.totalorder %s295, 31
      %s299 = scalar_select %p298, %s295, 31
      %s300 = smul.addr %s297, 32
      %s301 = sadd.s32 %s299, %s300
      %s302 = smul.addr %s301, 4
      %s303 = scalar_lea.vmem %s1, %s302
      %p304 = pneg %p87
      %p305 = pneg %p84
      %s306 = sadd.s32 %s21, 1
      %s307 = smul.u32 %s306, 16
      %p308 = scmp.lt.s32.totalorder %s307, 15
      %s309 = scalar_select %p308, %s307, 15
      %s310 = smul.u32 2, %s309
      %p311 = scmp.lt.s32.totalorder %s20, 1
      %s312 = scalar_select %p311, %s20, 1
      %p313 = scmp.lt.s32.totalorder %s310, 31
      %s314 = scalar_select %p313, %s310, 31
      %s315 = smul.addr %s312, 32
      %s316 = sadd.s32 %s314, %s315
      %s317 = smul.addr %s316, 4
      %s318 = scalar_lea.vmem %s2, %s317
      %p319 = pneg %p123
      %p320 = pneg %p120
      %p321 = pneg %p144
      %p322 = pneg %p141
      %p323 = pneg %p165
      %p324 = pneg %p162
      %p325 = pneg %p193
      %p326 = pneg %p190
      %s327 = smul.u32 32, %s21
      %p328 = scmp.lt.s32.totalorder %s20, 1
      %s329 = scalar_select %p328, %s20, 1
      %p330 = scmp.lt.s32.totalorder %s327, 31
      %s331 = scalar_select %p330, %s327, 31
      %s332 = smul.addr %s329, 32
      %s333 = sadd.s32 %s331, %s332
      %s334 = smul.addr %s333, 4
      %s335 = scalar_lea.vmem %s5, %s334
      %s336 = smul.u32 %s21, 16
      %s337 = ssub.s32 %s336, 1
      %p338 = scmp.gt.s32.totalorder %s337, 0
      %s339 = scalar_select %p338, %s337, 0
      %s340 = smul.u32 2, %s339
      %p341 = scmp.lt.s32.totalorder %s20, 1
      %s342 = scalar_select %p341, %s20, 1
      %p343 = scmp.lt.s32.totalorder %s340, 31
      %s344 = scalar_select %p343, %s340, 31
      %s345 = smul.addr %s342, 32
      %s346 = sadd.s32 %s344, %s345
      %s347 = smul.addr %s346, 4
      %s348 = scalar_lea.vmem %s0, %s347
      %s349 = smul.u32 %s21, 16
      %s350 = ssub.s32 %s349, 1
      %p351 = scmp.gt.s32.totalorder %s350, 0
      %s352 = scalar_select %p351, %s350, 0
      %s353 = smul.u32 2, %s352
      %s354 = smul.u32 32, %s21
      %p355 = scmp.lt.s32.totalorder %s20, 1
      %s356 = scalar_select %p355, %s20, 1
      %p357 = scmp.lt.s32.totalorder %s354, 31
      %s358 = scalar_select %p357, %s354, 31
      %s359 = smul.addr %s356, 32
      %s360 = sadd.s32 %s358, %s359
      %s361 = smul.addr %s360, 4
      %s362 = scalar_lea.vmem %s1, %s361
      %s363 = smul.u32 32, %s21
      %s364 = sadd.s32 %s21, 1
      %s365 = smul.u32 %s364, 16
      %p366 = scmp.lt.s32.totalorder %s365, 15
      %s367 = scalar_select %p366, %s365, 15
      %s368 = smul.u32 2, %s367
      %p369 = scmp.lt.s32.totalorder %s20, 1
      %s370 = scalar_select %p369, %s20, 1
      %p371 = scmp.lt.s32.totalorder %s368, 31
      %s372 = scalar_select %p371, %s368, 31
      %s373 = smul.addr %s370, 32
      %s374 = sadd.s32 %s372, %s373
      %s375 = smul.addr %s374, 4
      %s376 = scalar_lea.vmem %s2, %s375
      %s377 = sadd.s32 %s21, 1
      %s378 = smul.u32 %s377, 16
      %p379 = scmp.lt.s32.totalorder %s378, 15
      %s380 = scalar_select %p379, %s378, 15
      %s381 = smul.u32 2, %s380
      %s382 = smul.u32 32, %s21
      %p383 = scmp.lt.s32.totalorder %s20, 1
      %s384 = scalar_select %p383, %s20, 1
      %p385 = scmp.lt.s32.totalorder %s382, 31
      %s386 = scalar_select %p385, %s382, 31
      %s387 = smul.addr %s384, 32
      %s388 = sadd.s32 %s386, %s387
      %s389 = smul.addr %s388, 4
      %s390 = scalar_lea.vmem %s5, %s389
      %s391 = smul.u32 32, %s21
      %v392 = vld [vmem:[%s362] sm:$0xf]
      %v393 = vld [vmem:[%s362 + $0x4] sm:$0xf]
      %v394 = vld [vmem:[%s362 + $0x8] sm:$0xf]
      %v395 = vld [vmem:[%s362 + $0xc] sm:$0xf]
      %v396 = vld [vmem:[%s362 + $0x10] sm:$0xf]
      %v397 = vld [vmem:[%s362 + $0x14] sm:$0xf]
      %v398 = vld [vmem:[%s362 + $0x18] sm:$0xf]
      %v399 = vld [vmem:[%s362 + $0x1c] sm:$0xf]
      %v400 = vld [vmem:[%s362 + $0x20] sm:$0xf]
      %v401 = vld [vmem:[%s362 + $0x24] sm:$0xf]
      %v402 = vld [vmem:[%s362 + $0x28] sm:$0xf]
      %v403 = vld [vmem:[%s362 + $0x2c] sm:$0xf]
      %v404 = vld [vmem:[%s362 + $0x30] sm:$0xf]
      %v405 = vld [vmem:[%s362 + $0x34] sm:$0xf]
      %v406 = vld [vmem:[%s362 + $0x38] sm:$0xf]
      %v407 = vld [vmem:[%s362 + $0x3c] sm:$0xf]
      %v408 = vld [vmem:[%s362 + $0x40] sm:$0xf]
      %v409 = vld [vmem:[%s362 + $0x44] sm:$0xf]
      %v410 = vld [vmem:[%s362 + $0x48] sm:$0xf]
      %v411 = vld [vmem:[%s362 + $0x4c] sm:$0xf]
      %v412 = vld [vmem:[%s362 + $0x50] sm:$0xf]
      %v413 = vld [vmem:[%s362 + $0x54] sm:$0xf]
      %v414 = vld [vmem:[%s362 + $0x58] sm:$0xf]
      %v415 = vld [vmem:[%s362 + $0x5c] sm:$0xf]
      %v416 = vld [vmem:[%s362 + $0x60] sm:$0xf]
      %v417 = vld [vmem:[%s362 + $0x64] sm:$0xf]
      %v418 = vld [vmem:[%s362 + $0x68] sm:$0xf]
      %v419 = vld [vmem:[%s362 + $0x6c] sm:$0xf]
      %v420 = vld [vmem:[%s362 + $0x70] sm:$0xf]
      %v421 = vld [vmem:[%s362 + $0x74] sm:$0xf]
      %v422 = vld [vmem:[%s362 + $0x78] sm:$0xf]
      %v423 = vld [vmem:[%s362 + $0x7c] sm:$0xf]
      %v424 = vld [vmem:[%s348] sm:$0xf]
      %v425 = vld [vmem:[%s348 + $0x4] sm:$0xf]
      %v426 = vld [vmem:[%s376] sm:$0xf]
      %v427 = vld [vmem:[%s376 + $0x4] sm:$0xf]
      %v430 = vunpack.c.l.b16 %v424
      %v431 = vunpack.c.l.b16 %v425
      %v432 = vpack.c.b16 %v431, %v430
      %v466 = vunpack.c.l.b16 %v392
      %v467 = vunpack.c.l.b16 %v393
      %v468 = vunpack.c.l.b16 %v394
      %v469 = vunpack.c.l.b16 %v395
      %v470 = vunpack.c.l.b16 %v396
      %v471 = vunpack.c.l.b16 %v397
      %v472 = vunpack.c.l.b16 %v398
      %v473 = vunpack.c.l.b16 %v399
      %v474 = vunpack.c.l.b16 %v400
      %v475 = vunpack.c.l.b16 %v401
      %v476 = vunpack.c.l.b16 %v402
      %v477 = vunpack.c.l.b16 %v403
      %v478 = vunpack.c.l.b16 %v404
      %v479 = vunpack.c.l.b16 %v405
      %v480 = vunpack.c.l.b16 %v406
      %v481 = vunpack.c.l.b16 %v407
      %v482 = vunpack.c.l.b16 %v408
      %v483 = vunpack.c.l.b16 %v409
      %v484 = vunpack.c.l.b16 %v410
      %v485 = vunpack.c.l.b16 %v411
      %v486 = vunpack.c.l.b16 %v412
      %v487 = vunpack.c.l.b16 %v413
      %v488 = vunpack.c.l.b16 %v414
      %v489 = vunpack.c.l.b16 %v415
      %v490 = vunpack.c.l.b16 %v416
      %v491 = vunpack.c.l.b16 %v417
      %v492 = vunpack.c.l.b16 %v418
      %v493 = vunpack.c.l.b16 %v419
      %v494 = vunpack.c.l.b16 %v420
      %v495 = vunpack.c.l.b16 %v421
      %v496 = vunpack.c.l.b16 %v422
      %v497 = vunpack.c.l.b16 %v423
      %v498 = vpack.c.b16 %v467, %v466
      %v499 = vpack.c.b16 %v469, %v468
      %v500 = vpack.c.b16 %v471, %v470
      %v501 = vpack.c.b16 %v473, %v472
      %v502 = vpack.c.b16 %v475, %v474
      %v503 = vpack.c.b16 %v477, %v476
      %v504 = vpack.c.b16 %v479, %v478
      %v505 = vpack.c.b16 %v481, %v480
      %v506 = vpack.c.b16 %v483, %v482
      %v507 = vpack.c.b16 %v485, %v484
      %v508 = vpack.c.b16 %v487, %v486
      %v509 = vpack.c.b16 %v489, %v488
      %v510 = vpack.c.b16 %v491, %v490
      %v511 = vpack.c.b16 %v493, %v492
      %v512 = vpack.c.b16 %v495, %v494
      %v513 = vpack.c.b16 %v497, %v496
      %v532 = vunpack.c.l.b16 %v426
      %v533 = vunpack.c.l.b16 %v427
      %v534 = vpack.c.b16 %v533, %v532
      %v536 = vunpack.c.l.bf16 %v432
      %v537 = vunpack.c.h.bf16 %v432
      %v538 = vunpack.c.l.bf16 %v498
      %v539 = vunpack.c.h.bf16 %v498
      %v540 = vunpack.c.l.bf16 %v499
      %v541 = vunpack.c.h.bf16 %v499
      %v542 = vunpack.c.l.bf16 %v500
      %v543 = vunpack.c.h.bf16 %v500
      %v544 = vunpack.c.l.bf16 %v501
      %v545 = vunpack.c.h.bf16 %v501
      %v546 = vunpack.c.l.bf16 %v502
      %v547 = vunpack.c.h.bf16 %v502
      %v548 = vunpack.c.l.bf16 %v503
      %v549 = vunpack.c.h.bf16 %v503
      %v550 = vunpack.c.l.bf16 %v504
      %v551 = vunpack.c.h.bf16 %v504
      %v552 = vunpack.c.l.bf16 %v505
      %v553 = vunpack.c.h.bf16 %v505
      %v554 = vunpack.c.l.bf16 %v506
      %v555 = vunpack.c.h.bf16 %v506
      %v556 = vunpack.c.l.bf16 %v507
      %v557 = vunpack.c.h.bf16 %v507
      %v558 = vunpack.c.l.bf16 %v508
      %v559 = vunpack.c.h.bf16 %v508
      %v560 = vunpack.c.l.bf16 %v509
      %v561 = vunpack.c.h.bf16 %v509
      %v562 = vunpack.c.l.bf16 %v510
      %v563 = vunpack.c.h.bf16 %v510
      %v564 = vunpack.c.l.bf16 %v511
      %v565 = vunpack.c.h.bf16 %v511
      %v566 = vunpack.c.l.bf16 %v512
      %v567 = vunpack.c.h.bf16 %v512
      %v568 = vunpack.c.l.bf16 %v513
      %v569 = vunpack.c.h.bf16 %v513
      %v570 = vunpack.c.l.bf16 %v534
      %v571 = vunpack.c.h.bf16 %v534
      %vm572 = vcmp.ge.f32.partialorder %v536, 0.0
      %vm573 = vcmp.ge.f32.partialorder %v537, 0.0
      %vm574 = vcmp.ge.f32.partialorder %v538, 0.0
      %vm575 = vcmp.ge.f32.partialorder %v539, 0.0
      %vm576 = vcmp.ge.f32.partialorder %v540, 0.0
      %vm577 = vcmp.ge.f32.partialorder %v541, 0.0
      %vm578 = vcmp.ge.f32.partialorder %v542, 0.0
      %vm579 = vcmp.ge.f32.partialorder %v543, 0.0
      %vm580 = vcmp.ge.f32.partialorder %v544, 0.0
      %vm581 = vcmp.ge.f32.partialorder %v545, 0.0
      %vm582 = vcmp.ge.f32.partialorder %v546, 0.0
      %vm583 = vcmp.ge.f32.partialorder %v547, 0.0
      %vm584 = vcmp.ge.f32.partialorder %v548, 0.0
      %vm585 = vcmp.ge.f32.partialorder %v549, 0.0
      %vm586 = vcmp.ge.f32.partialorder %v550, 0.0
      %vm587 = vcmp.ge.f32.partialorder %v551, 0.0
      %vm588 = vcmp.ge.f32.partialorder %v552, 0.0
      %vm589 = vcmp.ge.f32.partialorder %v553, 0.0
      %vm590 = vcmp.ge.f32.partialorder %v554, 0.0
      %vm591 = vcmp.ge.f32.partialorder %v555, 0.0
      %vm592 = vcmp.ge.f32.partialorder %v556, 0.0
      %vm593 = vcmp.ge.f32.partialorder %v557, 0.0
      %vm594 = vcmp.ge.f32.partialorder %v558, 0.0
      %vm595 = vcmp.ge.f32.partialorder %v559, 0.0
      %vm596 = vcmp.ge.f32.partialorder %v560, 0.0
      %vm597 = vcmp.ge.f32.partialorder %v561, 0.0
      %vm598 = vcmp.ge.f32.partialorder %v562, 0.0
      %vm599 = vcmp.ge.f32.partialorder %v563, 0.0
      %vm600 = vcmp.ge.f32.partialorder %v564, 0.0
      %vm601 = vcmp.ge.f32.partialorder %v565, 0.0
      %vm602 = vcmp.ge.f32.partialorder %v566, 0.0
      %vm603 = vcmp.ge.f32.partialorder %v567, 0.0
      %vm604 = vcmp.ge.f32.partialorder %v568, 0.0
      %vm605 = vcmp.ge.f32.partialorder %v569, 0.0
      %vm606 = vcmp.ge.f32.partialorder %v570, 0.0
      %vm607 = vcmp.ge.f32.partialorder %v571, 0.0
      %v608 = vmul.f32 %v536, 0.100097656
      %v609 = vmul.f32 %v537, 0.100097656
      %v610 = vmul.f32 %v538, 0.100097656
      %v611 = vmul.f32 %v539, 0.100097656
      %v612 = vmul.f32 %v540, 0.100097656
      %v613 = vmul.f32 %v541, 0.100097656
      %v614 = vmul.f32 %v542, 0.100097656
      %v615 = vmul.f32 %v543, 0.100097656
      %v616 = vmul.f32 %v544, 0.100097656
      %v617 = vmul.f32 %v545, 0.100097656
      %v618 = vmul.f32 %v546, 0.100097656
      %v619 = vmul.f32 %v547, 0.100097656
      %v620 = vmul.f32 %v548, 0.100097656
      %v621 = vmul.f32 %v549, 0.100097656
      %v622 = vmul.f32 %v550, 0.100097656
      %v623 = vmul.f32 %v551, 0.100097656
      %v624 = vmul.f32 %v552, 0.100097656
      %v625 = vmul.f32 %v553, 0.100097656
      %v626 = vmul.f32 %v554, 0.100097656
      %v627 = vmul.f32 %v555, 0.100097656
      %v628 = vmul.f32 %v556, 0.100097656
      %v629 = vmul.f32 %v557, 0.100097656
      %v630 = vmul.f32 %v558, 0.100097656
      %v631 = vmul.f32 %v559, 0.100097656
      %v632 = vmul.f32 %v560, 0.100097656
      %v633 = vmul.f32 %v561, 0.100097656
      %v634 = vmul.f32 %v562, 0.100097656
      %v635 = vmul.f32 %v563, 0.100097656
      %v636 = vmul.f32 %v564, 0.100097656
      %v637 = vmul.f32 %v565, 0.100097656
      %v638 = vmul.f32 %v566, 0.100097656
      %v639 = vmul.f32 %v567, 0.100097656
      %v640 = vmul.f32 %v568, 0.100097656
      %v641 = vmul.f32 %v569, 0.100097656
      %v642 = vmul.f32 %v570, 0.100097656
      %v643 = vmul.f32 %v571, 0.100097656
      %v644 = vpack.c.bf16 %v608, %v608
      %v645 = vpack.c.bf16 %v609, %v609
      %v646 = vpack.c.bf16 %v610, %v610
      %v647 = vpack.c.bf16 %v611, %v611
      %v648 = vpack.c.bf16 %v612, %v612
      %v649 = vpack.c.bf16 %v613, %v613
      %v650 = vpack.c.bf16 %v614, %v614
      %v651 = vpack.c.bf16 %v615, %v615
      %v652 = vpack.c.bf16 %v616, %v616
      %v653 = vpack.c.bf16 %v617, %v617
      %v654 = vpack.c.bf16 %v618, %v618
      %v655 = vpack.c.bf16 %v619, %v619
      %v656 = vpack.c.bf16 %v620, %v620
      %v657 = vpack.c.bf16 %v621, %v621
      %v658 = vpack.c.bf16 %v622, %v622
      %v659 = vpack.c.bf16 %v623, %v623
      %v660 = vpack.c.bf16 %v624, %v624
      %v661 = vpack.c.bf16 %v625, %v625
      %v662 = vpack.c.bf16 %v626, %v626
      %v663 = vpack.c.bf16 %v627, %v627
      %v664 = vpack.c.bf16 %v628, %v628
      %v665 = vpack.c.bf16 %v629, %v629
      %v666 = vpack.c.bf16 %v630, %v630
      %v667 = vpack.c.bf16 %v631, %v631
      %v668 = vpack.c.bf16 %v632, %v632
      %v669 = vpack.c.bf16 %v633, %v633
      %v670 = vpack.c.bf16 %v634, %v634
      %v671 = vpack.c.bf16 %v635, %v635
      %v672 = vpack.c.bf16 %v636, %v636
      %v673 = vpack.c.bf16 %v637, %v637
      %v674 = vpack.c.bf16 %v638, %v638
      %v675 = vpack.c.bf16 %v639, %v639
      %v676 = vpack.c.bf16 %v640, %v640
      %v677 = vpack.c.bf16 %v641, %v641
      %v678 = vpack.c.bf16 %v642, %v642
      %v679 = vpack.c.bf16 %v643, %v643
      %vm680 = vmpackc.low %vm573, %vm572
      %vm681 = vmpackc.low %vm575, %vm574
      %vm682 = vmpackc.low %vm577, %vm576
      %vm683 = vmpackc.low %vm579, %vm578
      %vm684 = vmpackc.low %vm581, %vm580
      %vm685 = vmpackc.low %vm583, %vm582
      %vm686 = vmpackc.low %vm585, %vm584
      %vm687 = vmpackc.low %vm587, %vm586
      %vm688 = vmpackc.low %vm589, %vm588
      %vm689 = vmpackc.low %vm591, %vm590
      %vm690 = vmpackc.low %vm593, %vm592
      %vm691 = vmpackc.low %vm595, %vm594
      %vm692 = vmpackc.low %vm597, %vm596
      %vm693 = vmpackc.low %vm599, %vm598
      %vm694 = vmpackc.low %vm601, %vm600
      %vm695 = vmpackc.low %vm603, %vm602
      %vm696 = vmpackc.low %vm605, %vm604
      %vm697 = vmpackc.low %vm607, %vm606
      %v734 = vunpack.c.l.b16 %v644
      %v735 = vunpack.c.l.b16 %v645
      %v736 = vunpack.c.l.b16 %v646
      %v737 = vunpack.c.l.b16 %v647
      %v738 = vunpack.c.l.b16 %v648
      %v739 = vunpack.c.l.b16 %v649
      %v740 = vunpack.c.l.b16 %v650
      %v741 = vunpack.c.l.b16 %v651
      %v742 = vunpack.c.l.b16 %v652
      %v743 = vunpack.c.l.b16 %v653
      %v744 = vunpack.c.l.b16 %v654
      %v745 = vunpack.c.l.b16 %v655
      %v746 = vunpack.c.l.b16 %v656
      %v747 = vunpack.c.l.b16 %v657
      %v748 = vunpack.c.l.b16 %v658
      %v749 = vunpack.c.l.b16 %v659
      %v750 = vunpack.c.l.b16 %v660
      %v751 = vunpack.c.l.b16 %v661
      %v752 = vunpack.c.l.b16 %v662
      %v753 = vunpack.c.l.b16 %v663
      %v754 = vunpack.c.l.b16 %v664
      %v755 = vunpack.c.l.b16 %v665
      %v756 = vunpack.c.l.b16 %v666
      %v757 = vunpack.c.l.b16 %v667
      %v758 = vunpack.c.l.b16 %v668
      %v759 = vunpack.c.l.b16 %v669
      %v760 = vunpack.c.l.b16 %v670
      %v761 = vunpack.c.l.b16 %v671
      %v762 = vunpack.c.l.b16 %v672
      %v763 = vunpack.c.l.b16 %v673
      %v764 = vunpack.c.l.b16 %v674
      %v765 = vunpack.c.l.b16 %v675
      %v766 = vunpack.c.l.b16 %v676
      %v767 = vunpack.c.l.b16 %v677
      %v768 = vunpack.c.l.b16 %v678
      %v769 = vunpack.c.l.b16 %v679
      %v770 = vpack.c.b16 %v735, %v734
      %v771 = vpack.c.b16 %v737, %v736
      %v772 = vpack.c.b16 %v739, %v738
      %v773 = vpack.c.b16 %v741, %v740
      %v774 = vpack.c.b16 %v743, %v742
      %v775 = vpack.c.b16 %v745, %v744
      %v776 = vpack.c.b16 %v747, %v746
      %v777 = vpack.c.b16 %v749, %v748
      %v778 = vpack.c.b16 %v751, %v750
      %v779 = vpack.c.b16 %v753, %v752
      %v780 = vpack.c.b16 %v755, %v754
      %v781 = vpack.c.b16 %v757, %v756
      %v782 = vpack.c.b16 %v759, %v758
      %v783 = vpack.c.b16 %v761, %v760
      %v784 = vpack.c.b16 %v763, %v762
      %v785 = vpack.c.b16 %v765, %v764
      %v786 = vpack.c.b16 %v767, %v766
      %v787 = vpack.c.b16 %v769, %v768
      %v806 = vsel %vm680, %v432, %v770
      %v807 = vsel %vm681, %v498, %v771
      %v808 = vsel %vm682, %v499, %v772
      %v809 = vsel %vm683, %v500, %v773
      %v810 = vsel %vm684, %v501, %v774
      %v811 = vsel %vm685, %v502, %v775
      %v812 = vsel %vm686, %v503, %v776
      %v813 = vsel %vm687, %v504, %v777
      %v814 = vsel %vm688, %v505, %v778
      %v815 = vsel %vm689, %v506, %v779
      %v816 = vsel %vm690, %v507, %v780
      %v817 = vsel %vm691, %v508, %v781
      %v818 = vsel %vm692, %v509, %v782
      %v819 = vsel %vm693, %v510, %v783
      %v820 = vsel %vm694, %v511, %v784
      %v821 = vsel %vm695, %v512, %v785
      %v822 = vsel %vm696, %v513, %v786
      %v823 = vsel %vm697, %v534, %v787
      %vm824 = vsmask.f32 6400
      %v826 = vshrl.u32 %v807, 16
      %v828 = vrot.slane %v826, 1
      %v829 = vshll.u32 %v807, 16
      %v831 = vrot.slane %v829, 2
      %v832 = vor.u32 %v828, %v831
      %v834 = vshrl.u32 %v808, 16
      %v836 = vrot.slane %v834, 1
      %v837 = vshll.u32 %v808, 16
      %v839 = vrot.slane %v837, 2
      %v840 = vor.u32 %v836, %v839
      %v841 = vsel %vm824, %v832, %v840
      %v843 = vshrl.u32 %v809, 16
      %v845 = vrot.slane %v843, 1
      %v846 = vshll.u32 %v809, 16
      %v848 = vrot.slane %v846, 2
      %v849 = vor.u32 %v845, %v848
      %v850 = vsel %vm824, %v840, %v849
      %v852 = vshrl.u32 %v810, 16
      %v854 = vrot.slane %v852, 1
      %v855 = vshll.u32 %v810, 16
      %v857 = vrot.slane %v855, 2
      %v858 = vor.u32 %v854, %v857
      %v859 = vsel %vm824, %v849, %v858
      %v861 = vshrl.u32 %v811, 16
      %v863 = vrot.slane %v861, 1
      %v864 = vshll.u32 %v811, 16
      %v866 = vrot.slane %v864, 2
      %v867 = vor.u32 %v863, %v866
      %v868 = vsel %vm824, %v858, %v867
      %v870 = vshrl.u32 %v812, 16
      %v872 = vrot.slane %v870, 1
      %v873 = vshll.u32 %v812, 16
      %v875 = vrot.slane %v873, 2
      %v876 = vor.u32 %v872, %v875
      %v877 = vsel %vm824, %v867, %v876
      %v879 = vshrl.u32 %v813, 16
      %v881 = vrot.slane %v879, 1
      %v882 = vshll.u32 %v813, 16
      %v884 = vrot.slane %v882, 2
      %v885 = vor.u32 %v881, %v884
      %v886 = vsel %vm824, %v876, %v885
      %v888 = vshrl.u32 %v814, 16
      %v890 = vrot.slane %v888, 1
      %v891 = vshll.u32 %v814, 16
      %v893 = vrot.slane %v891, 2
      %v894 = vor.u32 %v890, %v893
      %v895 = vsel %vm824, %v885, %v894
      %v897 = vshrl.u32 %v815, 16
      %v899 = vrot.slane %v897, 1
      %v900 = vshll.u32 %v815, 16
      %v902 = vrot.slane %v900, 2
      %v903 = vor.u32 %v899, %v902
      %v904 = vsel %vm824, %v894, %v903
      %v906 = vshrl.u32 %v816, 16
      %v908 = vrot.slane %v906, 1
      %v909 = vshll.u32 %v816, 16
      %v911 = vrot.slane %v909, 2
      %v912 = vor.u32 %v908, %v911
      %v913 = vsel %vm824, %v903, %v912
      %v915 = vshrl.u32 %v817, 16
      %v917 = vrot.slane %v915, 1
      %v918 = vshll.u32 %v817, 16
      %v920 = vrot.slane %v918, 2
      %v921 = vor.u32 %v917, %v920
      %v922 = vsel %vm824, %v912, %v921
      %v924 = vshrl.u32 %v818, 16
      %v926 = vrot.slane %v924, 1
      %v927 = vshll.u32 %v818, 16
      %v929 = vrot.slane %v927, 2
      %v930 = vor.u32 %v926, %v929
      %v931 = vsel %vm824, %v921, %v930
      %v933 = vshrl.u32 %v819, 16
      %v935 = vrot.slane %v933, 1
      %v936 = vshll.u32 %v819, 16
      %v938 = vrot.slane %v936, 2
      %v939 = vor.u32 %v935, %v938
      %v940 = vsel %vm824, %v930, %v939
      %v942 = vshrl.u32 %v820, 16
      %v944 = vrot.slane %v942, 1
      %v945 = vshll.u32 %v820, 16
      %v947 = vrot.slane %v945, 2
      %v948 = vor.u32 %v944, %v947
      %v949 = vsel %vm824, %v939, %v948
      %v951 = vshrl.u32 %v821, 16
      %v953 = vrot.slane %v951, 1
      %v954 = vshll.u32 %v821, 16
      %v956 = vrot.slane %v954, 2
      %v957 = vor.u32 %v953, %v956
      %v958 = vsel %vm824, %v948, %v957
      %v960 = vshrl.u32 %v822, 16
      %v962 = vrot.slane %v960, 1
      %v963 = vshll.u32 %v822, 16
      %v965 = vrot.slane %v963, 2
      %v966 = vor.u32 %v962, %v965
      %v967 = vsel %vm824, %v957, %v966
      %vm985 = vcmask 1044480
      %v986 = vrot.slane %v807, 3
      %v987 = vrot.slane %v808, 3
      %v988 = vsel %vm985, %v986, %v987
      %v989 = vrot.slane %v809, 3
      %v990 = vsel %vm985, %v987, %v989
      %v991 = vrot.slane %v810, 3
      %v992 = vsel %vm985, %v989, %v991
      %v993 = vrot.slane %v811, 3
      %v994 = vsel %vm985, %v991, %v993
      %v995 = vrot.slane %v812, 3
      %v996 = vsel %vm985, %v993, %v995
      %v997 = vrot.slane %v813, 3
      %v998 = vsel %vm985, %v995, %v997
      %v999 = vrot.slane %v814, 3
      %v1000 = vsel %vm985, %v997, %v999
      %v1001 = vrot.slane %v815, 3
      %v1002 = vsel %vm985, %v999, %v1001
      %v1003 = vrot.slane %v816, 3
      %v1004 = vsel %vm985, %v1001, %v1003
      %v1005 = vrot.slane %v817, 3
      %v1006 = vsel %vm985, %v1003, %v1005
      %v1007 = vrot.slane %v818, 3
      %v1008 = vsel %vm985, %v1005, %v1007
      %v1009 = vrot.slane %v819, 3
      %v1010 = vsel %vm985, %v1007, %v1009
      %v1011 = vrot.slane %v820, 3
      %v1012 = vsel %vm985, %v1009, %v1011
      %v1013 = vrot.slane %v821, 3
      %v1014 = vsel %vm985, %v1011, %v1013
      %v1015 = vrot.slane %v822, 3
      %v1016 = vsel %vm985, %v1013, %v1015
      %v1017 = vrot.slane %v823, 3
      %v1018 = vsel %vm985, %v1015, %v1017
      %v1019 = vld [vmem:[%s3] sm:$0xf]
      %v1020 = vld [vmem:[%s3 + $0x4] sm:$0xf]
      %v1021 = vld [vmem:[%s3 + $0x8] sm:$0xf]
      %v1022 = vld [vmem:[%s3 + $0xc] sm:$0xf]
      %v1023 = vld [vmem:[%s3 + $0x10] sm:$0xf]
      %v1024 = vld [vmem:[%s3 + $0x14] sm:$0xf]
      %v1025 = vld [vmem:[%s3 + $0x18] sm:$0xf]
      %v1026 = vld [vmem:[%s3 + $0x1c] sm:$0xf]
      %v1027 = vld [vmem:[%s3 + $0x20] sm:$0xf]
      %v1028 = vld [vmem:[%s3 + $0x24] sm:$0xf]
      %v1029 = vld [vmem:[%s3 + $0x28] sm:$0xf]
      %v1030 = vld [vmem:[%s3 + $0x2c] sm:$0xf]
      %v1031 = vld [vmem:[%s3 + $0x30] sm:$0xf]
      %v1032 = vld [vmem:[%s3 + $0x34] sm:$0xf]
      %v1033 = vld [vmem:[%s3 + $0x38] sm:$0xf]
      %v1034 = vld [vmem:[%s3 + $0x3c] sm:$0xf]
      %v1035 = vld [vmem:[%s3 + $0x40] sm:$0xf]
      %v1036 = vld [vmem:[%s3 + $0x44] sm:$0xf]
      %v1037 = vld [vmem:[%s3 + $0x48] sm:$0xf]
      %v1038 = vld [vmem:[%s3 + $0x4c] sm:$0xf]
      %v1039 = vld [vmem:[%s3 + $0x50] sm:$0xf]
      %v1040 = vld [vmem:[%s3 + $0x54] sm:$0xf]
      %v1041 = vld [vmem:[%s3 + $0x58] sm:$0xf]
      %v1042 = vld [vmem:[%s3 + $0x5c] sm:$0xf]
      %v1043 = vld [vmem:[%s3 + $0x60] sm:$0xf]
      %v1044 = vld [vmem:[%s3 + $0x64] sm:$0xf]
      %v1045 = vld [vmem:[%s3 + $0x68] sm:$0xf]
      %v1046 = vld [vmem:[%s3 + $0x6c] sm:$0xf]
      %v1047 = vld [vmem:[%s3 + $0x70] sm:$0xf]
      %v1048 = vld [vmem:[%s3 + $0x74] sm:$0xf]
      %v1049 = vld [vmem:[%s3 + $0x78] sm:$0xf]
      %v1050 = vld [vmem:[%s3 + $0x7c] sm:$0xf]
      %v1051 = vld [vmem:[%s3 + $0x80] sm:$0xf]
      %v1052 = vld [vmem:[%s3 + $0x84] sm:$0xf]
      %v1053 = vld [vmem:[%s3 + $0x88] sm:$0xf]
      %v1054 = vld [vmem:[%s3 + $0x8c] sm:$0xf]
      %v1055 = vld [vmem:[%s3 + $0x90] sm:$0xf]
      %v1056 = vld [vmem:[%s3 + $0x94] sm:$0xf]
      %v1057 = vld [vmem:[%s3 + $0x98] sm:$0xf]
      %v1058 = vld [vmem:[%s3 + $0x9c] sm:$0xf]
      %v1059 = vld [vmem:[%s3 + $0xa0] sm:$0xf]
      %v1060 = vld [vmem:[%s3 + $0xa4] sm:$0xf]
      %v1061 = vld [vmem:[%s3 + $0xa8] sm:$0xf]
      %v1062 = vld [vmem:[%s3 + $0xac] sm:$0xf]
      %v1063 = vld [vmem:[%s3 + $0xb0] sm:$0xf]
      %v1064 = vld [vmem:[%s3 + $0xb4] sm:$0xf]
      %v1065 = vld [vmem:[%s3 + $0xb8] sm:$0xf]
      %v1066 = vld [vmem:[%s3 + $0xbc] sm:$0xf]
      %v1067 = vld [vmem:[%s4] sm:$0x1]
      %v1069 = vperm.slane %v1067, 0
      %vm1071 = vsmask.f32 1280
      %v1073 = vshrl.u32 %v806, 16
      %v1075 = vrot.slane %v1073, 6
      %v1076 = vshll.u32 %v806, 16
      %v1078 = vrot.slane %v1076, 7
      %v1079 = vor.u32 %v1075, %v1078
      %v1080 = vrot.slane %v826, 6
      %v1081 = vrot.slane %v829, 7
      %v1082 = vor.u32 %v1080, %v1081
      %v1083 = vsel %vm1071, %v1079, %v1082
      %v1085 = vshrl.u32 %v832, 16
      %v1087 = vrot.slane %v1085, 6
      %v1088 = vshll.u32 %v832, 16
      %v1090 = vrot.slane %v1088, 7
      %v1091 = vor.u32 %v1087, %v1090
      %v1093 = vshrl.u32 %v841, 16
      %v1095 = vrot.slane %v1093, 6
      %v1096 = vshll.u32 %v841, 16
      %v1098 = vrot.slane %v1096, 7
      %v1099 = vor.u32 %v1095, %v1098
      %v1100 = vsel %vm1071, %v1091, %v1099
      %v1102 = vshrl.u32 %v986, 16
      %v1104 = vrot.slane %v1102, 6
      %v1105 = vshll.u32 %v986, 16
      %v1107 = vrot.slane %v1105, 7
      %v1108 = vor.u32 %v1104, %v1107
      %v1110 = vshrl.u32 %v988, 16
      %v1112 = vrot.slane %v1110, 6
      %v1113 = vshll.u32 %v988, 16
      %v1115 = vrot.slane %v1113, 7
      %v1116 = vor.u32 %v1112, %v1115
      %v1117 = vsel %vm1071, %v1108, %v1116
      %v1118 = vrot.slane %v834, 6
      %v1119 = vrot.slane %v837, 7
      %v1120 = vor.u32 %v1118, %v1119
      %v1121 = vsel %vm1071, %v1082, %v1120
      %v1123 = vshrl.u32 %v850, 16
      %v1125 = vrot.slane %v1123, 6
      %v1126 = vshll.u32 %v850, 16
      %v1128 = vrot.slane %v1126, 7
      %v1129 = vor.u32 %v1125, %v1128
      %v1130 = vsel %vm1071, %v1099, %v1129
      %v1132 = vshrl.u32 %v990, 16
      %v1134 = vrot.slane %v1132, 6
      %v1135 = vshll.u32 %v990, 16
      %v1137 = vrot.slane %v1135, 7
      %v1138 = vor.u32 %v1134, %v1137
      %v1139 = vsel %vm1071, %v1116, %v1138
      %v1140 = vrot.slane %v843, 6
      %v1141 = vrot.slane %v846, 7
      %v1142 = vor.u32 %v1140, %v1141
      %v1143 = vsel %vm1071, %v1120, %v1142
      %v1145 = vshrl.u32 %v859, 16
      %v1147 = vrot.slane %v1145, 6
      %v1148 = vshll.u32 %v859, 16
      %v1150 = vrot.slane %v1148, 7
      %v1151 = vor.u32 %v1147, %v1150
      %v1152 = vsel %vm1071, %v1129, %v1151
      %v1154 = vshrl.u32 %v992, 16
      %v1156 = vrot.slane %v1154, 6
      %v1157 = vshll.u32 %v992, 16
      %v1159 = vrot.slane %v1157, 7
      %v1160 = vor.u32 %v1156, %v1159
      %v1161 = vsel %vm1071, %v1138, %v1160
      %v1162 = vrot.slane %v852, 6
      %v1163 = vrot.slane %v855, 7
      %v1164 = vor.u32 %v1162, %v1163
      %v1165 = vsel %vm1071, %v1142, %v1164
      %v1167 = vshrl.u32 %v868, 16
      %v1169 = vrot.slane %v1167, 6
      %v1170 = vshll.u32 %v868, 16
      %v1172 = vrot.slane %v1170, 7
      %v1173 = vor.u32 %v1169, %v1172
      %v1174 = vsel %vm1071, %v1151, %v1173
      %v1176 = vshrl.u32 %v994, 16
      %v1178 = vrot.slane %v1176, 6
      %v1179 = vshll.u32 %v994, 16
      %v1181 = vrot.slane %v1179, 7
      %v1182 = vor.u32 %v1178, %v1181
      %v1183 = vsel %vm1071, %v1160, %v1182
      %v1184 = vrot.slane %v861, 6
      %v1185 = vrot.slane %v864, 7
      %v1186 = vor.u32 %v1184, %v1185
      %v1187 = vsel %vm1071, %v1164, %v1186
      %v1189 = vshrl.u32 %v877, 16
      %v1191 = vrot.slane %v1189, 6
      %v1192 = vshll.u32 %v877, 16
      %v1194 = vrot.slane %v1192, 7
      %v1195 = vor.u32 %v1191, %v1194
      %v1196 = vsel %vm1071, %v1173, %v1195
      %v1198 = vshrl.u32 %v996, 16
      %v1200 = vrot.slane %v1198, 6
      %v1201 = vshll.u32 %v996, 16
      %v1203 = vrot.slane %v1201, 7
      %v1204 = vor.u32 %v1200, %v1203
      %v1205 = vsel %vm1071, %v1182, %v1204
      %v1206 = vrot.slane %v870, 6
      %v1207 = vrot.slane %v873, 7
      %v1208 = vor.u32 %v1206, %v1207
      %v1209 = vsel %vm1071, %v1186, %v1208
      %v1211 = vshrl.u32 %v886, 16
      %v1213 = vrot.slane %v1211, 6
      %v1214 = vshll.u32 %v886, 16
      %v1216 = vrot.slane %v1214, 7
      %v1217 = vor.u32 %v1213, %v1216
      %v1218 = vsel %vm1071, %v1195, %v1217
      %v1220 = vshrl.u32 %v998, 16
      %v1222 = vrot.slane %v1220, 6
      %v1223 = vshll.u32 %v998, 16
      %v1225 = vrot.slane %v1223, 7
      %v1226 = vor.u32 %v1222, %v1225
      %v1227 = vsel %vm1071, %v1204, %v1226
      %v1228 = vrot.slane %v879, 6
      %v1229 = vrot.slane %v882, 7
      %v1230 = vor.u32 %v1228, %v1229
      %v1231 = vsel %vm1071, %v1208, %v1230
      %v1233 = vshrl.u32 %v895, 16
      %v1235 = vrot.slane %v1233, 6
      %v1236 = vshll.u32 %v895, 16
      %v1238 = vrot.slane %v1236, 7
      %v1239 = vor.u32 %v1235, %v1238
      %v1240 = vsel %vm1071, %v1217, %v1239
      %v1242 = vshrl.u32 %v1000, 16
      %v1244 = vrot.slane %v1242, 6
      %v1245 = vshll.u32 %v1000, 16
      %v1247 = vrot.slane %v1245, 7
      %v1248 = vor.u32 %v1244, %v1247
      %v1249 = vsel %vm1071, %v1226, %v1248
      %v1250 = vrot.slane %v888, 6
      %v1251 = vrot.slane %v891, 7
      %v1252 = vor.u32 %v1250, %v1251
      %v1253 = vsel %vm1071, %v1230, %v1252
      %v1255 = vshrl.u32 %v904, 16
      %v1257 = vrot.slane %v1255, 6
      %v1258 = vshll.u32 %v904, 16
      %v1260 = vrot.slane %v1258, 7
      %v1261 = vor.u32 %v1257, %v1260
      %v1262 = vsel %vm1071, %v1239, %v1261
      %v1264 = vshrl.u32 %v1002, 16
      %v1266 = vrot.slane %v1264, 6
      %v1267 = vshll.u32 %v1002, 16
      %v1269 = vrot.slane %v1267, 7
      %v1270 = vor.u32 %v1266, %v1269
      %v1271 = vsel %vm1071, %v1248, %v1270
      %v1272 = vrot.slane %v897, 6
      %v1273 = vrot.slane %v900, 7
      %v1274 = vor.u32 %v1272, %v1273
      %v1275 = vsel %vm1071, %v1252, %v1274
      %v1277 = vshrl.u32 %v913, 16
      %v1279 = vrot.slane %v1277, 6
      %v1280 = vshll.u32 %v913, 16
      %v1282 = vrot.slane %v1280, 7
      %v1283 = vor.u32 %v1279, %v1282
      %v1284 = vsel %vm1071, %v1261, %v1283
      %v1286 = vshrl.u32 %v1004, 16
      %v1288 = vrot.slane %v1286, 6
      %v1289 = vshll.u32 %v1004, 16
      %v1291 = vrot.slane %v1289, 7
      %v1292 = vor.u32 %v1288, %v1291
      %v1293 = vsel %vm1071, %v1270, %v1292
      %v1294 = vrot.slane %v906, 6
      %v1295 = vrot.slane %v909, 7
      %v1296 = vor.u32 %v1294, %v1295
      %v1297 = vsel %vm1071, %v1274, %v1296
      %v1299 = vshrl.u32 %v922, 16
      %v1301 = vrot.slane %v1299, 6
      %v1302 = vshll.u32 %v922, 16
      %v1304 = vrot.slane %v1302, 7
      %v1305 = vor.u32 %v1301, %v1304
      %v1306 = vsel %vm1071, %v1283, %v1305
      %v1308 = vshrl.u32 %v1006, 16
      %v1310 = vrot.slane %v1308, 6
      %v1311 = vshll.u32 %v1006, 16
      %v1313 = vrot.slane %v1311, 7
      %v1314 = vor.u32 %v1310, %v1313
      %v1315 = vsel %vm1071, %v1292, %v1314
      %v1316 = vrot.slane %v915, 6
      %v1317 = vrot.slane %v918, 7
      %v1318 = vor.u32 %v1316, %v1317
      %v1319 = vsel %vm1071, %v1296, %v1318
      %v1321 = vshrl.u32 %v931, 16
      %v1323 = vrot.slane %v1321, 6
      %v1324 = vshll.u32 %v931, 16
      %v1326 = vrot.slane %v1324, 7
      %v1327 = vor.u32 %v1323, %v1326
      %v1328 = vsel %vm1071, %v1305, %v1327
      %v1330 = vshrl.u32 %v1008, 16
      %v1332 = vrot.slane %v1330, 6
      %v1333 = vshll.u32 %v1008, 16
      %v1335 = vrot.slane %v1333, 7
      %v1336 = vor.u32 %v1332, %v1335
      %v1337 = vsel %vm1071, %v1314, %v1336
      %v1338 = vrot.slane %v924, 6
      %v1339 = vrot.slane %v927, 7
      %v1340 = vor.u32 %v1338, %v1339
      %v1341 = vsel %vm1071, %v1318, %v1340
      %v1343 = vshrl.u32 %v940, 16
      %v1345 = vrot.slane %v1343, 6
      %v1346 = vshll.u32 %v940, 16
      %v1348 = vrot.slane %v1346, 7
      %v1349 = vor.u32 %v1345, %v1348
      %v1350 = vsel %vm1071, %v1327, %v1349
      %v1352 = vshrl.u32 %v1010, 16
      %v1354 = vrot.slane %v1352, 6
      %v1355 = vshll.u32 %v1010, 16
      %v1357 = vrot.slane %v1355, 7
      %v1358 = vor.u32 %v1354, %v1357
      %v1359 = vsel %vm1071, %v1336, %v1358
      %v1360 = vrot.slane %v933, 6
      %v1361 = vrot.slane %v936, 7
      %v1362 = vor.u32 %v1360, %v1361
      %v1363 = vsel %vm1071, %v1340, %v1362
      %v1365 = vshrl.u32 %v949, 16
      %v1367 = vrot.slane %v1365, 6
      %v1368 = vshll.u32 %v949, 16
      %v1370 = vrot.slane %v1368, 7
      %v1371 = vor.u32 %v1367, %v1370
      %v1372 = vsel %vm1071, %v1349, %v1371
      %v1374 = vshrl.u32 %v1012, 16
      %v1376 = vrot.slane %v1374, 6
      %v1377 = vshll.u32 %v1012, 16
      %v1379 = vrot.slane %v1377, 7
      %v1380 = vor.u32 %v1376, %v1379
      %v1381 = vsel %vm1071, %v1358, %v1380
      %v1382 = vrot.slane %v942, 6
      %v1383 = vrot.slane %v945, 7
      %v1384 = vor.u32 %v1382, %v1383
      %v1385 = vsel %vm1071, %v1362, %v1384
      %v1387 = vshrl.u32 %v958, 16
      %v1389 = vrot.slane %v1387, 6
      %v1390 = vshll.u32 %v958, 16
      %v1392 = vrot.slane %v1390, 7
      %v1393 = vor.u32 %v1389, %v1392
      %v1394 = vsel %vm1071, %v1371, %v1393
      %v1396 = vshrl.u32 %v1014, 16
      %v1398 = vrot.slane %v1396, 6
      %v1399 = vshll.u32 %v1014, 16
      %v1401 = vrot.slane %v1399, 7
      %v1402 = vor.u32 %v1398, %v1401
      %v1403 = vsel %vm1071, %v1380, %v1402
      %v1404 = vrot.slane %v951, 6
      %v1405 = vrot.slane %v954, 7
      %v1406 = vor.u32 %v1404, %v1405
      %v1407 = vsel %vm1071, %v1384, %v1406
      %v1409 = vshrl.u32 %v967, 16
      %v1411 = vrot.slane %v1409, 6
      %v1412 = vshll.u32 %v967, 16
      %v1414 = vrot.slane %v1412, 7
      %v1415 = vor.u32 %v1411, %v1414
      %v1416 = vsel %vm1071, %v1393, %v1415
      %v1418 = vshrl.u32 %v1016, 16
      %v1420 = vrot.slane %v1418, 6
      %v1421 = vshll.u32 %v1016, 16
      %v1423 = vrot.slane %v1421, 7
      %v1424 = vor.u32 %v1420, %v1423
      %v1425 = vsel %vm1071, %v1402, %v1424
      %v1426 = vrot.slane %v960, 6
      %v1427 = vrot.slane %v963, 7
      %v1428 = vor.u32 %v1426, %v1427
      %v1429 = vsel %vm1071, %v1406, %v1428
      %v1431 = vshrl.u32 %v966, 16
      %v1433 = vrot.slane %v1431, 6
      %v1434 = vshll.u32 %v966, 16
      %v1436 = vrot.slane %v1434, 7
      %v1437 = vor.u32 %v1433, %v1436
      %v1438 = vsel %vm1071, %v1415, %v1437
      %v1440 = vshrl.u32 %v1018, 16
      %v1442 = vrot.slane %v1440, 6
      %v1443 = vshll.u32 %v1018, 16
      %v1445 = vrot.slane %v1443, 7
      %v1446 = vor.u32 %v1442, %v1445
      %v1447 = vsel %vm1071, %v1424, %v1446
      %v1544 = vunpack.c.l.b16 %v1019
      %v1545 = vunpack.c.l.b16 %v1020
      %v1546 = vunpack.c.l.b16 %v1021
      %v1547 = vunpack.c.l.b16 %v1022
      %v1548 = vunpack.c.l.b16 %v1023
      %v1549 = vunpack.c.l.b16 %v1024
      %v1550 = vunpack.c.l.b16 %v1025
      %v1551 = vunpack.c.l.b16 %v1026
      %v1552 = vunpack.c.l.b16 %v1027
      %v1553 = vunpack.c.l.b16 %v1028
      %v1554 = vunpack.c.l.b16 %v1029
      %v1555 = vunpack.c.l.b16 %v1030
      %v1556 = vunpack.c.l.b16 %v1031
      %v1557 = vunpack.c.l.b16 %v1032
      %v1558 = vunpack.c.l.b16 %v1033
      %v1559 = vunpack.c.l.b16 %v1034
      %v1560 = vunpack.c.l.b16 %v1035
      %v1561 = vunpack.c.l.b16 %v1036
      %v1562 = vunpack.c.l.b16 %v1037
      %v1563 = vunpack.c.l.b16 %v1038
      %v1564 = vunpack.c.l.b16 %v1039
      %v1565 = vunpack.c.l.b16 %v1040
      %v1566 = vunpack.c.l.b16 %v1041
      %v1567 = vunpack.c.l.b16 %v1042
      %v1568 = vunpack.c.l.b16 %v1043
      %v1569 = vunpack.c.l.b16 %v1044
      %v1570 = vunpack.c.l.b16 %v1045
      %v1571 = vunpack.c.l.b16 %v1046
      %v1572 = vunpack.c.l.b16 %v1047
      %v1573 = vunpack.c.l.b16 %v1048
      %v1574 = vunpack.c.l.b16 %v1049
      %v1575 = vunpack.c.l.b16 %v1050
      %v1576 = vunpack.c.l.b16 %v1051
      %v1577 = vunpack.c.l.b16 %v1052
      %v1578 = vunpack.c.l.b16 %v1053
      %v1579 = vunpack.c.l.b16 %v1054
      %v1580 = vunpack.c.l.b16 %v1055
      %v1581 = vunpack.c.l.b16 %v1056
      %v1582 = vunpack.c.l.b16 %v1057
      %v1583 = vunpack.c.l.b16 %v1058
      %v1584 = vunpack.c.l.b16 %v1059
      %v1585 = vunpack.c.l.b16 %v1060
      %v1586 = vunpack.c.l.b16 %v1061
      %v1587 = vunpack.c.l.b16 %v1062
      %v1588 = vunpack.c.l.b16 %v1063
      %v1589 = vunpack.c.l.b16 %v1064
      %v1590 = vunpack.c.l.b16 %v1065
      %v1591 = vunpack.c.l.b16 %v1066
      %v1592 = vpack.c.b16 %v1545, %v1544
      %v1593 = vpack.c.b16 %v1547, %v1546
      %v1594 = vpack.c.b16 %v1549, %v1548
      %v1595 = vpack.c.b16 %v1551, %v1550
      %v1596 = vpack.c.b16 %v1553, %v1552
      %v1597 = vpack.c.b16 %v1555, %v1554
      %v1598 = vpack.c.b16 %v1557, %v1556
      %v1599 = vpack.c.b16 %v1559, %v1558
      %v1600 = vpack.c.b16 %v1561, %v1560
      %v1601 = vpack.c.b16 %v1563, %v1562
      %v1602 = vpack.c.b16 %v1565, %v1564
      %v1603 = vpack.c.b16 %v1567, %v1566
      %v1604 = vpack.c.b16 %v1569, %v1568
      %v1605 = vpack.c.b16 %v1571, %v1570
      %v1606 = vpack.c.b16 %v1573, %v1572
      %v1607 = vpack.c.b16 %v1575, %v1574
      %v1608 = vpack.c.b16 %v1577, %v1576
      %v1609 = vpack.c.b16 %v1579, %v1578
      %v1610 = vpack.c.b16 %v1581, %v1580
      %v1611 = vpack.c.b16 %v1583, %v1582
      %v1612 = vpack.c.b16 %v1585, %v1584
      %v1613 = vpack.c.b16 %v1587, %v1586
      %v1614 = vpack.c.b16 %v1589, %v1588
      %v1615 = vpack.c.b16 %v1591, %v1590
      %1640 = vmatpush.bf16.msra.mxu0 %v1599
      %1641 = vmatpush.bf16.msra.mxu0 %v1598
      %1642 = vmatpush.bf16.msra.mxu0 %v1597
      %1643 = vmatpush.bf16.msra.mxu0 %v1596
      %1644 = vmatpush.bf16.msra.mxu0 %v1595
      %1645 = vmatpush.bf16.msra.mxu0 %v1594
      %1646 = vmatpush.bf16.msra.mxu0 %v1593
      %1647 = vmatpush.bf16.msra.mxu0 %v1592
      %1648 = vmatmul.bf16.gmra.mxu0 %v1083
      %v1649 = vpop.f32.mrf.mxu0
      %v1650 = vadd.f32 %v1069, %v1649
      %v1651 = vpop.f32.mrf.mxu0
      %v1652 = vadd.f32 %v1069, %v1651
      %1653 = vmatmul.bf16.gmra.mxu0 %v1121
      %v1654 = vpop.f32.mrf.mxu0
      %v1655 = vadd.f32 %v1069, %v1654
      %v1656 = vpop.f32.mrf.mxu0
      %v1657 = vadd.f32 %v1069, %v1656
      %1658 = vmatmul.bf16.gmra.mxu0 %v1143
      %v1659 = vpop.f32.mrf.mxu0
      %v1660 = vadd.f32 %v1069, %v1659
      %v1661 = vpop.f32.mrf.mxu0
      %v1662 = vadd.f32 %v1069, %v1661
      %1663 = vmatmul.bf16.gmra.mxu0 %v1165
      %v1664 = vpop.f32.mrf.mxu0
      %v1665 = vadd.f32 %v1069, %v1664
      %v1666 = vpop.f32.mrf.mxu0
      %v1667 = vadd.f32 %v1069, %v1666
      %1668 = vmatmul.bf16.gmra.mxu0 %v1187
      %v1669 = vpop.f32.mrf.mxu0
      %v1670 = vadd.f32 %v1069, %v1669
      %v1671 = vpop.f32.mrf.mxu0
      %v1672 = vadd.f32 %v1069, %v1671
      %1673 = vmatmul.bf16.gmra.mxu0 %v1209
      %v1674 = vpop.f32.mrf.mxu0
      %v1675 = vadd.f32 %v1069, %v1674
      %v1676 = vpop.f32.mrf.mxu0
      %v1677 = vadd.f32 %v1069, %v1676
      %1678 = vmatmul.bf16.gmra.mxu0 %v1231
      %v1679 = vpop.f32.mrf.mxu0
      %v1680 = vadd.f32 %v1069, %v1679
      %v1681 = vpop.f32.mrf.mxu0
      %v1682 = vadd.f32 %v1069, %v1681
      %1683 = vmatmul.bf16.gmra.mxu0 %v1253
      %v1684 = vpop.f32.mrf.mxu0
      %v1685 = vadd.f32 %v1069, %v1684
      %v1686 = vpop.f32.mrf.mxu0
      %v1687 = vadd.f32 %v1069, %v1686
      %1688 = vmatmul.bf16.gmra.mxu0 %v1275
      %v1689 = vpop.f32.mrf.mxu0
      %v1690 = vadd.f32 %v1069, %v1689
      %v1691 = vpop.f32.mrf.mxu0
      %v1692 = vadd.f32 %v1069, %v1691
      %1693 = vmatmul.bf16.gmra.mxu0 %v1297
      %v1694 = vpop.f32.mrf.mxu0
      %v1695 = vadd.f32 %v1069, %v1694
      %v1696 = vpop.f32.mrf.mxu0
      %v1697 = vadd.f32 %v1069, %v1696
      %1698 = vmatmul.bf16.gmra.mxu0 %v1319
      %v1699 = vpop.f32.mrf.mxu0
      %v1700 = vadd.f32 %v1069, %v1699
      %v1701 = vpop.f32.mrf.mxu0
      %v1702 = vadd.f32 %v1069, %v1701
      %1703 = vmatmul.bf16.gmra.mxu0 %v1341
      %v1704 = vpop.f32.mrf.mxu0
      %v1705 = vadd.f32 %v1069, %v1704
      %v1706 = vpop.f32.mrf.mxu0
      %v1707 = vadd.f32 %v1069, %v1706
      %1708 = vmatmul.bf16.gmra.mxu0 %v1363
      %v1709 = vpop.f32.mrf.mxu0
      %v1710 = vadd.f32 %v1069, %v1709
      %v1711 = vpop.f32.mrf.mxu0
      %v1712 = vadd.f32 %v1069, %v1711
      %1713 = vmatmul.bf16.gmra.mxu0 %v1385
      %v1714 = vpop.f32.mrf.mxu0
      %v1715 = vadd.f32 %v1069, %v1714
      %v1716 = vpop.f32.mrf.mxu0
      %v1717 = vadd.f32 %v1069, %v1716
      %1718 = vmatmul.bf16.gmra.mxu0 %v1407
      %v1719 = vpop.f32.mrf.mxu0
      %v1720 = vadd.f32 %v1069, %v1719
      %v1721 = vpop.f32.mrf.mxu0
      %v1722 = vadd.f32 %v1069, %v1721
      %1723 = vmatmul.bf16.gmra.mxu0 %v1429
      %v1724 = vpop.f32.mrf.mxu0
      %v1725 = vadd.f32 %v1069, %v1724
      %v1726 = vpop.f32.mrf.mxu0
      %v1727 = vadd.f32 %v1069, %v1726
      %1728 = vdwg.mxu0
      %1729 = vmatpush.bf16.msra.mxu0 %v1607
      %1730 = vmatpush.bf16.msra.mxu0 %v1606
      %1731 = vmatpush.bf16.msra.mxu0 %v1605
      %1732 = vmatpush.bf16.msra.mxu0 %v1604
      %1733 = vmatpush.bf16.msra.mxu0 %v1603
      %1734 = vmatpush.bf16.msra.mxu0 %v1602
      %1735 = vmatpush.bf16.msra.mxu0 %v1601
      %1736 = vmatpush.bf16.msra.mxu0 %v1600
      %1737 = vmatmul.bf16.gmra.mxu0 %v1100
      %v1738 = vpop.f32.mrf.mxu0
      %v1739 = vadd.f32 %v1650, %v1738
      %v1740 = vpop.f32.mrf.mxu0
      %v1741 = vadd.f32 %v1652, %v1740
      %1742 = vmatmul.bf16.gmra.mxu0 %v1130
      %v1743 = vpop.f32.mrf.mxu0
      %v1744 = vadd.f32 %v1655, %v1743
      %v1745 = vpop.f32.mrf.mxu0
      %v1746 = vadd.f32 %v1657, %v1745
      %1747 = vmatmul.bf16.gmra.mxu0 %v1152
      %v1748 = vpop.f32.mrf.mxu0
      %v1749 = vadd.f32 %v1660, %v1748
      %v1750 = vpop.f32.mrf.mxu0
      %v1751 = vadd.f32 %v1662, %v1750
      %1752 = vmatmul.bf16.gmra.mxu0 %v1174
      %v1753 = vpop.f32.mrf.mxu0
      %v1754 = vadd.f32 %v1665, %v1753
      %v1755 = vpop.f32.mrf.mxu0
      %v1756 = vadd.f32 %v1667, %v1755
      %1757 = vmatmul.bf16.gmra.mxu0 %v1196
      %v1758 = vpop.f32.mrf.mxu0
      %v1759 = vadd.f32 %v1670, %v1758
      %v1760 = vpop.f32.mrf.mxu0
      %v1761 = vadd.f32 %v1672, %v1760
      %1762 = vmatmul.bf16.gmra.mxu0 %v1218
      %v1763 = vpop.f32.mrf.mxu0
      %v1764 = vadd.f32 %v1675, %v1763
      %v1765 = vpop.f32.mrf.mxu0
      %v1766 = vadd.f32 %v1677, %v1765
      %1767 = vmatmul.bf16.gmra.mxu0 %v1240
      %v1768 = vpop.f32.mrf.mxu0
      %v1769 = vadd.f32 %v1680, %v1768
      %v1770 = vpop.f32.mrf.mxu0
      %v1771 = vadd.f32 %v1682, %v1770
      %1772 = vmatmul.bf16.gmra.mxu0 %v1262
      %v1773 = vpop.f32.mrf.mxu0
      %v1774 = vadd.f32 %v1685, %v1773
      %v1775 = vpop.f32.mrf.mxu0
      %v1776 = vadd.f32 %v1687, %v1775
      %1777 = vmatmul.bf16.gmra.mxu0 %v1284
      %v1778 = vpop.f32.mrf.mxu0
      %v1779 = vadd.f32 %v1690, %v1778
      %v1780 = vpop.f32.mrf.mxu0
      %v1781 = vadd.f32 %v1692, %v1780
      %1782 = vmatmul.bf16.gmra.mxu0 %v1306
      %v1783 = vpop.f32.mrf.mxu0
      %v1784 = vadd.f32 %v1695, %v1783
      %v1785 = vpop.f32.mrf.mxu0
      %v1786 = vadd.f32 %v1697, %v1785
      %1787 = vmatmul.bf16.gmra.mxu0 %v1328
      %v1788 = vpop.f32.mrf.mxu0
      %v1789 = vadd.f32 %v1700, %v1788
      %v1790 = vpop.f32.mrf.mxu0
      %v1791 = vadd.f32 %v1702, %v1790
      %1792 = vmatmul.bf16.gmra.mxu0 %v1350
      %v1793 = vpop.f32.mrf.mxu0
      %v1794 = vadd.f32 %v1705, %v1793
      %v1795 = vpop.f32.mrf.mxu0
      %v1796 = vadd.f32 %v1707, %v1795
      %1797 = vmatmul.bf16.gmra.mxu0 %v1372
      %v1798 = vpop.f32.mrf.mxu0
      %v1799 = vadd.f32 %v1710, %v1798
      %v1800 = vpop.f32.mrf.mxu0
      %v1801 = vadd.f32 %v1712, %v1800
      %1802 = vmatmul.bf16.gmra.mxu0 %v1394
      %v1803 = vpop.f32.mrf.mxu0
      %v1804 = vadd.f32 %v1715, %v1803
      %v1805 = vpop.f32.mrf.mxu0
      %v1806 = vadd.f32 %v1717, %v1805
      %1807 = vmatmul.bf16.gmra.mxu0 %v1416
      %v1808 = vpop.f32.mrf.mxu0
      %v1809 = vadd.f32 %v1720, %v1808
      %v1810 = vpop.f32.mrf.mxu0
      %v1811 = vadd.f32 %v1722, %v1810
      %1812 = vmatmul.bf16.gmra.mxu0 %v1438
      %v1813 = vpop.f32.mrf.mxu0
      %v1814 = vadd.f32 %v1725, %v1813
      %v1815 = vpop.f32.mrf.mxu0
      %v1816 = vadd.f32 %v1727, %v1815
      %1817 = vdwg.mxu0
      %1818 = vmatpush.bf16.msra.mxu0 %v1615
      %1819 = vmatpush.bf16.msra.mxu0 %v1614
      %1820 = vmatpush.bf16.msra.mxu0 %v1613
      %1821 = vmatpush.bf16.msra.mxu0 %v1612
      %1822 = vmatpush.bf16.msra.mxu0 %v1611
      %1823 = vmatpush.bf16.msra.mxu0 %v1610
      %1824 = vmatpush.bf16.msra.mxu0 %v1609
      %1825 = vmatpush.bf16.msra.mxu0 %v1608
      %1826 = vmatmul.bf16.gmra.mxu0 %v1117
      %v1827 = vpop.f32.mrf.mxu0
      %v1828 = vadd.f32 %v1739, %v1827
      %v1829 = vpop.f32.mrf.mxu0
      %v1830 = vadd.f32 %v1741, %v1829
      %1831 = vmatmul.bf16.gmra.mxu0 %v1139
      %v1832 = vpop.f32.mrf.mxu0
      %v1833 = vadd.f32 %v1744, %v1832
      %v1834 = vpop.f32.mrf.mxu0
      %v1835 = vadd.f32 %v1746, %v1834
      %1836 = vmatmul.bf16.gmra.mxu0 %v1161
      %v1837 = vpop.f32.mrf.mxu0
      %v1838 = vadd.f32 %v1749, %v1837
      %v1839 = vpop.f32.mrf.mxu0
      %v1840 = vadd.f32 %v1751, %v1839
      %1841 = vmatmul.bf16.gmra.mxu0 %v1183
      %v1842 = vpop.f32.mrf.mxu0
      %v1843 = vadd.f32 %v1754, %v1842
      %v1844 = vpop.f32.mrf.mxu0
      %v1845 = vadd.f32 %v1756, %v1844
      %1846 = vmatmul.bf16.gmra.mxu0 %v1205
      %v1847 = vpop.f32.mrf.mxu0
      %v1848 = vadd.f32 %v1759, %v1847
      %v1849 = vpop.f32.mrf.mxu0
      %v1850 = vadd.f32 %v1761, %v1849
      %1851 = vmatmul.bf16.gmra.mxu0 %v1227
      %v1852 = vpop.f32.mrf.mxu0
      %v1853 = vadd.f32 %v1764, %v1852
      %v1854 = vpop.f32.mrf.mxu0
      %v1855 = vadd.f32 %v1766, %v1854
      %1856 = vmatmul.bf16.gmra.mxu0 %v1249
      %v1857 = vpop.f32.mrf.mxu0
      %v1858 = vadd.f32 %v1769, %v1857
      %v1859 = vpop.f32.mrf.mxu0
      %v1860 = vadd.f32 %v1771, %v1859
      %1861 = vmatmul.bf16.gmra.mxu0 %v1271
      %v1862 = vpop.f32.mrf.mxu0
      %v1863 = vadd.f32 %v1774, %v1862
      %v1864 = vpop.f32.mrf.mxu0
      %v1865 = vadd.f32 %v1776, %v1864
      %1866 = vmatmul.bf16.gmra.mxu0 %v1293
      %v1867 = vpop.f32.mrf.mxu0
      %v1868 = vadd.f32 %v1779, %v1867
      %v1869 = vpop.f32.mrf.mxu0
      %v1870 = vadd.f32 %v1781, %v1869
      %1871 = vmatmul.bf16.gmra.mxu0 %v1315
      %v1872 = vpop.f32.mrf.mxu0
      %v1873 = vadd.f32 %v1784, %v1872
      %v1874 = vpop.f32.mrf.mxu0
      %v1875 = vadd.f32 %v1786, %v1874
      %1876 = vmatmul.bf16.gmra.mxu0 %v1337
      %v1877 = vpop.f32.mrf.mxu0
      %v1878 = vadd.f32 %v1789, %v1877
      %v1879 = vpop.f32.mrf.mxu0
      %v1880 = vadd.f32 %v1791, %v1879
      %1881 = vmatmul.bf16.gmra.mxu0 %v1359
      %v1882 = vpop.f32.mrf.mxu0
      %v1883 = vadd.f32 %v1794, %v1882
      %v1884 = vpop.f32.mrf.mxu0
      %v1885 = vadd.f32 %v1796, %v1884
      %1886 = vmatmul.bf16.gmra.mxu0 %v1381
      %v1887 = vpop.f32.mrf.mxu0
      %v1888 = vadd.f32 %v1799, %v1887
      %v1889 = vpop.f32.mrf.mxu0
      %v1890 = vadd.f32 %v1801, %v1889
      %1891 = vmatmul.bf16.gmra.mxu0 %v1403
      %v1892 = vpop.f32.mrf.mxu0
      %v1893 = vadd.f32 %v1804, %v1892
      %v1894 = vpop.f32.mrf.mxu0
      %v1895 = vadd.f32 %v1806, %v1894
      %1896 = vmatmul.bf16.gmra.mxu0 %v1425
      %v1897 = vpop.f32.mrf.mxu0
      %v1898 = vadd.f32 %v1809, %v1897
      %v1899 = vpop.f32.mrf.mxu0
      %v1900 = vadd.f32 %v1811, %v1899
      %1901 = vmatmul.bf16.gmra.mxu0 %v1447
      %v1902 = vpop.f32.mrf.mxu0
      %v1903 = vadd.f32 %v1814, %v1902
      %v1904 = vpop.f32.mrf.mxu0
      %v1905 = vadd.f32 %v1816, %v1904
      %1906 = vdwg.mxu0
      %v1907 = vunpack.c.l.bf16 %v392
      %v1908 = vunpack.c.l.bf16 %v393
      %v1909 = vunpack.c.l.bf16 %v394
      %v1910 = vunpack.c.l.bf16 %v395
      %v1911 = vunpack.c.l.bf16 %v396
      %v1912 = vunpack.c.l.bf16 %v397
      %v1913 = vunpack.c.l.bf16 %v398
      %v1914 = vunpack.c.l.bf16 %v399
      %v1915 = vunpack.c.l.bf16 %v400
      %v1916 = vunpack.c.l.bf16 %v401
      %v1917 = vunpack.c.l.bf16 %v402
      %v1918 = vunpack.c.l.bf16 %v403
      %v1919 = vunpack.c.l.bf16 %v404
      %v1920 = vunpack.c.l.bf16 %v405
      %v1921 = vunpack.c.l.bf16 %v406
      %v1922 = vunpack.c.l.bf16 %v407
      %v1923 = vunpack.c.l.bf16 %v408
      %v1924 = vunpack.c.l.bf16 %v409
      %v1925 = vunpack.c.l.bf16 %v410
      %v1926 = vunpack.c.l.bf16 %v411
      %v1927 = vunpack.c.l.bf16 %v412
      %v1928 = vunpack.c.l.bf16 %v413
      %v1929 = vunpack.c.l.bf16 %v414
      %v1930 = vunpack.c.l.bf16 %v415
      %v1931 = vunpack.c.l.bf16 %v416
      %v1932 = vunpack.c.l.bf16 %v417
      %v1933 = vunpack.c.l.bf16 %v418
      %v1934 = vunpack.c.l.bf16 %v419
      %v1935 = vunpack.c.l.bf16 %v420
      %v1936 = vunpack.c.l.bf16 %v421
      %v1937 = vunpack.c.l.bf16 %v422
      %v1938 = vunpack.c.l.bf16 %v423
      %v1939 = vadd.f32 %v1828, %v1907
      %v1940 = vadd.f32 %v1830, %v1908
      %v1941 = vadd.f32 %v1833, %v1909
      %v1942 = vadd.f32 %v1835, %v1910
      %v1943 = vadd.f32 %v1838, %v1911
      %v1944 = vadd.f32 %v1840, %v1912
      %v1945 = vadd.f32 %v1843, %v1913
      %v1946 = vadd.f32 %v1845, %v1914
      %v1947 = vadd.f32 %v1848, %v1915
      %v1948 = vadd.f32 %v1850, %v1916
      %v1949 = vadd.f32 %v1853, %v1917
      %v1950 = vadd.f32 %v1855, %v1918
      %v1951 = vadd.f32 %v1858, %v1919
      %v1952 = vadd.f32 %v1860, %v1920
      %v1953 = vadd.f32 %v1863, %v1921
      %v1954 = vadd.f32 %v1865, %v1922
      %v1955 = vadd.f32 %v1868, %v1923
      %v1956 = vadd.f32 %v1870, %v1924
      %v1957 = vadd.f32 %v1873, %v1925
      %v1958 = vadd.f32 %v1875, %v1926
      %v1959 = vadd.f32 %v1878, %v1927
      %v1960 = vadd.f32 %v1880, %v1928
      %v1961 = vadd.f32 %v1883, %v1929
      %v1962 = vadd.f32 %v1885, %v1930
      %v1963 = vadd.f32 %v1888, %v1931
      %v1964 = vadd.f32 %v1890, %v1932
      %v1965 = vadd.f32 %v1893, %v1933
      %v1966 = vadd.f32 %v1895, %v1934
      %v1967 = vadd.f32 %v1898, %v1935
      %v1968 = vadd.f32 %v1900, %v1936
      %v1969 = vadd.f32 %v1903, %v1937
      %v1970 = vadd.f32 %v1905, %v1938
      %v1971 = vlaneseq
      %v1972 = vshrl.u32 %v1971, 7
      %v1973 = vadd.s32 %v1972, 8
      %v1974 = vadd.s32 %v1972, 16
      %v1975 = vadd.s32 %v1972, 24
      %v1976 = vadd.s32 %v1972, 32
      %v1977 = vadd.s32 %v1972, 40
      %v1978 = vadd.s32 %v1972, 48
      %v1979 = vadd.s32 %v1972, 56
      %v1980 = vadd.s32 %v1972, 64
      %v1981 = vadd.s32 %v1972, 72
      %v1982 = vadd.s32 %v1972, 80
      %v1983 = vadd.s32 %v1972, 88
      %v1984 = vadd.s32 %v1972, 96
      %v1985 = vadd.s32 %v1972, 104
      %v1986 = vadd.s32 %v1972, 112
      %v1987 = vadd.s32 %v1972, 120
      %v1988 = vadd.s32 %v1972, 128
      %v1989 = vadd.s32 %v1972, 136
      %v1990 = vadd.s32 %v1972, 144
      %v1991 = vadd.s32 %v1972, 152
      %v1992 = vadd.s32 %v1972, 160
      %v1993 = vadd.s32 %v1972, 168
      %v1994 = vadd.s32 %v1972, 176
      %v1995 = vadd.s32 %v1972, 184
      %v1996 = vadd.s32 %v1972, 192
      %v1997 = vadd.s32 %v1972, 200
      %v1998 = vadd.s32 %v1972, 208
      %v1999 = vadd.s32 %v1972, 216
      %v2000 = vadd.s32 %v1972, 224
      %v2001 = vadd.s32 %v1972, 232
      %v2002 = vadd.s32 %v1972, 240
      %v2003 = vadd.s32 %v1972, 248
      %s2004 = smul.u32 %s21, 256
      %v2005 = vstv %s2004
      %v2006 = vadd.s32 %v1972, %v2005
      %v2007 = vadd.s32 %v1973, %v2005
      %v2008 = vadd.s32 %v1974, %v2005
      %v2009 = vadd.s32 %v1975, %v2005
      %v2010 = vadd.s32 %v1976, %v2005
      %v2011 = vadd.s32 %v1977, %v2005
      %v2012 = vadd.s32 %v1978, %v2005
      %v2013 = vadd.s32 %v1979, %v2005
      %v2014 = vadd.s32 %v1980, %v2005
      %v2015 = vadd.s32 %v1981, %v2005
      %v2016 = vadd.s32 %v1982, %v2005
      %v2017 = vadd.s32 %v1983, %v2005
      %v2018 = vadd.s32 %v1984, %v2005
      %v2019 = vadd.s32 %v1985, %v2005
      %v2020 = vadd.s32 %v1986, %v2005
      %v2021 = vadd.s32 %v1987, %v2005
      %v2022 = vadd.s32 %v1988, %v2005
      %v2023 = vadd.s32 %v1989, %v2005
      %v2024 = vadd.s32 %v1990, %v2005
      %v2025 = vadd.s32 %v1991, %v2005
      %v2026 = vadd.s32 %v1992, %v2005
      %v2027 = vadd.s32 %v1993, %v2005
      %v2028 = vadd.s32 %v1994, %v2005
      %v2029 = vadd.s32 %v1995, %v2005
      %v2030 = vadd.s32 %v1996, %v2005
      %v2031 = vadd.s32 %v1997, %v2005
      %v2032 = vadd.s32 %v1998, %v2005
      %v2033 = vadd.s32 %v1999, %v2005
      %v2034 = vadd.s32 %v2000, %v2005
      %v2035 = vadd.s32 %v2001, %v2005
      %v2036 = vadd.s32 %v2002, %v2005
      %v2037 = vadd.s32 %v2003, %v2005
      %vm2038 = vcmp.ge.s32.totalorder %v2006, 16
      %vm2039 = vcmp.ge.s32.totalorder %v2007, 16
      %vm2040 = vcmp.ge.s32.totalorder %v2008, 16
      %vm2041 = vcmp.ge.s32.totalorder %v2009, 16
      %vm2042 = vcmp.ge.s32.totalorder %v2010, 16
      %vm2043 = vcmp.ge.s32.totalorder %v2011, 16
      %vm2044 = vcmp.ge.s32.totalorder %v2012, 16
      %vm2045 = vcmp.ge.s32.totalorder %v2013, 16
      %vm2046 = vcmp.ge.s32.totalorder %v2014, 16
      %vm2047 = vcmp.ge.s32.totalorder %v2015, 16
      %vm2048 = vcmp.ge.s32.totalorder %v2016, 16
      %vm2049 = vcmp.ge.s32.totalorder %v2017, 16
      %vm2050 = vcmp.ge.s32.totalorder %v2018, 16
      %vm2051 = vcmp.ge.s32.totalorder %v2019, 16
      %vm2052 = vcmp.ge.s32.totalorder %v2020, 16
      %vm2053 = vcmp.ge.s32.totalorder %v2021, 16
      %vm2054 = vcmp.ge.s32.totalorder %v2022, 16
      %vm2055 = vcmp.ge.s32.totalorder %v2023, 16
      %vm2056 = vcmp.ge.s32.totalorder %v2024, 16
      %vm2057 = vcmp.ge.s32.totalorder %v2025, 16
      %vm2058 = vcmp.ge.s32.totalorder %v2026, 16
      %vm2059 = vcmp.ge.s32.totalorder %v2027, 16
      %vm2060 = vcmp.ge.s32.totalorder %v2028, 16
      %vm2061 = vcmp.ge.s32.totalorder %v2029, 16
      %vm2062 = vcmp.ge.s32.totalorder %v2030, 16
      %vm2063 = vcmp.ge.s32.totalorder %v2031, 16
      %vm2064 = vcmp.ge.s32.totalorder %v2032, 16
      %vm2065 = vcmp.ge.s32.totalorder %v2033, 16
      %vm2066 = vcmp.ge.s32.totalorder %v2034, 16
      %vm2067 = vcmp.ge.s32.totalorder %v2035, 16
      %vm2068 = vcmp.ge.s32.totalorder %v2036, 16
      %vm2069 = vcmp.ge.s32.totalorder %v2037, 16
      %vm2070 = vcmp.lt.s32.totalorder %v2006, 216
      %vm2071 = vcmp.lt.s32.totalorder %v2007, 216
      %vm2072 = vcmp.lt.s32.totalorder %v2008, 216
      %vm2073 = vcmp.lt.s32.totalorder %v2009, 216
      %vm2074 = vcmp.lt.s32.totalorder %v2010, 216
      %vm2075 = vcmp.lt.s32.totalorder %v2011, 216
      %vm2076 = vcmp.lt.s32.totalorder %v2012, 216
      %vm2077 = vcmp.lt.s32.totalorder %v2013, 216
      %vm2078 = vcmp.lt.s32.totalorder %v2014, 216
      %vm2079 = vcmp.lt.s32.totalorder %v2015, 216
      %vm2080 = vcmp.lt.s32.totalorder %v2016, 216
      %vm2081 = vcmp.lt.s32.totalorder %v2017, 216
      %vm2082 = vcmp.lt.s32.totalorder %v2018, 216
      %vm2083 = vcmp.lt.s32.totalorder %v2019, 216
      %vm2084 = vcmp.lt.s32.totalorder %v2020, 216
      %vm2085 = vcmp.lt.s32.totalorder %v2021, 216
      %vm2086 = vcmp.lt.s32.totalorder %v2022, 216
      %vm2087 = vcmp.lt.s32.totalorder %v2023, 216
      %vm2088 = vcmp.lt.s32.totalorder %v2024, 216
      %vm2089 = vcmp.lt.s32.totalorder %v2025, 216
      %vm2090 = vcmp.lt.s32.totalorder %v2026, 216
      %vm2091 = vcmp.lt.s32.totalorder %v2027, 216
      %vm2092 = vcmp.lt.s32.totalorder %v2028, 216
      %vm2093 = vcmp.lt.s32.totalorder %v2029, 216
      %vm2094 = vcmp.lt.s32.totalorder %v2030, 216
      %vm2095 = vcmp.lt.s32.totalorder %v2031, 216
      %vm2096 = vcmp.lt.s32.totalorder %v2032, 216
      %vm2097 = vcmp.lt.s32.totalorder %v2033, 216
      %vm2098 = vcmp.lt.s32.totalorder %v2034, 216
      %vm2099 = vcmp.lt.s32.totalorder %v2035, 216
      %vm2100 = vcmp.lt.s32.totalorder %v2036, 216
      %vm2101 = vcmp.lt.s32.totalorder %v2037, 216
      %vm2102 = vmand %vm2038, %vm2070
      %vm2103 = vmand %vm2039, %vm2071
      %vm2104 = vmand %vm2040, %vm2072
      %vm2105 = vmand %vm2041, %vm2073
      %vm2106 = vmand %vm2042, %vm2074
      %vm2107 = vmand %vm2043, %vm2075
      %vm2108 = vmand %vm2044, %vm2076
      %vm2109 = vmand %vm2045, %vm2077
      %vm2110 = vmand %vm2046, %vm2078
      %vm2111 = vmand %vm2047, %vm2079
      %vm2112 = vmand %vm2048, %vm2080
      %vm2113 = vmand %vm2049, %vm2081
      %vm2114 = vmand %vm2050, %vm2082
      %vm2115 = vmand %vm2051, %vm2083
      %vm2116 = vmand %vm2052, %vm2084
      %vm2117 = vmand %vm2053, %vm2085
      %vm2118 = vmand %vm2054, %vm2086
      %vm2119 = vmand %vm2055, %vm2087
      %vm2120 = vmand %vm2056, %vm2088
      %vm2121 = vmand %vm2057, %vm2089
      %vm2122 = vmand %vm2058, %vm2090
      %vm2123 = vmand %vm2059, %vm2091
      %vm2124 = vmand %vm2060, %vm2092
      %vm2125 = vmand %vm2061, %vm2093
      %vm2126 = vmand %vm2062, %vm2094
      %vm2127 = vmand %vm2063, %vm2095
      %vm2128 = vmand %vm2064, %vm2096
      %vm2129 = vmand %vm2065, %vm2097
      %vm2130 = vmand %vm2066, %vm2098
      %vm2131 = vmand %vm2067, %vm2099
      %vm2132 = vmand %vm2068, %vm2100
      %vm2133 = vmand %vm2069, %vm2101
      %v2134 = vsel %vm2102, %v1939, 0.0
      %v2135 = vsel %vm2103, %v1940, 0.0
      %v2136 = vsel %vm2104, %v1941, 0.0
      %v2137 = vsel %vm2105, %v1942, 0.0
      %v2138 = vsel %vm2106, %v1943, 0.0
      %v2139 = vsel %vm2107, %v1944, 0.0
      %v2140 = vsel %vm2108, %v1945, 0.0
      %v2141 = vsel %vm2109, %v1946, 0.0
      %v2142 = vsel %vm2110, %v1947, 0.0
      %v2143 = vsel %vm2111, %v1948, 0.0
      %v2144 = vsel %vm2112, %v1949, 0.0
      %v2145 = vsel %vm2113, %v1950, 0.0
      %v2146 = vsel %vm2114, %v1951, 0.0
      %v2147 = vsel %vm2115, %v1952, 0.0
      %v2148 = vsel %vm2116, %v1953, 0.0
      %v2149 = vsel %vm2117, %v1954, 0.0
      %v2150 = vsel %vm2118, %v1955, 0.0
      %v2151 = vsel %vm2119, %v1956, 0.0
      %v2152 = vsel %vm2120, %v1957, 0.0
      %v2153 = vsel %vm2121, %v1958, 0.0
      %v2154 = vsel %vm2122, %v1959, 0.0
      %v2155 = vsel %vm2123, %v1960, 0.0
      %v2156 = vsel %vm2124, %v1961, 0.0
      %v2157 = vsel %vm2125, %v1962, 0.0
      %v2158 = vsel %vm2126, %v1963, 0.0
      %v2159 = vsel %vm2127, %v1964, 0.0
      %v2160 = vsel %vm2128, %v1965, 0.0
      %v2161 = vsel %vm2129, %v1966, 0.0
      %v2162 = vsel %vm2130, %v1967, 0.0
      %v2163 = vsel %vm2131, %v1968, 0.0
      %v2164 = vsel %vm2132, %v1969, 0.0
      %v2165 = vsel %vm2133, %v1970, 0.0
      %v2166 = vpack.c.bf16 %v2134, %v2134
      %v2167 = vpack.c.bf16 %v2135, %v2135
      %v2168 = vpack.c.bf16 %v2136, %v2136
      %v2169 = vpack.c.bf16 %v2137, %v2137
      %v2170 = vpack.c.bf16 %v2138, %v2138
      %v2171 = vpack.c.bf16 %v2139, %v2139
      %v2172 = vpack.c.bf16 %v2140, %v2140
      %v2173 = vpack.c.bf16 %v2141, %v2141
      %v2174 = vpack.c.bf16 %v2142, %v2142
      %v2175 = vpack.c.bf16 %v2143, %v2143
      %v2176 = vpack.c.bf16 %v2144, %v2144
      %v2177 = vpack.c.bf16 %v2145, %v2145
      %v2178 = vpack.c.bf16 %v2146, %v2146
      %v2179 = vpack.c.bf16 %v2147, %v2147
      %v2180 = vpack.c.bf16 %v2148, %v2148
      %v2181 = vpack.c.bf16 %v2149, %v2149
      %v2182 = vpack.c.bf16 %v2150, %v2150
      %v2183 = vpack.c.bf16 %v2151, %v2151
      %v2184 = vpack.c.bf16 %v2152, %v2152
      %v2185 = vpack.c.bf16 %v2153, %v2153
      %v2186 = vpack.c.bf16 %v2154, %v2154
      %v2187 = vpack.c.bf16 %v2155, %v2155
      %v2188 = vpack.c.bf16 %v2156, %v2156
      %v2189 = vpack.c.bf16 %v2157, %v2157
      %v2190 = vpack.c.bf16 %v2158, %v2158
      %v2191 = vpack.c.bf16 %v2159, %v2159
      %v2192 = vpack.c.bf16 %v2160, %v2160
      %v2193 = vpack.c.bf16 %v2161, %v2161
      %v2194 = vpack.c.bf16 %v2162, %v2162
      %v2195 = vpack.c.bf16 %v2163, %v2163
      %v2196 = vpack.c.bf16 %v2164, %v2164
      %v2197 = vpack.c.bf16 %v2165, %v2165
      %2198 = vst [vmem:[%s390] sm:$0xf] %v2166
      %2199 = vst [vmem:[%s390 + $0x4] sm:$0xf] %v2167
      %2200 = vst [vmem:[%s390 + $0x8] sm:$0xf] %v2168
      %2201 = vst [vmem:[%s390 + $0xc] sm:$0xf] %v2169
      %2202 = vst [vmem:[%s390 + $0x10] sm:$0xf] %v2170
      %2203 = vst [vmem:[%s390 + $0x14] sm:$0xf] %v2171
      %2204 = vst [vmem:[%s390 + $0x18] sm:$0xf] %v2172
      %2205 = vst [vmem:[%s390 + $0x1c] sm:$0xf] %v2173
      %2206 = vst [vmem:[%s390 + $0x20] sm:$0xf] %v2174
      %2207 = vst [vmem:[%s390 + $0x24] sm:$0xf] %v2175
      %2208 = vst [vmem:[%s390 + $0x28] sm:$0xf] %v2176
      %2209 = vst [vmem:[%s390 + $0x2c] sm:$0xf] %v2177
      %2210 = vst [vmem:[%s390 + $0x30] sm:$0xf] %v2178
      %2211 = vst [vmem:[%s390 + $0x34] sm:$0xf] %v2179
      %2212 = vst [vmem:[%s390 + $0x38] sm:$0xf] %v2180
      %2213 = vst [vmem:[%s390 + $0x3c] sm:$0xf] %v2181
      %2214 = vst [vmem:[%s390 + $0x40] sm:$0xf] %v2182
      %2215 = vst [vmem:[%s390 + $0x44] sm:$0xf] %v2183
      %2216 = vst [vmem:[%s390 + $0x48] sm:$0xf] %v2184
      %2217 = vst [vmem:[%s390 + $0x4c] sm:$0xf] %v2185
      %2218 = vst [vmem:[%s390 + $0x50] sm:$0xf] %v2186
      %2219 = vst [vmem:[%s390 + $0x54] sm:$0xf] %v2187
      %2220 = vst [vmem:[%s390 + $0x58] sm:$0xf] %v2188
      %2221 = vst [vmem:[%s390 + $0x5c] sm:$0xf] %v2189
      %2222 = vst [vmem:[%s390 + $0x60] sm:$0xf] %v2190
      %2223 = vst [vmem:[%s390 + $0x64] sm:$0xf] %v2191
      %2224 = vst [vmem:[%s390 + $0x68] sm:$0xf] %v2192
      %2225 = vst [vmem:[%s390 + $0x6c] sm:$0xf] %v2193
      %2226 = vst [vmem:[%s390 + $0x70] sm:$0xf] %v2194
      %2227 = vst [vmem:[%s390 + $0x74] sm:$0xf] %v2195
      %2228 = vst [vmem:[%s390 + $0x78] sm:$0xf] %v2196
      %2229 = vst [vmem:[%s390 + $0x7c] sm:$0xf] %v2197
      %s2230 = smul.u32 32, %s21
      %p2231 = scmp.lt.s32.totalorder %s20, 1
      %s2232 = scalar_select %p2231, %s20, 1
      %p2233 = scmp.lt.s32.totalorder %s2230, 31
      %s2234 = scalar_select %p2233, %s2230, 31
      %s2235 = smul.addr %s2232, 32
      %s2236 = sadd.s32 %s2234, %s2235
      %s2237 = smul.addr %s2236, 4
      %s2238 = scalar_lea.vmem %s5, %s2237
      // Predicated region
      $region41: #{res_block2_forward.3} parent=39 // pred_check
        %p2239 = pneg %p190
      $region42: #{res_block2_forward.3} parent=39 // pred_check_branch
        %2241 = sbr.rel (%p2239) target = $region44
      $region43: #{res_block2_forward.3} parent=39 // pred_region
        %s2242 = smul.u32 32, %s21
      $region44: #{res_block2_forward.3} parent=39 // pred_fallthru
        _
    $region40: #{res_block2_forward.3} parent=5 // pred_fallthru
      _
    %p2243 = scmp.le.s32.totalorder 2, %s11
    // Predicated region
    $region45: #{res_block2_forward.3} parent=5 // pred_check
      %p2244 = pneg %p2243
    $region46: #{res_block2_forward.3} parent=5 // pred_check_branch
      %2246 = sbr.rel (%p2244) target = $region48
    $region47: #{res_block2_forward.3} parent=5 // pred_region
      %s2247 = ssub.s32 %s11, 2
      // Predicated region
      $region49: #{res_block2_forward.3} parent=47 // pred_check
        %p2248 = pneg %p196
      $region50: #{res_block2_forward.3} parent=47 // pred_check_branch
        %2250 = sbr.rel (%p2248) target = $region52
      $region51: #{res_block2_forward.3} parent=47 // pred_region
        %s2251 = smul.u32 32, %s23
        %p2252 = scmp.lt.s32.totalorder %s22, 1
        %s2253 = scalar_select %p2252, %s22, 1
        %p2254 = scmp.lt.s32.totalorder %s2251, 31
        %s2255 = scalar_select %p2254, %s2251, 31
        %s2256 = smul.addr %s2253, 32
        %s2257 = sadd.s32 %s2255, %s2256
        %s2258 = smul.addr %s2257, 4
        %s2259 = scalar_lea.vmem %s5, %s2258
      $region52: #{res_block2_forward.3} parent=47 // pred_fallthru
        _
    $region48: #{res_block2_forward.3} parent=5 // pred_fallthru
      _
  $region6: #{res_block2_forward.3} parent=0 // loop_footer
    %s15 = sadd.s32 1, %s11
  $region7: #{res_block2_forward.3} parent=0 // loop_footer_branch
    %10 = sbr.rel target = $region3
  $region8: #{res_block2_forward.3} parent=0 // loop_exit
    _

</llo_original>
